<compile_context>
chip_gen: v7x
topology: tpu7x:2x2x1
jax: 0.10.0
libtpu: 0.0.40
codegen_flags: <defaults>
</compile_context>

<pallas_src>
import functools
import math

import jax
import jax.numpy as jnp
from jax.experimental import pallas as pl
from jax.experimental.pallas import tpu as pltpu


# ----------------------------------------------------------------------------
# Helpers
# ----------------------------------------------------------------------------

def _round_up(n, m):
    return ((n + m - 1) // m) * m


def _pad_seq(n):
    # Lane-dense (S, S) attention score tiles want S % 128 == 0 at real ViT
    # sizes; for small configs a sublane multiple (8) is sufficient.
    return _round_up(n, 128) if n >= 128 else _round_up(n, 8)


def _seq_tile(s_pad):
    # Sequence tile for the MLP kernel (bounds the (tS, hidden) intermediate
    # and gives the pipeline more steps at real ViT sizes).
    return 128 if s_pad % 128 == 0 else s_pad


_VMEM_LIMIT = 48 * 1024 * 1024      # above the 16/32 MiB scoped defaults,
                                    # below v7x's 64 MiB physical VMEM.


def _cparams(*semantics):
    return pltpu.CompilerParams(dimension_semantics=semantics,
                                vmem_limit_bytes=_VMEM_LIMIT)


def _layernorm_f32(x, g, b, eps=1e-5):
    mu = jnp.mean(x, axis=-1, keepdims=True)
    var = jnp.mean((x - mu) ** 2, axis=-1, keepdims=True)
    return (x - mu) * jax.lax.rsqrt(var + eps) * g + b


# ----------------------------------------------------------------------------
# Kernel bodies
# ----------------------------------------------------------------------------

def _patch_embed_kernel(p_ref, w_ref, b_ref, cls_ref, pos_ref, o_ref, *,
                        n_patches):
    # p: (1, Np, K) bf16 | w: (K, D) bf16 | b: (1, D) f32 | cls: (1, 1, D) f32
    # pos: (1, Np+1, D) f32 | o: (1, S_pad, D) bf16
    s_pad, d = o_ref.shape[1], o_ref.shape[2]
    y = jnp.dot(p_ref[0], w_ref[...],
                preferred_element_type=jnp.float32) + b_ref[...]
    # CLS row (token 0), patch tokens, then zero padding rows.
    o_ref[0, 0:1, :] = (cls_ref[0] + pos_ref[0, 0:1, :]).astype(o_ref.dtype)
    o_ref[0, 1:n_patches + 1, :] = (y + pos_ref[0, 1:, :]).astype(o_ref.dtype)
    if s_pad > n_patches + 1:
        o_ref[0, n_patches + 1:, :] = jnp.zeros(
            (s_pad - n_patches - 1, d), o_ref.dtype)


def _attn_block_kernel(x_ref, g_ref, b_ref, wq_ref, wk_ref, wv_ref,
                       bq_ref, bk_ref, bv_ref, pw_ref, pb_ref, o_ref, *,
                       num_heads, scale, n_real):
    # Fused LN1 + QKV + multi-head attention + out-proj + residual.
    # x: (1, S, D) bf16 | wq/wk/wv: (H, D, Dh) bf16 | bq/bk/bv: (H, 1, Dh) f32
    # pw: (H, Dh, D) bf16 | pb: (1, D) f32 | o: (1, S, D) bf16
    x = x_ref[0].astype(jnp.float32)                           # (S, D)
    S = x.shape[0]
    xn = _layernorm_f32(x, g_ref[...], b_ref[...]).astype(jnp.bfloat16)

    if n_real < S:
        key_ok = jax.lax.broadcasted_iota(jnp.int32, (S, S), 1) < n_real
    else:
        key_ok = None

    acc = jnp.zeros(x.shape, jnp.float32)
    for h in range(num_heads):        # static unroll; head select = leading-axis
        q = jnp.dot(xn, wq_ref[h], preferred_element_type=jnp.float32) + bq_ref[h]
        k = jnp.dot(xn, wk_ref[h], preferred_element_type=jnp.float32) + bk_ref[h]
        v = jnp.dot(xn, wv_ref[h], preferred_element_type=jnp.float32) + bv_ref[h]
        s = jax.lax.dot_general(
            q.astype(jnp.bfloat16), k.astype(jnp.bfloat16),
            (((1,), (1,)), ((), ())),
            preferred_element_type=jnp.float32) * scale        # (S, S)
        if key_ok is not None:
            s = jnp.where(key_ok, s, -1e30)                    # mask padded keys
        s = s - jnp.max(s, axis=-1, keepdims=True)
        p = jnp.exp(s)
        p = p * pl.reciprocal(jnp.sum(p, axis=-1, keepdims=True), approx=True)
        o_h = jnp.dot(p.astype(jnp.bfloat16), v.astype(jnp.bfloat16),
                      preferred_element_type=jnp.float32)      # (S, Dh)
        # concat(heads) @ proj_w  ==  sum_h  o_h @ proj_w[h*Dh:(h+1)*Dh, :]
        acc = acc + jnp.dot(o_h.astype(jnp.bfloat16), pw_ref[h],
                            preferred_element_type=jnp.float32)
    o_ref[0] = (x + acc + pb_ref[...]).astype(o_ref.dtype)


def _ln_mlp_kernel(x_ref, g_ref, b_ref, w1_ref, b1_ref, w2_ref, b2_ref, o_ref):
    # Fused LN2 + fc1 + GELU + fc2 + residual on one (tS, D) sequence tile.
    x = x_ref[0].astype(jnp.float32)                           # (tS, D)
    xn = _layernorm_f32(x, g_ref[...], b_ref[...]).astype(jnp.bfloat16)
    a = jnp.dot(xn, w1_ref[...], preferred_element_type=jnp.float32) + b1_ref[...]
    # TODO(synk): PyTorch nn.GELU default is exact erf; tanh approximation used.
    a = jax.nn.gelu(a, approximate=True).astype(jnp.bfloat16)
    y = x + jnp.dot(a, w2_ref[...],
                    preferred_element_type=jnp.float32) + b2_ref[...]
    o_ref[0] = y.astype(o_ref.dtype)


def _final_ln_kernel(x_ref, g_ref, b_ref, o_ref):
    # Final LayerNorm; also strips sequence padding (output has n_real rows).
    n = o_ref.shape[1]
    x = x_ref[0, 0:n, :].astype(jnp.float32)
    o_ref[0] = _layernorm_f32(x, g_ref[...], b_ref[...])


# ----------------------------------------------------------------------------
# pallas_call wrappers
# ----------------------------------------------------------------------------

def patch_embed(patches, w, b, cls, pos, s_pad):
    B, Np, K = patches.shape
    D = w.shape[1]
    kern = functools.partial(_patch_embed_kernel, n_patches=Np)
    return pl.pallas_call(
        kern,
        out_shape=jax.ShapeDtypeStruct((B, s_pad, D), jnp.bfloat16),
        grid=(B,),
        in_specs=[pl.BlockSpec((1, Np, K), lambda i: (i, 0, 0)),
                  pl.BlockSpec((K, D), lambda i: (0, 0)),
                  pl.BlockSpec((1, D), lambda i: (0, 0)),
                  pl.BlockSpec((1, 1, D), lambda i: (0, 0, 0)),
                  pl.BlockSpec((1, Np + 1, D), lambda i: (0, 0, 0))],
        out_specs=pl.BlockSpec((1, s_pad, D), lambda i: (i, 0, 0)),
        compiler_params=_cparams("parallel"),
    )(patches, w, b, cls, pos)


def attn_block(x, g, b, wq, wk, wv, bq, bk, bv, pw, pb, *, num_heads, n_real):
    B, S, D = x.shape
    Dh = D // num_heads
    kern = functools.partial(_attn_block_kernel, num_heads=num_heads,
                             scale=1.0 / math.sqrt(Dh), n_real=n_real)
    cost = pl.CostEstimate(
        flops=int(B * (6 * S * D * D + 4 * num_heads * S * S * Dh
                       + 2 * S * D * D)),
        transcendentals=int(B * (num_heads * S * S + S)),
        bytes_accessed=int(2 * B * S * D * 2 + 4 * D * D * 2))
    return pl.pallas_call(
        kern,
        out_shape=jax.ShapeDtypeStruct((B, S, D), jnp.bfloat16),
        grid=(B,),
        in_specs=[pl.BlockSpec((1, S, D), lambda i: (i, 0, 0)),
                  pl.BlockSpec((1, D), lambda i: (0, 0)),
                  pl.BlockSpec((1, D), lambda i: (0, 0)),
                  pl.BlockSpec((num_heads, D, Dh), lambda i: (0, 0, 0)),
                  pl.BlockSpec((num_heads, D, Dh), lambda i: (0, 0, 0)),
                  pl.BlockSpec((num_heads, D, Dh), lambda i: (0, 0, 0)),
                  pl.BlockSpec((num_heads, 1, Dh), lambda i: (0, 0, 0)),
                  pl.BlockSpec((num_heads, 1, Dh), lambda i: (0, 0, 0)),
                  pl.BlockSpec((num_heads, 1, Dh), lambda i: (0, 0, 0)),
                  pl.BlockSpec((num_heads, Dh, D), lambda i: (0, 0, 0)),
                  pl.BlockSpec((1, D), lambda i: (0, 0))],
        out_specs=pl.BlockSpec((1, S, D), lambda i: (i, 0, 0)),
        compiler_params=_cparams("parallel"),
        cost_estimate=cost,
    )(x, g, b, wq, wk, wv, bq, bk, bv, pw, pb)


def ln_mlp_residual(x, g, b, w1, b1, w2, b2):
    B, S, D = x.shape
    Hd = w1.shape[1]
    tS = _seq_tile(S)
    nS = S // tS
    cost = pl.CostEstimate(
        flops=int(4 * B * S * D * Hd),
        transcendentals=int(B * S * Hd),
        bytes_accessed=int(2 * B * S * D * 2 + 2 * D * Hd * 2))
    return pl.pallas_call(
        _ln_mlp_kernel,
        out_shape=jax.ShapeDtypeStruct((B, S, D), jnp.bfloat16),
        grid=(B, nS),
        in_specs=[pl.BlockSpec((1, tS, D), lambda i, j: (i, j, 0)),
                  pl.BlockSpec((1, D), lambda i, j: (0, 0)),
                  pl.BlockSpec((1, D), lambda i, j: (0, 0)),
                  pl.BlockSpec((D, Hd), lambda i, j: (0, 0)),
                  pl.BlockSpec((1, Hd), lambda i, j: (0, 0)),
                  pl.BlockSpec((Hd, D), lambda i, j: (0, 0)),
                  pl.BlockSpec((1, D), lambda i, j: (0, 0))],
        out_specs=pl.BlockSpec((1, tS, D), lambda i, j: (i, j, 0)),
        compiler_params=_cparams("parallel", "parallel"),
        cost_estimate=cost,
    )(x, g, b, w1, b1, w2, b2)


def final_layernorm(x, g, b, n_real):
    B, S, D = x.shape
    return pl.pallas_call(
        _final_ln_kernel,
        out_shape=jax.ShapeDtypeStruct((B, n_real, D), jnp.float32),
        grid=(B,),
        in_specs=[pl.BlockSpec((1, S, D), lambda i: (i, 0, 0)),
                  pl.BlockSpec((1, D), lambda i: (0, 0)),
                  pl.BlockSpec((1, D), lambda i: (0, 0))],
        out_specs=pl.BlockSpec((1, n_real, D), lambda i: (i, 0, 0)),
        compiler_params=_cparams("parallel"),
    )(x, g, b)


# ----------------------------------------------------------------------------
# Parameters: synthetic init (PyTorch-style layout) + one-time kernel packing
# ----------------------------------------------------------------------------

def _trunc_normal(key, shape, std=0.02, dtype=jnp.float32):
    v = std * jax.random.truncated_normal(key, -2.0, 2.0, shape, jnp.float32)
    return v.astype(dtype)


def init_params(key, *, image_size, patch_size, embed_dim, depth, num_heads,
                mlp_ratio=4.0):
    num_patches = (image_size // patch_size) ** 2
    hidden = int(embed_dim * mlp_ratio)
    keys = jax.random.split(key, 4 + depth)
    params = {
        "patch_w": _trunc_normal(keys[0], (3 * patch_size * patch_size, embed_dim),
                                 dtype=jnp.bfloat16),
        "patch_b": jnp.zeros((embed_dim,), jnp.float32),
        "cls": _trunc_normal(keys[1], (1, 1, embed_dim)),
        "pos": _trunc_normal(keys[2], (1, num_patches + 1, embed_dim)),
        "ln_g": jnp.ones((embed_dim,), jnp.float32),
        "ln_b": jnp.zeros((embed_dim,), jnp.float32),
        "blocks": [],
    }
    for i in range(depth):
        bk = jax.random.split(keys[4 + i], 4)
        params["blocks"].append({
            "ln1_g": jnp.ones((embed_dim,), jnp.float32),
            "ln1_b": jnp.zeros((embed_dim,), jnp.float32),
            "qkv_w": _trunc_normal(bk[0], (embed_dim, 3 * embed_dim),
                                   dtype=jnp.bfloat16),
            "qkv_b": jnp.zeros((3 * embed_dim,), jnp.float32),
            "proj_w": _trunc_normal(bk[1], (embed_dim, embed_dim),
                                    dtype=jnp.bfloat16),
            "proj_b": jnp.zeros((embed_dim,), jnp.float32),
            "ln2_g": jnp.ones((embed_dim,), jnp.float32),
            "ln2_b": jnp.zeros((embed_dim,), jnp.float32),
            "fc1_w": _trunc_normal(bk[2], (embed_dim, hidden), dtype=jnp.bfloat16),
            "fc1_b": jnp.zeros((hidden,), jnp.float32),
            "fc2_w": _trunc_normal(bk[3], (hidden, embed_dim), dtype=jnp.bfloat16),
            "fc2_b": jnp.zeros((embed_dim,), jnp.float32),
        })
    return params


def prepare_params(params, num_heads):
    """One-time (outside jit) repack: head-major QKV / proj weights so the
    attention kernel never slices at mid-lane offsets; 1-D vectors -> rows."""
    D = params["patch_w"].shape[1]
    Dh = D // num_heads
    row = lambda v: v.reshape(1, -1)

    def head_major(w_cols):                     # (D, D) -> (H, D, Dh)
        return jnp.transpose(w_cols.reshape(D, num_heads, Dh), (1, 0, 2))

    out = {
        "patch_w": params["patch_w"],
        "patch_b": row(params["patch_b"]),
        "cls": params["cls"],
        "pos": params["pos"],
        "ln_g": row(params["ln_g"]),
        "ln_b": row(params["ln_b"]),
        "blocks": [],
    }
    for blk in params["blocks"]:
        qkv_w, qkv_b = blk["qkv_w"], blk["qkv_b"]
        out["blocks"].append({
            "ln1_g": row(blk["ln1_g"]), "ln1_b": row(blk["ln1_b"]),
            "wq": head_major(qkv_w[:, :D]),
            "wk": head_major(qkv_w[:, D:2 * D]),
            "wv": head_major(qkv_w[:, 2 * D:]),
            "bq": qkv_b[:D].reshape(num_heads, 1, Dh),
            "bk": qkv_b[D:2 * D].reshape(num_heads, 1, Dh),
            "bv": qkv_b[2 * D:].reshape(num_heads, 1, Dh),
            "pw": blk["proj_w"].reshape(num_heads, Dh, D),
            "pb": row(blk["proj_b"]),
            "ln2_g": row(blk["ln2_g"]), "ln2_b": row(blk["ln2_b"]),
            "fc1_w": blk["fc1_w"], "fc1_b": row(blk["fc1_b"]),
            "fc2_w": blk["fc2_w"], "fc2_b": row(blk["fc2_b"]),
        })
    return out


# ----------------------------------------------------------------------------
# Forward pass
# ----------------------------------------------------------------------------

def encoder_block(p, x, num_heads, n_real):
    x = attn_block(x, p["ln1_g"], p["ln1_b"], p["wq"], p["wk"], p["wv"],
                   p["bq"], p["bk"], p["bv"], p["pw"], p["pb"],
                   num_heads=num_heads, n_real=n_real)
    x = ln_mlp_residual(x, p["ln2_g"], p["ln2_b"], p["fc1_w"], p["fc1_b"],
                        p["fc2_w"], p["fc2_b"])
    # dropout / drop_path rates are 0.0 -> identity
    return x


def image_encoder_forward(params, x, *, patch_size, num_heads):
    B, C, H, W = x.shape
    P = patch_size
    Hn, Wn = H // P, W // P
    Np = Hn * Wn
    n_real = Np + 1
    s_pad = _pad_seq(n_real)

    # Patch extraction: the stride==kernel Conv2d is a matmul over flattened
    # patches.  The transpose materializes a copy anyway, so cast to bf16 here
    # (halves the patch-embed input DMA).
    patches = (x.reshape(B, C, Hn, P, Wn, P)
                 .transpose(0, 2, 4, 1, 3, 5)        # (B, Hn, Wn, C, P, P)
                 .reshape(B, Np, C * P * P)
                 .astype(jnp.bfloat16))

    tok = patch_embed(patches, params["patch_w"], params["patch_b"],
                      params["cls"], params["pos"], s_pad)     # (B, S_pad, D) bf16

    for blk in params["blocks"]:
        tok = encoder_block(blk, tok, num_heads, n_real)

    return final_layernorm(tok, params["ln_g"], params["ln_b"], n_real)


# ----------------------------------------------------------------------------
# Main
# ----------------------------------------------------------------------------

if __name__ == "__main__":
    # Small but lane-friendly configuration (D fills a 128-lane vreg).
    IMAGE_SIZE = 32
    PATCH_SIZE = 8
    EMBED_DIM = 128
    DEPTH = 2
    NUM_HEADS = 4
    BATCH = 2

    key = jax.random.PRNGKey(0)
    pkey, xkey = jax.random.split(key)

    raw_params = init_params(
        pkey, image_size=IMAGE_SIZE, patch_size=PATCH_SIZE,
        embed_dim=EMBED_DIM, depth=DEPTH, num_heads=NUM_HEADS, mlp_ratio=4.0)
    params = prepare_params(raw_params, NUM_HEADS)

    x = jax.random.normal(xkey, (BATCH, 3, IMAGE_SIZE, IMAGE_SIZE), jnp.float32)

    fwd = jax.jit(functools.partial(
        image_encoder_forward, patch_size=PATCH_SIZE, num_heads=NUM_HEADS))
    out = fwd(params, x)
    jax.block_until_ready(out)

    num_patches = (IMAGE_SIZE // PATCH_SIZE) ** 2
    assert out.shape == (BATCH, num_patches + 1, EMBED_DIM), out.shape
    assert bool(jnp.all(jnp.isfinite(out)))
    print("KERNEL_OK")
</pallas_src>

<mosaic_0001>
module attributes {stable_mosaic.version = 11 : i64} {
  func.func @_patch_embed_kernel(%arg0: i32, %arg1: memref<1x16x192xbf16, #tpu.memory_space<vmem>>, %arg2: memref<192x128xbf16, #tpu.memory_space<vmem>>, %arg3: memref<1x128xf32, #tpu.memory_space<vmem>>, %arg4: memref<1x1x128xf32, #tpu.memory_space<vmem>>, %arg5: memref<1x17x128xf32, #tpu.memory_space<vmem>>, %arg6: memref<1x24x128xbf16, #tpu.memory_space<vmem>>) attributes {dimension_semantics = [#tpu.dimension_semantics<parallel>], iteration_bounds = array<i64: 2>, scalar_prefetch = 0 : i64, scratch_operands = 0 : i64, tpu.core_type = #tpu.core_type<tc>, window_params = [{transform_indices = @transform_0, window_bounds = array<i64: 1, 16, 192>}, {pipeline_mode = #tpu.pipeline_mode<synchronous>, transform_indices = @transform_1, window_bounds = array<i64: 192, 128>}, {pipeline_mode = #tpu.pipeline_mode<synchronous>, transform_indices = @transform_2, window_bounds = array<i64: 1, 128>}, {pipeline_mode = #tpu.pipeline_mode<synchronous>, transform_indices = @transform_3, window_bounds = array<i64: 1, 1, 128>}, {pipeline_mode = #tpu.pipeline_mode<synchronous>, transform_indices = @transform_4, window_bounds = array<i64: 1, 17, 128>}, {transform_indices = @transform_5, window_bounds = array<i64: 1, 24, 128>}]} {
    %c0 = arith.constant 0 : index
    %c0_0 = arith.constant 0 : index
    %c0_1 = arith.constant 0 : index
    %0 = vector.load %arg1[%c0, %c0_0, %c0_1] : memref<1x16x192xbf16, #tpu.memory_space<vmem>>, vector<1x16x192xbf16>
    %1 = vector.shape_cast %0 : vector<1x16x192xbf16> to vector<16x192xbf16>
    %c0_2 = arith.constant 0 : index
    %c0_3 = arith.constant 0 : index
    %2 = vector.load %arg2[%c0_2, %c0_3] : memref<192x128xbf16, #tpu.memory_space<vmem>>, vector<192x128xbf16>
    %cst = arith.constant dense<0.000000e+00> : vector<16x128xf32>
    %3 = tpu.matmul %1, %2, %cst {dimension_numbers = #tpu.dot_dimension_numbers<[1], [0], [0], [1], [0, 0, 1, 1], [], []>} : vector<16x192xbf16>, vector<192x128xbf16>, vector<16x128xf32> -> vector<16x128xf32>
    %c0_4 = arith.constant 0 : index
    %c0_5 = arith.constant 0 : index
    %4 = vector.load %arg3[%c0_4, %c0_5] : memref<1x128xf32, #tpu.memory_space<vmem>>, vector<1x128xf32>
    %5 = vector.broadcast %4 : vector<1x128xf32> to vector<16x128xf32>
    %6 = arith.addf %3, %5 : vector<16x128xf32>
    %c0_6 = arith.constant 0 : index
    %c0_7 = arith.constant 0 : index
    %c0_8 = arith.constant 0 : index
    %7 = vector.load %arg4[%c0_6, %c0_7, %c0_8] : memref<1x1x128xf32, #tpu.memory_space<vmem>>, vector<1x1x128xf32>
    %8 = vector.shape_cast %7 : vector<1x1x128xf32> to vector<1x128xf32>
    %c0_9 = arith.constant 0 : index
    %c0_10 = arith.constant 0 : index
    %c0_11 = arith.constant 0 : index
    %9 = vector.load %arg5[%c0_9, %c0_10, %c0_11] : memref<1x17x128xf32, #tpu.memory_space<vmem>>, vector<1x1x128xf32>
    %10 = vector.shape_cast %9 : vector<1x1x128xf32> to vector<1x128xf32>
    %11 = arith.addf %8, %10 : vector<1x128xf32>
    %12 = arith.truncf %11 : vector<1x128xf32> to vector<1x128xbf16>
    %c0_12 = arith.constant 0 : index
    %c0_13 = arith.constant 0 : index
    %c0_14 = arith.constant 0 : index
    %13 = vector.load %arg6[%c0_12, %c0_13, %c0_14] : memref<1x24x128xbf16, #tpu.memory_space<vmem>>, vector<1x1x128xbf16>
    %14 = vector.shape_cast %13 : vector<1x1x128xbf16> to vector<1x128xbf16>
    %15 = vector.shape_cast %12 : vector<1x128xbf16> to vector<1x1x128xbf16>
    tpu.vector_store %arg6[%c0_12, %c0_13, %c0_14], %15 {strides = array<i32>} : memref<1x24x128xbf16, #tpu.memory_space<vmem>>, vector<1x1x128xbf16>,
    %c0_15 = arith.constant 0 : index
    %c1 = arith.constant 1 : index
    %c0_16 = arith.constant 0 : index
    %16 = vector.load %arg5[%c0_15, %c1, %c0_16] : memref<1x17x128xf32, #tpu.memory_space<vmem>>, vector<1x16x128xf32>
    %17 = vector.shape_cast %16 : vector<1x16x128xf32> to vector<16x128xf32>
    %18 = arith.addf %6, %17 : vector<16x128xf32>
    %19 = arith.truncf %18 : vector<16x128xf32> to vector<16x128xbf16>
    %c0_17 = arith.constant 0 : index
    %c1_18 = arith.constant 1 : index
    %c0_19 = arith.constant 0 : index
    %20 = vector.load %arg6[%c0_17, %c1_18, %c0_19] : memref<1x24x128xbf16, #tpu.memory_space<vmem>>, vector<1x16x128xbf16>
    %21 = vector.shape_cast %20 : vector<1x16x128xbf16> to vector<16x128xbf16>
    %22 = vector.shape_cast %19 : vector<16x128xbf16> to vector<1x16x128xbf16>
    tpu.vector_store %arg6[%c0_17, %c1_18, %c0_19], %22 {strides = array<i32>} : memref<1x24x128xbf16, #tpu.memory_space<vmem>>, vector<1x16x128xbf16>,
    %cst_20 = arith.constant 0.000000e+00 : bf16
    %23 = vector.broadcast %cst_20 : bf16 to vector<7x128xbf16>
    %c0_21 = arith.constant 0 : index
    %c17 = arith.constant 17 : index
    %c0_22 = arith.constant 0 : index
    %24 = vector.load %arg6[%c0_21, %c17, %c0_22] : memref<1x24x128xbf16, #tpu.memory_space<vmem>>, vector<1x7x128xbf16>
    %25 = vector.shape_cast %24 : vector<1x7x128xbf16> to vector<7x128xbf16>
    %26 = vector.shape_cast %23 : vector<7x128xbf16> to vector<1x7x128xbf16>
    tpu.vector_store %arg6[%c0_21, %c17, %c0_22], %26 {strides = array<i32>} : memref<1x24x128xbf16, #tpu.memory_space<vmem>>, vector<1x7x128xbf16>,
    return
  }
  func.func @transform_0(%arg0: i32) -> (i32, i32, i32) {
    %c0_i32 = arith.constant 0 : i32
    %c0_i32_0 = arith.constant 0 : i32
    %c0_i32_1 = arith.constant 0 : i32
    return %arg0, %c0_i32, %c0_i32_0 : i32, i32, i32
  }
  func.func @transform_1(%arg0: i32) -> (i32, i32) {
    %c0_i32 = arith.constant 0 : i32
    %c0_i32_0 = arith.constant 0 : i32
    %c0_i32_1 = arith.constant 0 : i32
    return %c0_i32, %c0_i32_0 : i32, i32
  }
  func.func @transform_2(%arg0: i32) -> (i32, i32) {
    %c0_i32 = arith.constant 0 : i32
    %c0_i32_0 = arith.constant 0 : i32
    %c0_i32_1 = arith.constant 0 : i32
    return %c0_i32, %c0_i32_0 : i32, i32
  }
  func.func @transform_3(%arg0: i32) -> (i32, i32, i32) {
    %c0_i32 = arith.constant 0 : i32
    %c0_i32_0 = arith.constant 0 : i32
    %c0_i32_1 = arith.constant 0 : i32
    %c0_i32_2 = arith.constant 0 : i32
    return %c0_i32, %c0_i32_0, %c0_i32_1 : i32, i32, i32
  }
  func.func @transform_4(%arg0: i32) -> (i32, i32, i32) {
    %c0_i32 = arith.constant 0 : i32
    %c0_i32_0 = arith.constant 0 : i32
    %c0_i32_1 = arith.constant 0 : i32
    %c0_i32_2 = arith.constant 0 : i32
    return %c0_i32, %c0_i32_0, %c0_i32_1 : i32, i32, i32
  }
  func.func @transform_5(%arg0: i32) -> (i32, i32, i32) {
    %c0_i32 = arith.constant 0 : i32
    %c0_i32_0 = arith.constant 0 : i32
    %c0_i32_1 = arith.constant 0 : i32
    return %arg0, %c0_i32, %c0_i32_0 : i32, i32, i32
  }
}

module attributes {stable_mosaic.version = 11 : i64} {
  func.func @_final_ln_kernel(%arg0: i32, %arg1: memref<1x24x128xbf16, #tpu.memory_space<vmem>>, %arg2: memref<1x128xf32, #tpu.memory_space<vmem>>, %arg3: memref<1x128xf32, #tpu.memory_space<vmem>>, %arg4: memref<1x17x128xf32, #tpu.memory_space<vmem>>) attributes {dimension_semantics = [#tpu.dimension_semantics<parallel>], iteration_bounds = array<i64: 2>, scalar_prefetch = 0 : i64, scratch_operands = 0 : i64, tpu.core_type = #tpu.core_type<tc>, window_params = [{transform_indices = @transform_0, window_bounds = array<i64: 1, 24, 128>}, {pipeline_mode = #tpu.pipeline_mode<synchronous>, transform_indices = @transform_1, window_bounds = array<i64: 1, 128>}, {pipeline_mode = #tpu.pipeline_mode<synchronous>, transform_indices = @transform_2, window_bounds = array<i64: 1, 128>}, {transform_indices = @transform_3, window_bounds = array<i64: 1, 17, 128>}]} {
    %c0 = arith.constant 0 : index
    %c0_0 = arith.constant 0 : index
    %c0_1 = arith.constant 0 : index
    %0 = vector.load %arg1[%c0, %c0_0, %c0_1] : memref<1x24x128xbf16, #tpu.memory_space<vmem>>, vector<1x17x128xbf16>
    %1 = vector.shape_cast %0 : vector<1x17x128xbf16> to vector<17x128xbf16>
    %2 = arith.extf %1 : vector<17x128xbf16> to vector<17x128xf32>
    %c0_2 = arith.constant 0 : index
    %c0_3 = arith.constant 0 : index
    %3 = vector.load %arg2[%c0_2, %c0_3] : memref<1x128xf32, #tpu.memory_space<vmem>>, vector<1x128xf32>
    %c0_4 = arith.constant 0 : index
    %c0_5 = arith.constant 0 : index
    %4 = vector.load %arg3[%c0_4, %c0_5] : memref<1x128xf32, #tpu.memory_space<vmem>>, vector<1x128xf32>
    %cst = arith.constant dense<0.000000e+00> : vector<17xf32>
    %5 = vector.multi_reduction <add>, %2, %cst [1] : vector<17x128xf32> to vector<17xf32>
    %6 = vector.shape_cast %5 : vector<17xf32> to vector<17x1xf32>
    %cst_6 = arith.constant 1.280000e+02 : f32
    %7 = vector.broadcast %cst_6 : f32 to vector<17x1xf32>
    %8 = arith.divf %6, %7 : vector<17x1xf32>
    %9 = vector.broadcast %8 : vector<17x1xf32> to vector<17x128xf32>
    %10 = arith.subf %2, %9 : vector<17x128xf32>
    %11 = arith.mulf %10, %10 : vector<17x128xf32>
    %cst_7 = arith.constant dense<0.000000e+00> : vector<17xf32>
    %12 = vector.multi_reduction <add>, %11, %cst_7 [1] : vector<17x128xf32> to vector<17xf32>
    %13 = vector.shape_cast %12 : vector<17xf32> to vector<17x1xf32>
    %cst_8 = arith.constant 1.280000e+02 : f32
    %14 = vector.broadcast %cst_8 : f32 to vector<17x1xf32>
    %15 = arith.divf %13, %14 : vector<17x1xf32>
    %16 = vector.broadcast %8 : vector<17x1xf32> to vector<17x128xf32>
    %17 = arith.subf %2, %16 : vector<17x128xf32>
    %cst_9 = arith.constant 9.99999974E-6 : f32
    %18 = vector.broadcast %cst_9 : f32 to vector<17x1xf32>
    %19 = arith.addf %15, %18 : vector<17x1xf32>
    %20 = math.rsqrt %19 : vector<17x1xf32>
    %21 = vector.broadcast %20 : vector<17x1xf32> to vector<17x128xf32>
    %22 = arith.mulf %17, %21 : vector<17x128xf32>
    %23 = vector.broadcast %3 : vector<1x128xf32> to vector<17x128xf32>
    %24 = arith.mulf %22, %23 : vector<17x128xf32>
    %25 = vector.broadcast %4 : vector<1x128xf32> to vector<17x128xf32>
    %26 = arith.addf %24, %25 : vector<17x128xf32>
    %c0_10 = arith.constant 0 : index
    %c0_11 = arith.constant 0 : index
    %c0_12 = arith.constant 0 : index
    %27 = vector.load %arg4[%c0_10, %c0_11, %c0_12] : memref<1x17x128xf32, #tpu.memory_space<vmem>>, vector<1x17x128xf32>
    %28 = vector.shape_cast %27 : vector<1x17x128xf32> to vector<17x128xf32>
    %29 = vector.shape_cast %26 : vector<17x128xf32> to vector<1x17x128xf32>
    tpu.vector_store %arg4[%c0_10, %c0_11, %c0_12], %29 {strides = array<i32>} : memref<1x17x128xf32, #tpu.memory_space<vmem>>, vector<1x17x128xf32>,
    return
  }
  func.func @transform_0(%arg0: i32) -> (i32, i32, i32) {
    %c0_i32 = arith.constant 0 : i32
    %c0_i32_0 = arith.constant 0 : i32
    %c0_i32_1 = arith.constant 0 : i32
    return %arg0, %c0_i32, %c0_i32_0 : i32, i32, i32
  }
  func.func @transform_1(%arg0: i32) -> (i32, i32) {
    %c0_i32 = arith.constant 0 : i32
    %c0_i32_0 = arith.constant 0 : i32
    %c0_i32_1 = arith.constant 0 : i32
    return %c0_i32, %c0_i32_0 : i32, i32
  }
  func.func @transform_2(%arg0: i32) -> (i32, i32) {
    %c0_i32 = arith.constant 0 : i32
    %c0_i32_0 = arith.constant 0 : i32
    %c0_i32_1 = arith.constant 0 : i32
    return %c0_i32, %c0_i32_0 : i32, i32
  }
  func.func @transform_3(%arg0: i32) -> (i32, i32, i32) {
    %c0_i32 = arith.constant 0 : i32
    %c0_i32_0 = arith.constant 0 : i32
    %c0_i32_1 = arith.constant 0 : i32
    return %arg0, %c0_i32, %c0_i32_0 : i32, i32, i32
  }
}

module attributes {stable_mosaic.version = 11 : i64} {
  func.func @_ln_mlp_kernel(%arg0: i32, %arg1: i32, %arg2: memref<1x24x128xbf16, #tpu.memory_space<vmem>>, %arg3: memref<1x128xf32, #tpu.memory_space<vmem>>, %arg4: memref<1x128xf32, #tpu.memory_space<vmem>>, %arg5: memref<128x512xbf16, #tpu.memory_space<vmem>>, %arg6: memref<1x512xf32, #tpu.memory_space<vmem>>, %arg7: memref<512x128xbf16, #tpu.memory_space<vmem>>, %arg8: memref<1x128xf32, #tpu.memory_space<vmem>>, %arg9: memref<1x24x128xbf16, #tpu.memory_space<vmem>>) attributes {dimension_semantics = [#tpu.dimension_semantics<parallel>, #tpu.dimension_semantics<parallel>], iteration_bounds = array<i64: 2, 1>, scalar_prefetch = 0 : i64, scratch_operands = 0 : i64, tpu.core_type = #tpu.core_type<tc>, window_params = [{transform_indices = @transform_0, window_bounds = array<i64: 1, 24, 128>}, {pipeline_mode = #tpu.pipeline_mode<synchronous>, transform_indices = @transform_1, window_bounds = array<i64: 1, 128>}, {pipeline_mode = #tpu.pipeline_mode<synchronous>, transform_indices = @transform_2, window_bounds = array<i64: 1, 128>}, {pipeline_mode = #tpu.pipeline_mode<synchronous>, transform_indices = @transform_3, window_bounds = array<i64: 128, 512>}, {pipeline_mode = #tpu.pipeline_mode<synchronous>, transform_indices = @transform_4, window_bounds = array<i64: 1, 512>}, {pipeline_mode = #tpu.pipeline_mode<synchronous>, transform_indices = @transform_5, window_bounds = array<i64: 512, 128>}, {pipeline_mode = #tpu.pipeline_mode<synchronous>, transform_indices = @transform_6, window_bounds = array<i64: 1, 128>}, {transform_indices = @transform_7, window_bounds = array<i64: 1, 24, 128>}]} {
    %c0 = arith.constant 0 : index
    %c0_0 = arith.constant 0 : index
    %c0_1 = arith.constant 0 : index
    %0 = vector.load %arg2[%c0, %c0_0, %c0_1] : memref<1x24x128xbf16, #tpu.memory_space<vmem>>, vector<1x24x128xbf16>
    %1 = vector.shape_cast %0 : vector<1x24x128xbf16> to vector<24x128xbf16>
    %2 = arith.extf %1 : vector<24x128xbf16> to vector<24x128xf32>
    %c0_2 = arith.constant 0 : index
    %c0_3 = arith.constant 0 : index
    %3 = vector.load %arg3[%c0_2, %c0_3] : memref<1x128xf32, #tpu.memory_space<vmem>>, vector<1x128xf32>
    %c0_4 = arith.constant 0 : index
    %c0_5 = arith.constant 0 : index
    %4 = vector.load %arg4[%c0_4, %c0_5] : memref<1x128xf32, #tpu.memory_space<vmem>>, vector<1x128xf32>
    %cst = arith.constant dense<0.000000e+00> : vector<24xf32>
    %5 = vector.multi_reduction <add>, %2, %cst [1] : vector<24x128xf32> to vector<24xf32>
    %6 = vector.shape_cast %5 : vector<24xf32> to vector<24x1xf32>
    %cst_6 = arith.constant 1.280000e+02 : f32
    %7 = vector.broadcast %cst_6 : f32 to vector<24x1xf32>
    %8 = arith.divf %6, %7 : vector<24x1xf32>
    %9 = vector.broadcast %8 : vector<24x1xf32> to vector<24x128xf32>
    %10 = arith.subf %2, %9 : vector<24x128xf32>
    %11 = arith.mulf %10, %10 : vector<24x128xf32>
    %cst_7 = arith.constant dense<0.000000e+00> : vector<24xf32>
    %12 = vector.multi_reduction <add>, %11, %cst_7 [1] : vector<24x128xf32> to vector<24xf32>
    %13 = vector.shape_cast %12 : vector<24xf32> to vector<24x1xf32>
    %cst_8 = arith.constant 1.280000e+02 : f32
    %14 = vector.broadcast %cst_8 : f32 to vector<24x1xf32>
    %15 = arith.divf %13, %14 : vector<24x1xf32>
    %16 = vector.broadcast %8 : vector<24x1xf32> to vector<24x128xf32>
    %17 = arith.subf %2, %16 : vector<24x128xf32>
    %cst_9 = arith.constant 9.99999974E-6 : f32
    %18 = vector.broadcast %cst_9 : f32 to vector<24x1xf32>
    %19 = arith.addf %15, %18 : vector<24x1xf32>
    %20 = math.rsqrt %19 : vector<24x1xf32>
    %21 = vector.broadcast %20 : vector<24x1xf32> to vector<24x128xf32>
    %22 = arith.mulf %17, %21 : vector<24x128xf32>
    %23 = vector.broadcast %3 : vector<1x128xf32> to vector<24x128xf32>
    %24 = arith.mulf %22, %23 : vector<24x128xf32>
    %25 = vector.broadcast %4 : vector<1x128xf32> to vector<24x128xf32>
    %26 = arith.addf %24, %25 : vector<24x128xf32>
    %27 = arith.truncf %26 : vector<24x128xf32> to vector<24x128xbf16>
    %c0_10 = arith.constant 0 : index
    %c0_11 = arith.constant 0 : index
    %28 = vector.load %arg5[%c0_10, %c0_11] : memref<128x512xbf16, #tpu.memory_space<vmem>>, vector<128x512xbf16>
    %cst_12 = arith.constant dense<0.000000e+00> : vector<24x512xf32>
    %29 = tpu.matmul %27, %28, %cst_12 {dimension_numbers = #tpu.dot_dimension_numbers<[1], [0], [0], [1], [0, 0, 1, 1], [], []>} : vector<24x128xbf16>, vector<128x512xbf16>, vector<24x512xf32> -> vector<24x512xf32>
    %c0_13 = arith.constant 0 : index
    %c0_14 = arith.constant 0 : index
    %30 = vector.load %arg6[%c0_13, %c0_14] : memref<1x512xf32, #tpu.memory_space<vmem>>, vector<1x512xf32>
    %31 = vector.broadcast %30 : vector<1x512xf32> to vector<24x512xf32>
    %32 = arith.addf %29, %31 : vector<24x512xf32>
    %33 = arith.mulf %32, %32 : vector<24x512xf32>
    %34 = arith.mulf %32, %33 : vector<24x512xf32>
    %cst_15 = arith.constant 4.471500e-02 : f32
    %35 = vector.broadcast %cst_15 : f32 to vector<24x512xf32>
    %36 = arith.mulf %35, %34 : vector<24x512xf32>
    %37 = arith.addf %32, %36 : vector<24x512xf32>
    %cst_16 = arith.constant 0.797884583 : f32
    %38 = vector.broadcast %cst_16 : f32 to vector<24x512xf32>
    %39 = arith.mulf %38, %37 : vector<24x512xf32>
    %40 = math.tanh %39 : vector<24x512xf32>
    %cst_17 = arith.constant 1.000000e+00 : f32
    %41 = vector.broadcast %cst_17 : f32 to vector<24x512xf32>
    %42 = arith.addf %41, %40 : vector<24x512xf32>
    %cst_18 = arith.constant 5.000000e-01 : f32
    %43 = vector.broadcast %cst_18 : f32 to vector<24x512xf32>
    %44 = arith.mulf %43, %42 : vector<24x512xf32>
    %45 = arith.mulf %32, %44 : vector<24x512xf32>
    %46 = arith.truncf %45 : vector<24x512xf32> to vector<24x512xbf16>
    %c0_19 = arith.constant 0 : index
    %c0_20 = arith.constant 0 : index
    %47 = vector.load %arg7[%c0_19, %c0_20] : memref<512x128xbf16, #tpu.memory_space<vmem>>, vector<512x128xbf16>
    %cst_21 = arith.constant dense<0.000000e+00> : vector<24x128xf32>
    %48 = tpu.matmul %46, %47, %cst_21 {dimension_numbers = #tpu.dot_dimension_numbers<[1], [0], [0], [1], [0, 0, 1, 1], [], []>} : vector<24x512xbf16>, vector<512x128xbf16>, vector<24x128xf32> -> vector<24x128xf32>
    %49 = arith.addf %2, %48 : vector<24x128xf32>
    %c0_22 = arith.constant 0 : index
    %c0_23 = arith.constant 0 : index
    %50 = vector.load %arg8[%c0_22, %c0_23] : memref<1x128xf32, #tpu.memory_space<vmem>>, vector<1x128xf32>
    %51 = vector.broadcast %50 : vector<1x128xf32> to vector<24x128xf32>
    %52 = arith.addf %49, %51 : vector<24x128xf32>
    %53 = arith.truncf %52 : vector<24x128xf32> to vector<24x128xbf16>
    %c0_24 = arith.constant 0 : index
    %c0_25 = arith.constant 0 : index
    %c0_26 = arith.constant 0 : index
    %54 = vector.load %arg9[%c0_24, %c0_25, %c0_26] : memref<1x24x128xbf16, #tpu.memory_space<vmem>>, vector<1x24x128xbf16>
    %55 = vector.shape_cast %54 : vector<1x24x128xbf16> to vector<24x128xbf16>
    %56 = vector.shape_cast %53 : vector<24x128xbf16> to vector<1x24x128xbf16>
    tpu.vector_store %arg9[%c0_24, %c0_25, %c0_26], %56 {strides = array<i32>} : memref<1x24x128xbf16, #tpu.memory_space<vmem>>, vector<1x24x128xbf16>,
    return
  }
  func.func @transform_0(%arg0: i32, %arg1: i32) -> (i32, i32, i32) {
    %c0_i32 = arith.constant 0 : i32
    %c0_i32_0 = arith.constant 0 : i32
    return %arg0, %arg1, %c0_i32 : i32, i32, i32
  }
  func.func @transform_1(%arg0: i32, %arg1: i32) -> (i32, i32) {
    %c0_i32 = arith.constant 0 : i32
    %c0_i32_0 = arith.constant 0 : i32
    %c0_i32_1 = arith.constant 0 : i32
    return %c0_i32, %c0_i32_0 : i32, i32
  }
  func.func @transform_2(%arg0: i32, %arg1: i32) -> (i32, i32) {
    %c0_i32 = arith.constant 0 : i32
    %c0_i32_0 = arith.constant 0 : i32
    %c0_i32_1 = arith.constant 0 : i32
    return %c0_i32, %c0_i32_0 : i32, i32
  }
  func.func @transform_3(%arg0: i32, %arg1: i32) -> (i32, i32) {
    %c0_i32 = arith.constant 0 : i32
    %c0_i32_0 = arith.constant 0 : i32
    %c0_i32_1 = arith.constant 0 : i32
    return %c0_i32, %c0_i32_0 : i32, i32
  }
  func.func @transform_4(%arg0: i32, %arg1: i32) -> (i32, i32) {
    %c0_i32 = arith.constant 0 : i32
    %c0_i32_0 = arith.constant 0 : i32
    %c0_i32_1 = arith.constant 0 : i32
    return %c0_i32, %c0_i32_0 : i32, i32
  }
  func.func @transform_5(%arg0: i32, %arg1: i32) -> (i32, i32) {
    %c0_i32 = arith.constant 0 : i32
    %c0_i32_0 = arith.constant 0 : i32
    %c0_i32_1 = arith.constant 0 : i32
    return %c0_i32, %c0_i32_0 : i32, i32
  }
  func.func @transform_6(%arg0: i32, %arg1: i32) -> (i32, i32) {
    %c0_i32 = arith.constant 0 : i32
    %c0_i32_0 = arith.constant 0 : i32
    %c0_i32_1 = arith.constant 0 : i32
    return %c0_i32, %c0_i32_0 : i32, i32
  }
  func.func @transform_7(%arg0: i32, %arg1: i32) -> (i32, i32, i32) {
    %c0_i32 = arith.constant 0 : i32
    %c0_i32_0 = arith.constant 0 : i32
    return %arg0, %arg1, %c0_i32 : i32, i32, i32
  }
}

module attributes {stable_mosaic.version = 11 : i64} {
  func.func @_attn_block_kernel(%arg0: i32, %arg1: memref<1x24x128xbf16, #tpu.memory_space<vmem>>, %arg2: memref<1x128xf32, #tpu.memory_space<vmem>>, %arg3: memref<1x128xf32, #tpu.memory_space<vmem>>, %arg4: memref<4x128x32xbf16, #tpu.memory_space<vmem>>, %arg5: memref<4x128x32xbf16, #tpu.memory_space<vmem>>, %arg6: memref<4x128x32xbf16, #tpu.memory_space<vmem>>, %arg7: memref<4x1x32xf32, #tpu.memory_space<vmem>>, %arg8: memref<4x1x32xf32, #tpu.memory_space<vmem>>, %arg9: memref<4x1x32xf32, #tpu.memory_space<vmem>>, %arg10: memref<4x32x128xbf16, #tpu.memory_space<vmem>>, %arg11: memref<1x128xf32, #tpu.memory_space<vmem>>, %arg12: memref<1x24x128xbf16, #tpu.memory_space<vmem>>) attributes {dimension_semantics = [#tpu.dimension_semantics<parallel>], iteration_bounds = array<i64: 2>, scalar_prefetch = 0 : i64, scratch_operands = 0 : i64, tpu.core_type = #tpu.core_type<tc>, window_params = [{transform_indices = @transform_0, window_bounds = array<i64: 1, 24, 128>}, {pipeline_mode = #tpu.pipeline_mode<synchronous>, transform_indices = @transform_1, window_bounds = array<i64: 1, 128>}, {pipeline_mode = #tpu.pipeline_mode<synchronous>, transform_indices = @transform_2, window_bounds = array<i64: 1, 128>}, {pipeline_mode = #tpu.pipeline_mode<synchronous>, transform_indices = @transform_3, window_bounds = array<i64: 4, 128, 32>}, {pipeline_mode = #tpu.pipeline_mode<synchronous>, transform_indices = @transform_4, window_bounds = array<i64: 4, 128, 32>}, {pipeline_mode = #tpu.pipeline_mode<synchronous>, transform_indices = @transform_5, window_bounds = array<i64: 4, 128, 32>}, {pipeline_mode = #tpu.pipeline_mode<synchronous>, transform_indices = @transform_6, window_bounds = array<i64: 4, 1, 32>}, {pipeline_mode = #tpu.pipeline_mode<synchronous>, transform_indices = @transform_7, window_bounds = array<i64: 4, 1, 32>}, {pipeline_mode = #tpu.pipeline_mode<synchronous>, transform_indices = @transform_8, window_bounds = array<i64: 4, 1, 32>}, {pipeline_mode = #tpu.pipeline_mode<synchronous>, transform_indices = @transform_9, window_bounds = array<i64: 4, 32, 128>}, {pipeline_mode = #tpu.pipeline_mode<synchronous>, transform_indices = @transform_10, window_bounds = array<i64: 1, 128>}, {transform_indices = @transform_11, window_bounds = array<i64: 1, 24, 128>}]} {
    %c0 = arith.constant 0 : index
    %c0_0 = arith.constant 0 : index
    %c0_1 = arith.constant 0 : index
    %0 = vector.load %arg1[%c0, %c0_0, %c0_1] : memref<1x24x128xbf16, #tpu.memory_space<vmem>>, vector<1x24x128xbf16>
    %1 = vector.shape_cast %0 : vector<1x24x128xbf16> to vector<24x128xbf16>
    %2 = arith.extf %1 : vector<24x128xbf16> to vector<24x128xf32>
    %c0_2 = arith.constant 0 : index
    %c0_3 = arith.constant 0 : index
    %3 = vector.load %arg2[%c0_2, %c0_3] : memref<1x128xf32, #tpu.memory_space<vmem>>, vector<1x128xf32>
    %c0_4 = arith.constant 0 : index
    %c0_5 = arith.constant 0 : index
    %4 = vector.load %arg3[%c0_4, %c0_5] : memref<1x128xf32, #tpu.memory_space<vmem>>, vector<1x128xf32>
    %cst = arith.constant dense<0.000000e+00> : vector<24xf32>
    %5 = vector.multi_reduction <add>, %2, %cst [1] : vector<24x128xf32> to vector<24xf32>
    %6 = vector.shape_cast %5 : vector<24xf32> to vector<24x1xf32>
    %cst_6 = arith.constant 1.280000e+02 : f32
    %7 = vector.broadcast %cst_6 : f32 to vector<24x1xf32>
    %8 = arith.divf %6, %7 : vector<24x1xf32>
    %9 = vector.broadcast %8 : vector<24x1xf32> to vector<24x128xf32>
    %10 = arith.subf %2, %9 : vector<24x128xf32>
    %11 = arith.mulf %10, %10 : vector<24x128xf32>
    %cst_7 = arith.constant dense<0.000000e+00> : vector<24xf32>
    %12 = vector.multi_reduction <add>, %11, %cst_7 [1] : vector<24x128xf32> to vector<24xf32>
    %13 = vector.shape_cast %12 : vector<24xf32> to vector<24x1xf32>
    %cst_8 = arith.constant 1.280000e+02 : f32
    %14 = vector.broadcast %cst_8 : f32 to vector<24x1xf32>
    %15 = arith.divf %13, %14 : vector<24x1xf32>
    %16 = vector.broadcast %8 : vector<24x1xf32> to vector<24x128xf32>
    %17 = arith.subf %2, %16 : vector<24x128xf32>
    %cst_9 = arith.constant 9.99999974E-6 : f32
    %18 = vector.broadcast %cst_9 : f32 to vector<24x1xf32>
    %19 = arith.addf %15, %18 : vector<24x1xf32>
    %20 = math.rsqrt %19 : vector<24x1xf32>
    %21 = vector.broadcast %20 : vector<24x1xf32> to vector<24x128xf32>
    %22 = arith.mulf %17, %21 : vector<24x128xf32>
    %23 = vector.broadcast %3 : vector<1x128xf32> to vector<24x128xf32>
    %24 = arith.mulf %22, %23 : vector<24x128xf32>
    %25 = vector.broadcast %4 : vector<1x128xf32> to vector<24x128xf32>
    %26 = arith.addf %24, %25 : vector<24x128xf32>
    %27 = arith.truncf %26 : vector<24x128xf32> to vector<24x128xbf16>
    %28 = tpu.iota {dimensions = array<i32: 1>} : vector<24x24xi32>
    %c17_i32 = arith.constant 17 : i32
    %29 = vector.broadcast %c17_i32 : i32 to vector<24x24xi32>
    %30 = arith.cmpi slt, %28, %29 : vector<24x24xi32>
    %cst_10 = arith.constant 0.000000e+00 : f32
    %31 = vector.broadcast %cst_10 : f32 to vector<24x128xf32>
    %c0_11 = arith.constant 0 : index
    %c0_12 = arith.constant 0 : index
    %c0_13 = arith.constant 0 : index
    %32 = vector.load %arg4[%c0_11, %c0_12, %c0_13] : memref<4x128x32xbf16, #tpu.memory_space<vmem>>, vector<1x128x32xbf16>
    %33 = vector.shape_cast %32 : vector<1x128x32xbf16> to vector<128x32xbf16>
    %cst_14 = arith.constant dense<0.000000e+00> : vector<24x32xf32>
    %34 = tpu.matmul %27, %33, %cst_14 {dimension_numbers = #tpu.dot_dimension_numbers<[1], [0], [0], [1], [0, 0, 1, 1], [], []>} : vector<24x128xbf16>, vector<128x32xbf16>, vector<24x32xf32> -> vector<24x32xf32>
    %c0_15 = arith.constant 0 : index
    %c0_16 = arith.constant 0 : index
    %c0_17 = arith.constant 0 : index
    %35 = vector.load %arg7[%c0_15, %c0_16, %c0_17] : memref<4x1x32xf32, #tpu.memory_space<vmem>>, vector<1x1x32xf32>
    %36 = vector.shape_cast %35 : vector<1x1x32xf32> to vector<1x32xf32>
    %37 = vector.broadcast %36 : vector<1x32xf32> to vector<24x32xf32>
    %38 = arith.addf %34, %37 : vector<24x32xf32>
    %c0_18 = arith.constant 0 : index
    %c0_19 = arith.constant 0 : index
    %c0_20 = arith.constant 0 : index
    %39 = vector.load %arg5[%c0_18, %c0_19, %c0_20] : memref<4x128x32xbf16, #tpu.memory_space<vmem>>, vector<1x128x32xbf16>
    %40 = vector.shape_cast %39 : vector<1x128x32xbf16> to vector<128x32xbf16>
    %cst_21 = arith.constant dense<0.000000e+00> : vector<24x32xf32>
    %41 = tpu.matmul %27, %40, %cst_21 {dimension_numbers = #tpu.dot_dimension_numbers<[1], [0], [0], [1], [0, 0, 1, 1], [], []>} : vector<24x128xbf16>, vector<128x32xbf16>, vector<24x32xf32> -> vector<24x32xf32>
    %c0_22 = arith.constant 0 : index
    %c0_23 = arith.constant 0 : index
    %c0_24 = arith.constant 0 : index
    %42 = vector.load %arg8[%c0_22, %c0_23, %c0_24] : memref<4x1x32xf32, #tpu.memory_space<vmem>>, vector<1x1x32xf32>
    %43 = vector.shape_cast %42 : vector<1x1x32xf32> to vector<1x32xf32>
    %44 = vector.broadcast %43 : vector<1x32xf32> to vector<24x32xf32>
    %45 = arith.addf %41, %44 : vector<24x32xf32>
    %c0_25 = arith.constant 0 : index
    %c0_26 = arith.constant 0 : index
    %c0_27 = arith.constant 0 : index
    %46 = vector.load %arg6[%c0_25, %c0_26, %c0_27] : memref<4x128x32xbf16, #tpu.memory_space<vmem>>, vector<1x128x32xbf16>
    %47 = vector.shape_cast %46 : vector<1x128x32xbf16> to vector<128x32xbf16>
    %cst_28 = arith.constant dense<0.000000e+00> : vector<24x32xf32>
    %48 = tpu.matmul %27, %47, %cst_28 {dimension_numbers = #tpu.dot_dimension_numbers<[1], [0], [0], [1], [0, 0, 1, 1], [], []>} : vector<24x128xbf16>, vector<128x32xbf16>, vector<24x32xf32> -> vector<24x32xf32>
    %c0_29 = arith.constant 0 : index
    %c0_30 = arith.constant 0 : index
    %c0_31 = arith.constant 0 : index
    %49 = vector.load %arg9[%c0_29, %c0_30, %c0_31] : memref<4x1x32xf32, #tpu.memory_space<vmem>>, vector<1x1x32xf32>
    %50 = vector.shape_cast %49 : vector<1x1x32xf32> to vector<1x32xf32>
    %51 = vector.broadcast %50 : vector<1x32xf32> to vector<24x32xf32>
    %52 = arith.addf %48, %51 : vector<24x32xf32>
    %53 = arith.truncf %38 : vector<24x32xf32> to vector<24x32xbf16>
    %54 = arith.truncf %45 : vector<24x32xf32> to vector<24x32xbf16>
    %cst_32 = arith.constant dense<0.000000e+00> : vector<24x24xf32>
    %55 = tpu.matmul %53, %54, %cst_32 {dimension_numbers = #tpu.dot_dimension_numbers<[1], [1], [0], [0], [0, 0, 1, 0], [], []>} : vector<24x32xbf16>, vector<24x32xbf16>, vector<24x24xf32> -> vector<24x24xf32>
    %cst_33 = arith.constant 0.176776692 : f32
    %56 = vector.broadcast %cst_33 : f32 to vector<24x24xf32>
    %57 = arith.mulf %55, %56 : vector<24x24xf32>
    %cst_34 = arith.constant -1.000000e+30 : f32
    %58 = vector.broadcast %cst_34 : f32 to vector<24x24xf32>
    %59 = arith.select %30, %57, %58 : vector<24x24xi1>, vector<24x24xf32>
    %cst_35 = arith.constant dense<0xFF800000> : vector<24xf32>
    %60 = vector.multi_reduction <maximumf>, %59, %cst_35 [1] : vector<24x24xf32> to vector<24xf32>
    %61 = vector.shape_cast %60 : vector<24xf32> to vector<24x1xf32>
    %62 = vector.broadcast %61 : vector<24x1xf32> to vector<24x24xf32>
    %63 = arith.subf %59, %62 : vector<24x24xf32>
    %64 = math.exp %63 : vector<24x24xf32>
    %cst_36 = arith.constant dense<0.000000e+00> : vector<24xf32>
    %65 = vector.multi_reduction <add>, %64, %cst_36 [1] : vector<24x24xf32> to vector<24xf32>
    %66 = vector.shape_cast %65 : vector<24xf32> to vector<24x1xf32>
    %67 = tpu.reciprocal %66 {approx = true} : vector<24x1xf32> -> vector<24x1xf32>
    %68 = vector.broadcast %67 : vector<24x1xf32> to vector<24x24xf32>
    %69 = arith.mulf %64, %68 : vector<24x24xf32>
    %70 = arith.truncf %69 : vector<24x24xf32> to vector<24x24xbf16>
    %71 = arith.truncf %52 : vector<24x32xf32> to vector<24x32xbf16>
    %cst_37 = arith.constant dense<0.000000e+00> : vector<24x32xf32>
    %72 = tpu.matmul %70, %71, %cst_37 {dimension_numbers = #tpu.dot_dimension_numbers<[1], [0], [0], [1], [0, 0, 1, 1], [], []>} : vector<24x24xbf16>, vector<24x32xbf16>, vector<24x32xf32> -> vector<24x32xf32>
    %73 = arith.truncf %72 : vector<24x32xf32> to vector<24x32xbf16>
    %c0_38 = arith.constant 0 : index
    %c0_39 = arith.constant 0 : index
    %c0_40 = arith.constant 0 : index
    %74 = vector.load %arg10[%c0_38, %c0_39, %c0_40] : memref<4x32x128xbf16, #tpu.memory_space<vmem>>, vector<1x32x128xbf16>
    %75 = vector.shape_cast %74 : vector<1x32x128xbf16> to vector<32x128xbf16>
    %cst_41 = arith.constant dense<0.000000e+00> : vector<24x128xf32>
    %76 = tpu.matmul %73, %75, %cst_41 {dimension_numbers = #tpu.dot_dimension_numbers<[1], [0], [0], [1], [0, 0, 1, 1], [], []>} : vector<24x32xbf16>, vector<32x128xbf16>, vector<24x128xf32> -> vector<24x128xf32>
    %77 = arith.addf %31, %76 : vector<24x128xf32>
    %c1 = arith.constant 1 : index
    %c0_42 = arith.constant 0 : index
    %c0_43 = arith.constant 0 : index
    %78 = vector.load %arg4[%c1, %c0_42, %c0_43] : memref<4x128x32xbf16, #tpu.memory_space<vmem>>, vector<1x128x32xbf16>
    %79 = vector.shape_cast %78 : vector<1x128x32xbf16> to vector<128x32xbf16>
    %cst_44 = arith.constant dense<0.000000e+00> : vector<24x32xf32>
    %80 = tpu.matmul %27, %79, %cst_44 {dimension_numbers = #tpu.dot_dimension_numbers<[1], [0], [0], [1], [0, 0, 1, 1], [], []>} : vector<24x128xbf16>, vector<128x32xbf16>, vector<24x32xf32> -> vector<24x32xf32>
    %c1_45 = arith.constant 1 : index
    %c0_46 = arith.constant 0 : index
    %c0_47 = arith.constant 0 : index
    %81 = vector.load %arg7[%c1_45, %c0_46, %c0_47] : memref<4x1x32xf32, #tpu.memory_space<vmem>>, vector<1x1x32xf32>
    %82 = vector.shape_cast %81 : vector<1x1x32xf32> to vector<1x32xf32>
    %83 = vector.broadcast %82 : vector<1x32xf32> to vector<24x32xf32>
    %84 = arith.addf %80, %83 : vector<24x32xf32>
    %c1_48 = arith.constant 1 : index
    %c0_49 = arith.constant 0 : index
    %c0_50 = arith.constant 0 : index
    %85 = vector.load %arg5[%c1_48, %c0_49, %c0_50] : memref<4x128x32xbf16, #tpu.memory_space<vmem>>, vector<1x128x32xbf16>
    %86 = vector.shape_cast %85 : vector<1x128x32xbf16> to vector<128x32xbf16>
    %cst_51 = arith.constant dense<0.000000e+00> : vector<24x32xf32>
    %87 = tpu.matmul %27, %86, %cst_51 {dimension_numbers = #tpu.dot_dimension_numbers<[1], [0], [0], [1], [0, 0, 1, 1], [], []>} : vector<24x128xbf16>, vector<128x32xbf16>, vector<24x32xf32> -> vector<24x32xf32>
    %c1_52 = arith.constant 1 : index
    %c0_53 = arith.constant 0 : index
    %c0_54 = arith.constant 0 : index
    %88 = vector.load %arg8[%c1_52, %c0_53, %c0_54] : memref<4x1x32xf32, #tpu.memory_space<vmem>>, vector<1x1x32xf32>
    %89 = vector.shape_cast %88 : vector<1x1x32xf32> to vector<1x32xf32>
    %90 = vector.broadcast %89 : vector<1x32xf32> to vector<24x32xf32>
    %91 = arith.addf %87, %90 : vector<24x32xf32>
    %c1_55 = arith.constant 1 : index
    %c0_56 = arith.constant 0 : index
    %c0_57 = arith.constant 0 : index
    %92 = vector.load %arg6[%c1_55, %c0_56, %c0_57] : memref<4x128x32xbf16, #tpu.memory_space<vmem>>, vector<1x128x32xbf16>
    %93 = vector.shape_cast %92 : vector<1x128x32xbf16> to vector<128x32xbf16>
    %cst_58 = arith.constant dense<0.000000e+00> : vector<24x32xf32>
    %94 = tpu.matmul %27, %93, %cst_58 {dimension_numbers = #tpu.dot_dimension_numbers<[1], [0], [0], [1], [0, 0, 1, 1], [], []>} : vector<24x128xbf16>, vector<128x32xbf16>, vector<24x32xf32> -> vector<24x32xf32>
    %c1_59 = arith.constant 1 : index
    %c0_60 = arith.constant 0 : index
    %c0_61 = arith.constant 0 : index
    %95 = vector.load %arg9[%c1_59, %c0_60, %c0_61] : memref<4x1x32xf32, #tpu.memory_space<vmem>>, vector<1x1x32xf32>
    %96 = vector.shape_cast %95 : vector<1x1x32xf32> to vector<1x32xf32>
    %97 = vector.broadcast %96 : vector<1x32xf32> to vector<24x32xf32>
    %98 = arith.addf %94, %97 : vector<24x32xf32>
    %99 = arith.truncf %84 : vector<24x32xf32> to vector<24x32xbf16>
    %100 = arith.truncf %91 : vector<24x32xf32> to vector<24x32xbf16>
    %cst_62 = arith.constant dense<0.000000e+00> : vector<24x24xf32>
    %101 = tpu.matmul %99, %100, %cst_62 {dimension_numbers = #tpu.dot_dimension_numbers<[1], [1], [0], [0], [0, 0, 1, 0], [], []>} : vector<24x32xbf16>, vector<24x32xbf16>, vector<24x24xf32> -> vector<24x24xf32>
    %cst_63 = arith.constant 0.176776692 : f32
    %102 = vector.broadcast %cst_63 : f32 to vector<24x24xf32>
    %103 = arith.mulf %101, %102 : vector<24x24xf32>
    %cst_64 = arith.constant -1.000000e+30 : f32
    %104 = vector.broadcast %cst_64 : f32 to vector<24x24xf32>
    %105 = arith.select %30, %103, %104 : vector<24x24xi1>, vector<24x24xf32>
    %cst_65 = arith.constant dense<0xFF800000> : vector<24xf32>
    %106 = vector.multi_reduction <maximumf>, %105, %cst_65 [1] : vector<24x24xf32> to vector<24xf32>
    %107 = vector.shape_cast %106 : vector<24xf32> to vector<24x1xf32>
    %108 = vector.broadcast %107 : vector<24x1xf32> to vector<24x24xf32>
    %109 = arith.subf %105, %108 : vector<24x24xf32>
    %110 = math.exp %109 : vector<24x24xf32>
    %cst_66 = arith.constant dense<0.000000e+00> : vector<24xf32>
    %111 = vector.multi_reduction <add>, %110, %cst_66 [1] : vector<24x24xf32> to vector<24xf32>
    %112 = vector.shape_cast %111 : vector<24xf32> to vector<24x1xf32>
    %113 = tpu.reciprocal %112 {approx = true} : vector<24x1xf32> -> vector<24x1xf32>
    %114 = vector.broadcast %113 : vector<24x1xf32> to vector<24x24xf32>
    %115 = arith.mulf %110, %114 : vector<24x24xf32>
    %116 = arith.truncf %115 : vector<24x24xf32> to vector<24x24xbf16>
    %117 = arith.truncf %98 : vector<24x32xf32> to vector<24x32xbf16>
    %cst_67 = arith.constant dense<0.000000e+00> : vector<24x32xf32>
    %118 = tpu.matmul %116, %117, %cst_67 {dimension_numbers = #tpu.dot_dimension_numbers<[1], [0], [0], [1], [0, 0, 1, 1], [], []>} : vector<24x24xbf16>, vector<24x32xbf16>, vector<24x32xf32> -> vector<24x32xf32>
    %119 = arith.truncf %118 : vector<24x32xf32> to vector<24x32xbf16>
    %c1_68 = arith.constant 1 : index
    %c0_69 = arith.constant 0 : index
    %c0_70 = arith.constant 0 : index
    %120 = vector.load %arg10[%c1_68, %c0_69, %c0_70] : memref<4x32x128xbf16, #tpu.memory_space<vmem>>, vector<1x32x128xbf16>
    %121 = vector.shape_cast %120 : vector<1x32x128xbf16> to vector<32x128xbf16>
    %cst_71 = arith.constant dense<0.000000e+00> : vector<24x128xf32>
    %122 = tpu.matmul %119, %121, %cst_71 {dimension_numbers = #tpu.dot_dimension_numbers<[1], [0], [0], [1], [0, 0, 1, 1], [], []>} : vector<24x32xbf16>, vector<32x128xbf16>, vector<24x128xf32> -> vector<24x128xf32>
    %123 = arith.addf %77, %122 : vector<24x128xf32>
    %c2 = arith.constant 2 : index
    %c0_72 = arith.constant 0 : index
    %c0_73 = arith.constant 0 : index
    %124 = vector.load %arg4[%c2, %c0_72, %c0_73] : memref<4x128x32xbf16, #tpu.memory_space<vmem>>, vector<1x128x32xbf16>
    %125 = vector.shape_cast %124 : vector<1x128x32xbf16> to vector<128x32xbf16>
    %cst_74 = arith.constant dense<0.000000e+00> : vector<24x32xf32>
    %126 = tpu.matmul %27, %125, %cst_74 {dimension_numbers = #tpu.dot_dimension_numbers<[1], [0], [0], [1], [0, 0, 1, 1], [], []>} : vector<24x128xbf16>, vector<128x32xbf16>, vector<24x32xf32> -> vector<24x32xf32>
    %c2_75 = arith.constant 2 : index
    %c0_76 = arith.constant 0 : index
    %c0_77 = arith.constant 0 : index
    %127 = vector.load %arg7[%c2_75, %c0_76, %c0_77] : memref<4x1x32xf32, #tpu.memory_space<vmem>>, vector<1x1x32xf32>
    %128 = vector.shape_cast %127 : vector<1x1x32xf32> to vector<1x32xf32>
    %129 = vector.broadcast %128 : vector<1x32xf32> to vector<24x32xf32>
    %130 = arith.addf %126, %129 : vector<24x32xf32>
    %c2_78 = arith.constant 2 : index
    %c0_79 = arith.constant 0 : index
    %c0_80 = arith.constant 0 : index
    %131 = vector.load %arg5[%c2_78, %c0_79, %c0_80] : memref<4x128x32xbf16, #tpu.memory_space<vmem>>, vector<1x128x32xbf16>
    %132 = vector.shape_cast %131 : vector<1x128x32xbf16> to vector<128x32xbf16>
    %cst_81 = arith.constant dense<0.000000e+00> : vector<24x32xf32>
    %133 = tpu.matmul %27, %132, %cst_81 {dimension_numbers = #tpu.dot_dimension_numbers<[1], [0], [0], [1], [0, 0, 1, 1], [], []>} : vector<24x128xbf16>, vector<128x32xbf16>, vector<24x32xf32> -> vector<24x32xf32>
    %c2_82 = arith.constant 2 : index
    %c0_83 = arith.constant 0 : index
    %c0_84 = arith.constant 0 : index
    %134 = vector.load %arg8[%c2_82, %c0_83, %c0_84] : memref<4x1x32xf32, #tpu.memory_space<vmem>>, vector<1x1x32xf32>
    %135 = vector.shape_cast %134 : vector<1x1x32xf32> to vector<1x32xf32>
    %136 = vector.broadcast %135 : vector<1x32xf32> to vector<24x32xf32>
    %137 = arith.addf %133, %136 : vector<24x32xf32>
    %c2_85 = arith.constant 2 : index
    %c0_86 = arith.constant 0 : index
    %c0_87 = arith.constant 0 : index
    %138 = vector.load %arg6[%c2_85, %c0_86, %c0_87] : memref<4x128x32xbf16, #tpu.memory_space<vmem>>, vector<1x128x32xbf16>
    %139 = vector.shape_cast %138 : vector<1x128x32xbf16> to vector<128x32xbf16>
    %cst_88 = arith.constant dense<0.000000e+00> : vector<24x32xf32>
    %140 = tpu.matmul %27, %139, %cst_88 {dimension_numbers = #tpu.dot_dimension_numbers<[1], [0], [0], [1], [0, 0, 1, 1], [], []>} : vector<24x128xbf16>, vector<128x32xbf16>, vector<24x32xf32> -> vector<24x32xf32>
    %c2_89 = arith.constant 2 : index
    %c0_90 = arith.constant 0 : index
    %c0_91 = arith.constant 0 : index
    %141 = vector.load %arg9[%c2_89, %c0_90, %c0_91] : memref<4x1x32xf32, #tpu.memory_space<vmem>>, vector<1x1x32xf32>
    %142 = vector.shape_cast %141 : vector<1x1x32xf32> to vector<1x32xf32>
    %143 = vector.broadcast %142 : vector<1x32xf32> to vector<24x32xf32>
    %144 = arith.addf %140, %143 : vector<24x32xf32>
    %145 = arith.truncf %130 : vector<24x32xf32> to vector<24x32xbf16>
    %146 = arith.truncf %137 : vector<24x32xf32> to vector<24x32xbf16>
    %cst_92 = arith.constant dense<0.000000e+00> : vector<24x24xf32>
    %147 = tpu.matmul %145, %146, %cst_92 {dimension_numbers = #tpu.dot_dimension_numbers<[1], [1], [0], [0], [0, 0, 1, 0], [], []>} : vector<24x32xbf16>, vector<24x32xbf16>, vector<24x24xf32> -> vector<24x24xf32>
    %cst_93 = arith.constant 0.176776692 : f32
    %148 = vector.broadcast %cst_93 : f32 to vector<24x24xf32>
    %149 = arith.mulf %147, %148 : vector<24x24xf32>
    %cst_94 = arith.constant -1.000000e+30 : f32
    %150 = vector.broadcast %cst_94 : f32 to vector<24x24xf32>
    %151 = arith.select %30, %149, %150 : vector<24x24xi1>, vector<24x24xf32>
    %cst_95 = arith.constant dense<0xFF800000> : vector<24xf32>
    %152 = vector.multi_reduction <maximumf>, %151, %cst_95 [1] : vector<24x24xf32> to vector<24xf32>
    %153 = vector.shape_cast %152 : vector<24xf32> to vector<24x1xf32>
    %154 = vector.broadcast %153 : vector<24x1xf32> to vector<24x24xf32>
    %155 = arith.subf %151, %154 : vector<24x24xf32>
    %156 = math.exp %155 : vector<24x24xf32>
    %cst_96 = arith.constant dense<0.000000e+00> : vector<24xf32>
    %157 = vector.multi_reduction <add>, %156, %cst_96 [1] : vector<24x24xf32> to vector<24xf32>
    %158 = vector.shape_cast %157 : vector<24xf32> to vector<24x1xf32>
    %159 = tpu.reciprocal %158 {approx = true} : vector<24x1xf32> -> vector<24x1xf32>
    %160 = vector.broadcast %159 : vector<24x1xf32> to vector<24x24xf32>
    %161 = arith.mulf %156, %160 : vector<24x24xf32>
    %162 = arith.truncf %161 : vector<24x24xf32> to vector<24x24xbf16>
    %163 = arith.truncf %144 : vector<24x32xf32> to vector<24x32xbf16>
    %cst_97 = arith.constant dense<0.000000e+00> : vector<24x32xf32>
    %164 = tpu.matmul %162, %163, %cst_97 {dimension_numbers = #tpu.dot_dimension_numbers<[1], [0], [0], [1], [0, 0, 1, 1], [], []>} : vector<24x24xbf16>, vector<24x32xbf16>, vector<24x32xf32> -> vector<24x32xf32>
    %165 = arith.truncf %164 : vector<24x32xf32> to vector<24x32xbf16>
    %c2_98 = arith.constant 2 : index
    %c0_99 = arith.constant 0 : index
    %c0_100 = arith.constant 0 : index
    %166 = vector.load %arg10[%c2_98, %c0_99, %c0_100] : memref<4x32x128xbf16, #tpu.memory_space<vmem>>, vector<1x32x128xbf16>
    %167 = vector.shape_cast %166 : vector<1x32x128xbf16> to vector<32x128xbf16>
    %cst_101 = arith.constant dense<0.000000e+00> : vector<24x128xf32>
    %168 = tpu.matmul %165, %167, %cst_101 {dimension_numbers = #tpu.dot_dimension_numbers<[1], [0], [0], [1], [0, 0, 1, 1], [], []>} : vector<24x32xbf16>, vector<32x128xbf16>, vector<24x128xf32> -> vector<24x128xf32>
    %169 = arith.addf %123, %168 : vector<24x128xf32>
    %c3 = arith.constant 3 : index
    %c0_102 = arith.constant 0 : index
    %c0_103 = arith.constant 0 : index
    %170 = vector.load %arg4[%c3, %c0_102, %c0_103] : memref<4x128x32xbf16, #tpu.memory_space<vmem>>, vector<1x128x32xbf16>
    %171 = vector.shape_cast %170 : vector<1x128x32xbf16> to vector<128x32xbf16>
    %cst_104 = arith.constant dense<0.000000e+00> : vector<24x32xf32>
    %172 = tpu.matmul %27, %171, %cst_104 {dimension_numbers = #tpu.dot_dimension_numbers<[1], [0], [0], [1], [0, 0, 1, 1], [], []>} : vector<24x128xbf16>, vector<128x32xbf16>, vector<24x32xf32> -> vector<24x32xf32>
    %c3_105 = arith.constant 3 : index
    %c0_106 = arith.constant 0 : index
    %c0_107 = arith.constant 0 : index
    %173 = vector.load %arg7[%c3_105, %c0_106, %c0_107] : memref<4x1x32xf32, #tpu.memory_space<vmem>>, vector<1x1x32xf32>
    %174 = vector.shape_cast %173 : vector<1x1x32xf32> to vector<1x32xf32>
    %175 = vector.broadcast %174 : vector<1x32xf32> to vector<24x32xf32>
    %176 = arith.addf %172, %175 : vector<24x32xf32>
    %c3_108 = arith.constant 3 : index
    %c0_109 = arith.constant 0 : index
    %c0_110 = arith.constant 0 : index
    %177 = vector.load %arg5[%c3_108, %c0_109, %c0_110] : memref<4x128x32xbf16, #tpu.memory_space<vmem>>, vector<1x128x32xbf16>
    %178 = vector.shape_cast %177 : vector<1x128x32xbf16> to vector<128x32xbf16>
    %cst_111 = arith.constant dense<0.000000e+00> : vector<24x32xf32>
    %179 = tpu.matmul %27, %178, %cst_111 {dimension_numbers = #tpu.dot_dimension_numbers<[1], [0], [0], [1], [0, 0, 1, 1], [], []>} : vector<24x128xbf16>, vector<128x32xbf16>, vector<24x32xf32> -> vector<24x32xf32>
    %c3_112 = arith.constant 3 : index
    %c0_113 = arith.constant 0 : index
    %c0_114 = arith.constant 0 : index
    %180 = vector.load %arg8[%c3_112, %c0_113, %c0_114] : memref<4x1x32xf32, #tpu.memory_space<vmem>>, vector<1x1x32xf32>
    %181 = vector.shape_cast %180 : vector<1x1x32xf32> to vector<1x32xf32>
    %182 = vector.broadcast %181 : vector<1x32xf32> to vector<24x32xf32>
    %183 = arith.addf %179, %182 : vector<24x32xf32>
    %c3_115 = arith.constant 3 : index
    %c0_116 = arith.constant 0 : index
    %c0_117 = arith.constant 0 : index
    %184 = vector.load %arg6[%c3_115, %c0_116, %c0_117] : memref<4x128x32xbf16, #tpu.memory_space<vmem>>, vector<1x128x32xbf16>
    %185 = vector.shape_cast %184 : vector<1x128x32xbf16> to vector<128x32xbf16>
    %cst_118 = arith.constant dense<0.000000e+00> : vector<24x32xf32>
    %186 = tpu.matmul %27, %185, %cst_118 {dimension_numbers = #tpu.dot_dimension_numbers<[1], [0], [0], [1], [0, 0, 1, 1], [], []>} : vector<24x128xbf16>, vector<128x32xbf16>, vector<24x32xf32> -> vector<24x32xf32>
    %c3_119 = arith.constant 3 : index
    %c0_120 = arith.constant 0 : index
    %c0_121 = arith.constant 0 : index
    %187 = vector.load %arg9[%c3_119, %c0_120, %c0_121] : memref<4x1x32xf32, #tpu.memory_space<vmem>>, vector<1x1x32xf32>
    %188 = vector.shape_cast %187 : vector<1x1x32xf32> to vector<1x32xf32>
    %189 = vector.broadcast %188 : vector<1x32xf32> to vector<24x32xf32>
    %190 = arith.addf %186, %189 : vector<24x32xf32>
    %191 = arith.truncf %176 : vector<24x32xf32> to vector<24x32xbf16>
    %192 = arith.truncf %183 : vector<24x32xf32> to vector<24x32xbf16>
    %cst_122 = arith.constant dense<0.000000e+00> : vector<24x24xf32>
    %193 = tpu.matmul %191, %192, %cst_122 {dimension_numbers = #tpu.dot_dimension_numbers<[1], [1], [0], [0], [0, 0, 1, 0], [], []>} : vector<24x32xbf16>, vector<24x32xbf16>, vector<24x24xf32> -> vector<24x24xf32>
    %cst_123 = arith.constant 0.176776692 : f32
    %194 = vector.broadcast %cst_123 : f32 to vector<24x24xf32>
    %195 = arith.mulf %193, %194 : vector<24x24xf32>
    %cst_124 = arith.constant -1.000000e+30 : f32
    %196 = vector.broadcast %cst_124 : f32 to vector<24x24xf32>
    %197 = arith.select %30, %195, %196 : vector<24x24xi1>, vector<24x24xf32>
    %cst_125 = arith.constant dense<0xFF800000> : vector<24xf32>
    %198 = vector.multi_reduction <maximumf>, %197, %cst_125 [1] : vector<24x24xf32> to vector<24xf32>
    %199 = vector.shape_cast %198 : vector<24xf32> to vector<24x1xf32>
    %200 = vector.broadcast %199 : vector<24x1xf32> to vector<24x24xf32>
    %201 = arith.subf %197, %200 : vector<24x24xf32>
    %202 = math.exp %201 : vector<24x24xf32>
    %cst_126 = arith.constant dense<0.000000e+00> : vector<24xf32>
    %203 = vector.multi_reduction <add>, %202, %cst_126 [1] : vector<24x24xf32> to vector<24xf32>
    %204 = vector.shape_cast %203 : vector<24xf32> to vector<24x1xf32>
    %205 = tpu.reciprocal %204 {approx = true} : vector<24x1xf32> -> vector<24x1xf32>
    %206 = vector.broadcast %205 : vector<24x1xf32> to vector<24x24xf32>
    %207 = arith.mulf %202, %206 : vector<24x24xf32>
    %208 = arith.truncf %207 : vector<24x24xf32> to vector<24x24xbf16>
    %209 = arith.truncf %190 : vector<24x32xf32> to vector<24x32xbf16>
    %cst_127 = arith.constant dense<0.000000e+00> : vector<24x32xf32>
    %210 = tpu.matmul %208, %209, %cst_127 {dimension_numbers = #tpu.dot_dimension_numbers<[1], [0], [0], [1], [0, 0, 1, 1], [], []>} : vector<24x24xbf16>, vector<24x32xbf16>, vector<24x32xf32> -> vector<24x32xf32>
    %211 = arith.truncf %210 : vector<24x32xf32> to vector<24x32xbf16>
    %c3_128 = arith.constant 3 : index
    %c0_129 = arith.constant 0 : index
    %c0_130 = arith.constant 0 : index
    %212 = vector.load %arg10[%c3_128, %c0_129, %c0_130] : memref<4x32x128xbf16, #tpu.memory_space<vmem>>, vector<1x32x128xbf16>
    %213 = vector.shape_cast %212 : vector<1x32x128xbf16> to vector<32x128xbf16>
    %cst_131 = arith.constant dense<0.000000e+00> : vector<24x128xf32>
    %214 = tpu.matmul %211, %213, %cst_131 {dimension_numbers = #tpu.dot_dimension_numbers<[1], [0], [0], [1], [0, 0, 1, 1], [], []>} : vector<24x32xbf16>, vector<32x128xbf16>, vector<24x128xf32> -> vector<24x128xf32>
    %215 = arith.addf %169, %214 : vector<24x128xf32>
    %216 = arith.addf %2, %215 : vector<24x128xf32>
    %c0_132 = arith.constant 0 : index
    %c0_133 = arith.constant 0 : index
    %217 = vector.load %arg11[%c0_132, %c0_133] : memref<1x128xf32, #tpu.memory_space<vmem>>, vector<1x128xf32>
    %218 = vector.broadcast %217 : vector<1x128xf32> to vector<24x128xf32>
    %219 = arith.addf %216, %218 : vector<24x128xf32>
    %220 = arith.truncf %219 : vector<24x128xf32> to vector<24x128xbf16>
    %c0_134 = arith.constant 0 : index
    %c0_135 = arith.constant 0 : index
    %c0_136 = arith.constant 0 : index
    %221 = vector.load %arg12[%c0_134, %c0_135, %c0_136] : memref<1x24x128xbf16, #tpu.memory_space<vmem>>, vector<1x24x128xbf16>
    %222 = vector.shape_cast %221 : vector<1x24x128xbf16> to vector<24x128xbf16>
    %223 = vector.shape_cast %220 : vector<24x128xbf16> to vector<1x24x128xbf16>
    tpu.vector_store %arg12[%c0_134, %c0_135, %c0_136], %223 {strides = array<i32>} : memref<1x24x128xbf16, #tpu.memory_space<vmem>>, vector<1x24x128xbf16>,
    return
  }
  func.func @transform_0(%arg0: i32) -> (i32, i32, i32) {
    %c0_i32 = arith.constant 0 : i32
    %c0_i32_0 = arith.constant 0 : i32
    %c0_i32_1 = arith.constant 0 : i32
    return %arg0, %c0_i32, %c0_i32_0 : i32, i32, i32
  }
  func.func @transform_1(%arg0: i32) -> (i32, i32) {
    %c0_i32 = arith.constant 0 : i32
    %c0_i32_0 = arith.constant 0 : i32
    %c0_i32_1 = arith.constant 0 : i32
    return %c0_i32, %c0_i32_0 : i32, i32
  }
  func.func @transform_2(%arg0: i32) -> (i32, i32) {
    %c0_i32 = arith.constant 0 : i32
    %c0_i32_0 = arith.constant 0 : i32
    %c0_i32_1 = arith.constant 0 : i32
    return %c0_i32, %c0_i32_0 : i32, i32
  }
  func.func @transform_3(%arg0: i32) -> (i32, i32, i32) {
    %c0_i32 = arith.constant 0 : i32
    %c0_i32_0 = arith.constant 0 : i32
    %c0_i32_1 = arith.constant 0 : i32
    %c0_i32_2 = arith.constant 0 : i32
    return %c0_i32, %c0_i32_0, %c0_i32_1 : i32, i32, i32
  }
  func.func @transform_4(%arg0: i32) -> (i32, i32, i32) {
    %c0_i32 = arith.constant 0 : i32
    %c0_i32_0 = arith.constant 0 : i32
    %c0_i32_1 = arith.constant 0 : i32
    %c0_i32_2 = arith.constant 0 : i32
    return %c0_i32, %c0_i32_0, %c0_i32_1 : i32, i32, i32
  }
  func.func @transform_5(%arg0: i32) -> (i32, i32, i32) {
    %c0_i32 = arith.constant 0 : i32
    %c0_i32_0 = arith.constant 0 : i32
    %c0_i32_1 = arith.constant 0 : i32
    %c0_i32_2 = arith.constant 0 : i32
    return %c0_i32, %c0_i32_0, %c0_i32_1 : i32, i32, i32
  }
  func.func @transform_6(%arg0: i32) -> (i32, i32, i32) {
    %c0_i32 = arith.constant 0 : i32
    %c0_i32_0 = arith.constant 0 : i32
    %c0_i32_1 = arith.constant 0 : i32
    %c0_i32_2 = arith.constant 0 : i32
    return %c0_i32, %c0_i32_0, %c0_i32_1 : i32, i32, i32
  }
  func.func @transform_7(%arg0: i32) -> (i32, i32, i32) {
    %c0_i32 = arith.constant 0 : i32
    %c0_i32_0 = arith.constant 0 : i32
    %c0_i32_1 = arith.constant 0 : i32
    %c0_i32_2 = arith.constant 0 : i32
    return %c0_i32, %c0_i32_0, %c0_i32_1 : i32, i32, i32
  }
  func.func @transform_8(%arg0: i32) -> (i32, i32, i32) {
    %c0_i32 = arith.constant 0 : i32
    %c0_i32_0 = arith.constant 0 : i32
    %c0_i32_1 = arith.constant 0 : i32
    %c0_i32_2 = arith.constant 0 : i32
    return %c0_i32, %c0_i32_0, %c0_i32_1 : i32, i32, i32
  }
  func.func @transform_9(%arg0: i32) -> (i32, i32, i32) {
    %c0_i32 = arith.constant 0 : i32
    %c0_i32_0 = arith.constant 0 : i32
    %c0_i32_1 = arith.constant 0 : i32
    %c0_i32_2 = arith.constant 0 : i32
    return %c0_i32, %c0_i32_0, %c0_i32_1 : i32, i32, i32
  }
  func.func @transform_10(%arg0: i32) -> (i32, i32) {
    %c0_i32 = arith.constant 0 : i32
    %c0_i32_0 = arith.constant 0 : i32
    %c0_i32_1 = arith.constant 0 : i32
    return %c0_i32, %c0_i32_0 : i32, i32
  }
  func.func @transform_11(%arg0: i32) -> (i32, i32, i32) {
    %c0_i32 = arith.constant 0 : i32
    %c0_i32_0 = arith.constant 0 : i32
    %c0_i32_1 = arith.constant 0 : i32
    return %arg0, %c0_i32, %c0_i32_0 : i32, i32, i32
  }
}

</mosaic_0001>

<llo_original>
// kernel: image_encoder_forward.6
$region0: #{image_encoder_forward.6}
  #allocation0 [shape = 'u32[]', space=smem, size = 0x4, offset = 0x4, fixed_abs, tag = 'smem constant byte address 0x4 - core index']
  #allocation1 [shape = 'u32[144,128]{1,0:T(1,128)}', space=vmem, size = 0x12000, scoped, tag = 'internal scratch']
  %s0 = inlined_call_operand.vmem [shape: bf16[2,16,192], index: 0, kind: input, shape index: {}]
  %s1 = inlined_call_operand.vmem [shape: bf16[192,128], index: 1, kind: input, shape index: {}]
  %s2 = inlined_call_operand.vmem [shape: f32[1,128], index: 2, kind: input, shape index: {}]
  %s3 = inlined_call_operand.vmem [shape: f32[1,1,128], index: 3, kind: input, shape index: {}]
  %s4 = inlined_call_operand.vmem [shape: f32[1,17,128], index: 4, kind: input, shape index: {}]
  %s5 = inlined_call_operand.vmem [shape: bf16[2,24,128], index: 5, kind: output, shape index: {}]
  %s6 = sld [smem:[#allocation0]]
  $region53: #{image_encoder_forward.6} parent=0
    _
  %s8 = ssub.s32 1, %s6
  %s9 = scalar_select 0, %s8, %s6
  loop: start=0, step=1, limit=4
  $region2: #{image_encoder_forward.6} parent=0 // loop_pre_header
    _
  $region3: #{image_encoder_forward.6} parent=0 // loop_header
    %s11 = sphi 0, %s15
    %p12 = scmp.ge.s32.totalorder %s11, 4
    %s21 = sphi 0, %s23
    %s24 = sphi 0, %s21
    %s25 = sphi 0, %s24
    %s41 = sphi 0, %s25
    %s45 = sphi 0, %s45
    %s47 = sphi 0, %s45
    %s48 = sphi 0, %s47
    %s62 = sphi 0, %s48
    %s66 = sphi 0, %s66
    %s68 = sphi 0, %s66
    %s69 = sphi 0, %s68
    %s83 = sphi 0, %s69
    %s87 = sphi 0, %s87
    %s89 = sphi 0, %s87
    %s90 = sphi 0, %s89
    %s104 = sphi 0, %s90
    %s108 = sphi 0, %s108
    %s110 = sphi 0, %s108
    %s111 = sphi 0, %s110
    %s125 = sphi 0, %s111
    %s131 = sphi 0, %s133
    %s134 = sphi 0, %s131
    %s135 = sphi 0, %s134
    %s151 = sphi 0, %s135
  $region4: #{image_encoder_forward.6} parent=0 // loop_header_branch
    %14 = sbr.rel (%p12) target = $region8
  $region5: #{image_encoder_forward.6} parent=0 // loop_body
    %s16 = ssub.s32 %s11, 1
    %s17 = ssub.s32 %s11, 2
    %s18 = sadd.s32 %s11, 1
    %s19 = ssub.s32 %s11, %s18
    %p20 = scmp.eq.s32.totalorder %s19, 0
    %s22 = sadd.s32 %s21, 1
    %s23 = scalar_select %p20, %s21, %s22
    %p26 = pneg %p20
    %p27 = scmp.eq.s32.totalorder %s11, 1
    %p28 = por %p26, %p27
    %p29 = scmp.ne.s32.totalorder %s21, %s24
    %p30 = scmp.eq.s32.totalorder %s11, 0
    %p31 = por %p29, %p30
    %p32 = scmp.ne.s32.totalorder %s21, %s24
    %p33 = scmp.eq.s32.totalorder %s16, 1
    %p34 = por %p32, %p33
    %p35 = scmp.ne.s32.totalorder %s24, %s25
    %p36 = scmp.eq.s32.totalorder %s16, 0
    %p37 = por %p35, %p36
    %p38 = scmp.ne.s32.totalorder %s24, %s25
    %p39 = scmp.eq.s32.totalorder %s17, 1
    %p40 = por %p38, %p39
    %p42 = scmp.ne.s32.totalorder %s25, %s41
    %p43 = scmp.eq.s32.totalorder %s17, 0
    %p44 = por %p42, %p43
    %s46 = sadd.s32 %s45, 1
    %p49 = scmp.eq.s32.totalorder %s11, 1
    %p50 = scmp.ne.s32.totalorder %s45, %s47
    %p51 = scmp.eq.s32.totalorder %s11, 0
    %p52 = por %p50, %p51
    %p53 = scmp.ne.s32.totalorder %s45, %s47
    %p54 = scmp.eq.s32.totalorder %s16, 1
    %p55 = por %p53, %p54
    %p56 = scmp.ne.s32.totalorder %s47, %s48
    %p57 = scmp.eq.s32.totalorder %s16, 0
    %p58 = por %p56, %p57
    %p59 = scmp.ne.s32.totalorder %s47, %s48
    %p60 = scmp.eq.s32.totalorder %s17, 1
    %p61 = por %p59, %p60
    %p63 = scmp.ne.s32.totalorder %s48, %s62
    %p64 = scmp.eq.s32.totalorder %s17, 0
    %p65 = por %p63, %p64
    %s67 = sadd.s32 %s66, 1
    %p70 = scmp.eq.s32.totalorder %s11, 1
    %p71 = scmp.ne.s32.totalorder %s66, %s68
    %p72 = scmp.eq.s32.totalorder %s11, 0
    %p73 = por %p71, %p72
    %p74 = scmp.ne.s32.totalorder %s66, %s68
    %p75 = scmp.eq.s32.totalorder %s16, 1
    %p76 = por %p74, %p75
    %p77 = scmp.ne.s32.totalorder %s68, %s69
    %p78 = scmp.eq.s32.totalorder %s16, 0
    %p79 = por %p77, %p78
    %p80 = scmp.ne.s32.totalorder %s68, %s69
    %p81 = scmp.eq.s32.totalorder %s17, 1
    %p82 = por %p80, %p81
    %p84 = scmp.ne.s32.totalorder %s69, %s83
    %p85 = scmp.eq.s32.totalorder %s17, 0
    %p86 = por %p84, %p85
    %s88 = sadd.s32 %s87, 1
    %p91 = scmp.eq.s32.totalorder %s11, 1
    %p92 = scmp.ne.s32.totalorder %s87, %s89
    %p93 = scmp.eq.s32.totalorder %s11, 0
    %p94 = por %p92, %p93
    %p95 = scmp.ne.s32.totalorder %s87, %s89
    %p96 = scmp.eq.s32.totalorder %s16, 1
    %p97 = por %p95, %p96
    %p98 = scmp.ne.s32.totalorder %s89, %s90
    %p99 = scmp.eq.s32.totalorder %s16, 0
    %p100 = por %p98, %p99
    %p101 = scmp.ne.s32.totalorder %s89, %s90
    %p102 = scmp.eq.s32.totalorder %s17, 1
    %p103 = por %p101, %p102
    %p105 = scmp.ne.s32.totalorder %s90, %s104
    %p106 = scmp.eq.s32.totalorder %s17, 0
    %p107 = por %p105, %p106
    %s109 = sadd.s32 %s108, 1
    %p112 = scmp.eq.s32.totalorder %s11, 1
    %p113 = scmp.ne.s32.totalorder %s108, %s110
    %p114 = scmp.eq.s32.totalorder %s11, 0
    %p115 = por %p113, %p114
    %p116 = scmp.ne.s32.totalorder %s108, %s110
    %p117 = scmp.eq.s32.totalorder %s16, 1
    %p118 = por %p116, %p117
    %p119 = scmp.ne.s32.totalorder %s110, %s111
    %p120 = scmp.eq.s32.totalorder %s16, 0
    %p121 = por %p119, %p120
    %p122 = scmp.ne.s32.totalorder %s110, %s111
    %p123 = scmp.eq.s32.totalorder %s17, 1
    %p124 = por %p122, %p123
    %p126 = scmp.ne.s32.totalorder %s111, %s125
    %p127 = scmp.eq.s32.totalorder %s17, 0
    %p128 = por %p126, %p127
    %s129 = ssub.s32 %s11, %s18
    %p130 = scmp.eq.s32.totalorder %s129, 0
    %s132 = sadd.s32 %s131, 1
    %s133 = scalar_select %p130, %s131, %s132
    %p136 = pneg %p130
    %p137 = scmp.eq.s32.totalorder %s11, 1
    %p138 = por %p136, %p137
    %p139 = scmp.ne.s32.totalorder %s131, %s134
    %p140 = scmp.eq.s32.totalorder %s11, 0
    %p141 = por %p139, %p140
    %p142 = scmp.ne.s32.totalorder %s131, %s134
    %p143 = scmp.eq.s32.totalorder %s16, 1
    %p144 = por %p142, %p143
    %p145 = scmp.ne.s32.totalorder %s134, %s135
    %p146 = scmp.eq.s32.totalorder %s16, 0
    %p147 = por %p145, %p146
    %p148 = scmp.ne.s32.totalorder %s134, %s135
    %p149 = scmp.eq.s32.totalorder %s17, 1
    %p150 = por %p148, %p149
    %p152 = scmp.ne.s32.totalorder %s135, %s151
    %p153 = scmp.eq.s32.totalorder %s17, 0
    %p154 = por %p152, %p153
    %p155 = scmp.le.s32.totalorder 1, %s11
    %p156 = scmp.lt.s32.totalorder %s11, 3
    %p157 = pnand %p155, %p156
    %p158 = pneg %p157
    // Predicated region
    $region9: #{image_encoder_forward.6} parent=5 // pred_check
      _
    $region10: #{image_encoder_forward.6} parent=5 // pred_check_branch
      %160 = sbr.rel (%p157) target = $region12
    $region11: #{image_encoder_forward.6} parent=5 // pred_region
      %s161 = ssub.s32 %s11, 1
      // Predicated region
      $region13: #{image_encoder_forward.6} parent=11 // pred_check
        %p162 = pneg %p58
      $region14: #{image_encoder_forward.6} parent=11 // pred_check_branch
        %164 = sbr.rel (%p162) target = $region16
      $region15: #{image_encoder_forward.6} parent=11 // pred_region
        _
      $region16: #{image_encoder_forward.6} parent=11 // pred_fallthru
        _
      // Predicated region
      $region17: #{image_encoder_forward.6} parent=11 // pred_check
        %p165 = pneg %p79
      $region18: #{image_encoder_forward.6} parent=11 // pred_check_branch
        %167 = sbr.rel (%p165) target = $region20
      $region19: #{image_encoder_forward.6} parent=11 // pred_region
        _
      $region20: #{image_encoder_forward.6} parent=11 // pred_fallthru
        _
      // Predicated region
      $region21: #{image_encoder_forward.6} parent=11 // pred_check
        %p168 = pneg %p100
      $region22: #{image_encoder_forward.6} parent=11 // pred_check_branch
        %170 = sbr.rel (%p168) target = $region24
      $region23: #{image_encoder_forward.6} parent=11 // pred_region
        _
      $region24: #{image_encoder_forward.6} parent=11 // pred_fallthru
        _
      // Predicated region
      $region25: #{image_encoder_forward.6} parent=11 // pred_check
        %p171 = pneg %p121
      $region26: #{image_encoder_forward.6} parent=11 // pred_check_branch
        %173 = sbr.rel (%p171) target = $region28
      $region27: #{image_encoder_forward.6} parent=11 // pred_region
        _
      $region28: #{image_encoder_forward.6} parent=11 // pred_fallthru
        _
    $region12: #{image_encoder_forward.6} parent=5 // pred_fallthru
      _
    %p174 = scmp.lt.s32.totalorder %s11, 2
    // Predicated region
    $region29: #{image_encoder_forward.6} parent=5 // pred_check
      %p175 = pneg %p174
    $region30: #{image_encoder_forward.6} parent=5 // pred_check_branch
      %177 = sbr.rel (%p175) target = $region32
    $region31: #{image_encoder_forward.6} parent=5 // pred_region
      // Predicated region
      $region33: #{image_encoder_forward.6} parent=31 // pred_check
        %p178 = pneg %p31
      $region34: #{image_encoder_forward.6} parent=31 // pred_check_branch
        %180 = sbr.rel (%p178) target = $region36
      $region35: #{image_encoder_forward.6} parent=31 // pred_region
        %p181 = scmp.lt.s32.totalorder %s11, 1
        %s182 = scalar_select %p181, %s11, 1
        %s183 = smul.addr %s182, 4
        %s184 = smul.addr %s183, 4
        %s185 = scalar_lea.vmem %s0, %s184
      $region36: #{image_encoder_forward.6} parent=31 // pred_fallthru
        _
    $region32: #{image_encoder_forward.6} parent=5 // pred_fallthru
      _
    %p186 = scmp.le.s32.totalorder 1, %s11
    %p187 = scmp.lt.s32.totalorder %s11, 3
    %p188 = pnand %p186, %p187
    %p189 = pneg %p188
    // Predicated region
    $region37: #{image_encoder_forward.6} parent=5 // pred_check
      _
    $region38: #{image_encoder_forward.6} parent=5 // pred_check_branch
      %191 = sbr.rel (%p188) target = $region40
    $region39: #{image_encoder_forward.6} parent=5 // pred_region
      %s192 = ssub.s32 %s11, 1
      %p193 = scmp.lt.s32.totalorder %s16, 1
      %s194 = scalar_select %p193, %s16, 1
      %s195 = smul.addr %s194, 4
      %s196 = smul.addr %s195, 4
      %s197 = scalar_lea.vmem %s0, %s196
      %p198 = pneg %p37
      %p199 = pneg %p34
      %p200 = pneg %p58
      %p201 = pneg %p55
      %p202 = pneg %p79
      %p203 = pneg %p76
      %p204 = pneg %p100
      %p205 = pneg %p97
      %p206 = pneg %p121
      %p207 = pneg %p118
      %p208 = pneg %p147
      %p209 = pneg %p144
      %p210 = scmp.lt.s32.totalorder %s16, 1
      %s211 = scalar_select %p210, %s16, 1
      %s212 = smul.addr %s211, 3
      %s213 = smul.addr %s212, 4
      %s214 = scalar_lea.vmem %s5, %s213
      %p215 = scmp.lt.s32.totalorder %s16, 1
      %s216 = scalar_select %p215, %s16, 1
      %s217 = smul.addr %s216, 4
      %s218 = smul.addr %s217, 4
      %s219 = scalar_lea.vmem %s0, %s218
      %p220 = scmp.lt.s32.totalorder %s16, 1
      %s221 = scalar_select %p220, %s16, 1
      %s222 = smul.addr %s221, 3
      %s223 = smul.addr %s222, 4
      %s224 = scalar_lea.vmem %s5, %s223
      %v226 = vld [vmem:[%s219] sm:$0xff]
      %v227 = vld [vmem:[%s219 + $0x8] sm:$0xff]
      %v228 = vld [vmem:[%s1] sm:$0xf]
      %v229 = vld [vmem:[%s1 + $0x4] sm:$0xf]
      %v230 = vld [vmem:[%s1 + $0x8] sm:$0xf]
      %v231 = vld [vmem:[%s1 + $0xc] sm:$0xf]
      %v232 = vld [vmem:[%s1 + $0x10] sm:$0xf]
      %v233 = vld [vmem:[%s1 + $0x14] sm:$0xf]
      %v234 = vld [vmem:[%s1 + $0x18] sm:$0xf]
      %v235 = vld [vmem:[%s1 + $0x1c] sm:$0xf]
      %v236 = vld [vmem:[%s1 + $0x20] sm:$0xf]
      %v237 = vld [vmem:[%s1 + $0x24] sm:$0xf]
      %v238 = vld [vmem:[%s1 + $0x28] sm:$0xf]
      %v239 = vld [vmem:[%s1 + $0x2c] sm:$0xf]
      %v240 = vld [vmem:[%s1 + $0x30] sm:$0xf]
      %v241 = vld [vmem:[%s1 + $0x34] sm:$0xf]
      %v242 = vld [vmem:[%s1 + $0x38] sm:$0xf]
      %v243 = vld [vmem:[%s1 + $0x3c] sm:$0xf]
      %v244 = vld [vmem:[%s1 + $0x40] sm:$0xf]
      %v245 = vld [vmem:[%s1 + $0x44] sm:$0xf]
      %v246 = vld [vmem:[%s1 + $0x48] sm:$0xf]
      %v247 = vld [vmem:[%s1 + $0x4c] sm:$0xf]
      %v248 = vld [vmem:[%s1 + $0x50] sm:$0xf]
      %v249 = vld [vmem:[%s1 + $0x54] sm:$0xf]
      %v250 = vld [vmem:[%s1 + $0x58] sm:$0xf]
      %v251 = vld [vmem:[%s1 + $0x5c] sm:$0xf]
      %v252 = vld [vmem:[%s2] sm:$0x1]
      %v254 = vlaneseq
      %v255 = vshrl.u32 %v254, 7
      %v256 = vsub.s32 0, %v255
      %v257 = vrot.slane %v252, %v256
      %v261 = vunpack.c.l.b16 %v226
      %v262 = vunpack.c.h.b16 %v226
      %v263 = vunpack.c.l.b16 %v227
      %v264 = vunpack.c.h.b16 %v227
      %v265 = vpack.c.b16 %v263, %v261
      %v266 = vpack.c.b16 %v264, %v262
      %v292 = vunpack.c.l.b16 %v228
      %v293 = vunpack.c.l.b16 %v229
      %v294 = vunpack.c.l.b16 %v230
      %v295 = vunpack.c.l.b16 %v231
      %v296 = vunpack.c.l.b16 %v232
      %v297 = vunpack.c.l.b16 %v233
      %v298 = vunpack.c.l.b16 %v234
      %v299 = vunpack.c.l.b16 %v235
      %v300 = vunpack.c.l.b16 %v236
      %v301 = vunpack.c.l.b16 %v237
      %v302 = vunpack.c.l.b16 %v238
      %v303 = vunpack.c.l.b16 %v239
      %v304 = vunpack.c.l.b16 %v240
      %v305 = vunpack.c.l.b16 %v241
      %v306 = vunpack.c.l.b16 %v242
      %v307 = vunpack.c.l.b16 %v243
      %v308 = vunpack.c.l.b16 %v244
      %v309 = vunpack.c.l.b16 %v245
      %v310 = vunpack.c.l.b16 %v246
      %v311 = vunpack.c.l.b16 %v247
      %v312 = vunpack.c.l.b16 %v248
      %v313 = vunpack.c.l.b16 %v249
      %v314 = vunpack.c.l.b16 %v250
      %v315 = vunpack.c.l.b16 %v251
      %v316 = vpack.c.b16 %v293, %v292
      %v317 = vpack.c.b16 %v295, %v294
      %v318 = vpack.c.b16 %v297, %v296
      %v319 = vpack.c.b16 %v299, %v298
      %v320 = vpack.c.b16 %v301, %v300
      %v321 = vpack.c.b16 %v303, %v302
      %v322 = vpack.c.b16 %v305, %v304
      %v323 = vpack.c.b16 %v307, %v306
      %v324 = vpack.c.b16 %v309, %v308
      %v325 = vpack.c.b16 %v311, %v310
      %v326 = vpack.c.b16 %v313, %v312
      %v327 = vpack.c.b16 %v315, %v314
      %vm340 = vcmask 523264
      %v342 = vsel %vm340, %v266, 0
      %344 = vmatprep.subr.bf16.mxu0 0
      %345 = vmatpush1.bf16.msra.mxu0 %v316
      %346 = vmatprep.subr.bf16.mxu0 0
      %347 = vmatpush1.bf16.msra.mxu0 %v317
      %348 = vmatprep.subr.bf16.mxu0 0
      %349 = vmatpush1.bf16.msra.mxu0 %v318
      %350 = vmatprep.subr.bf16.mxu0 0
      %351 = vmatpush1.bf16.msra.mxu0 %v319
      %352 = vmatprep.subr.bf16.mxu0 0
      %353 = vmatpush1.bf16.msra.mxu0 %v320
      %354 = vmatprep.subr.bf16.mxu0 0
      %355 = vmatpush1.bf16.msra.mxu0 %v321
      %356 = vmatprep.subr.bf16.mxu0 0
      %357 = vmatpush1.bf16.msra.mxu0 %v322
      %358 = vmatprep.subr.bf16.mxu0 0
      %359 = vmatpush1.bf16.msra.mxu0 %v323
      %360 = vmatprep.subr.bf16.mxu0 0
      %361 = vmatpush1.bf16.msra.mxu0 %v324
      %362 = vmatprep.subr.bf16.mxu0 0
      %363 = vmatpush1.bf16.msra.mxu0 %v325
      %364 = vmatprep.subr.bf16.mxu0 0
      %365 = vmatpush1.bf16.msra.mxu0 %v326
      %366 = vmatprep.subr.bf16.mxu0 0
      %367 = vmatpush1.bf16.msra.mxu0 %v327
      %368 = vmatprep.subr.bf16.mxu0 0
      %369 = vmatpush1.bf16.msra.mxu0 0
      %370 = vmatprep.subr.bf16.mxu0 0
      %371 = vmatpush1.bf16.msra.mxu0 0
      %372 = vmatprep.subr.bf16.mxu0 0
      %373 = vmatpush1.bf16.msra.mxu0 0
      %374 = vmatprep.subr.bf16.mxu0 0
      %375 = vmatpush1.bf16.msra.mxu0 0
      %376 = vmatprep.mubr.bf16.mxu0 %v342
      %377 = vmatmul.mubr.bf16.gmra.mrb[0].mxu0 %v265
      %v378 = vpop.f32.mrb[0].mxu0
      %v379 = vadd.f32 %v257, %v378
      %v380 = vpop.f32.mrb[0].mxu0
      %v381 = vpop.f32.mrb[0].mxu0
      %v382 = vadd.f32 %v257, %v381
      %v383 = vpop.f32.mrb[0].mxu0
      %384 = vdwg.mxu0
      %v385 = vld [vmem:[%s3] sm:$0x1]
      %v386 = vld [vmem:[%s4] sm:$0x1]
      %v387 = vadd.f32 %v385, %v386
      %v388 = vpack.c.bf16 %v387, %v387
      %vm389 = vcmask 1040384
      %vm390 = vsmask.f32 256
      %vm391 = vmand %vm389, %vm390
      %v392 = vld [vmem:[%s224] sm:$0x1]
      %v393 = vsel %vm391, %v388, %v392
      %394 = vst [vmem:[%s224] sm:$0x1] %v393
      %v395 = vld [vmem:[%s4 + $0x1] sm:$0xff]
      %v396 = vld [vmem:[%s4 + $0x9] sm:$0xff]
      %v397 = vadd.f32 %v379, %v395
      %v398 = vadd.f32 %v382, %v396
      %v399 = vpack.c.bf16 %v398, %v397
      %v401 = vunpack.c.l.b16 %v399
      %v402 = vunpack.c.h.b16 %v399
      %v403 = vpack.c.b16 %v401, %v401
      %v404 = vpack.c.b16 %v402, %v402
      %vm405 = vsmask.f32 4368
      %vm406 = vmor %vm390, %vm405
      %v408 = vshrl.u32 %v403, 16
      %v410 = vrot.slane %v408, 7
      %v411 = vshll.u32 %v403, 16
      %v413 = vor.u32 %v410, %v411
      %v414 = vrot.slane %v410, 4
      %v416 = vshrl.u32 %v404, 16
      %v418 = vrot.slane %v416, 7
      %v419 = vshll.u32 %v404, 16
      %v421 = vor.u32 %v418, %v419
      %v422 = vsel %vm406, %v414, %v421
      %v423 = vrot.slane %v418, 4
      %vm427 = vcmask 1043456
      %vm428 = vsmask.f32 7938
      %vm429 = vmand %vm427, %vm428
      %v430 = vld [vmem:[%s224] sm:$0xf]
      %v431 = vsel %vm429, %v413, %v430
      %432 = vst [vmem:[%s224] sm:$0xf] %v431
      %433 = vst [vmem:[%s224 + $0x4] sm:$0xf] %v422
      %v434 = vld [vmem:[%s224 + $0x8] sm:$0x1]
      %v435 = vsel %vm391, %v423, %v434
      %436 = vst [vmem:[%s224 + $0x8] sm:$0x1] %v435
      %v437 = vld [vmem:[%s224 + $0x8] sm:$0xf]
      %v438 = vsel %vm429, 0, %v437
      %439 = vst [vmem:[%s224 + $0x8] sm:$0xf] %v438
      %p440 = scmp.lt.s32.totalorder %s16, 1
      %s441 = scalar_select %p440, %s16, 1
      %s442 = smul.addr %s441, 3
      %s443 = smul.addr %s442, 4
      %s444 = scalar_lea.vmem %s5, %s443
      // Predicated region
      $region41: #{image_encoder_forward.6} parent=39 // pred_check
        %p445 = pneg %p144
      $region42: #{image_encoder_forward.6} parent=39 // pred_check_branch
        %447 = sbr.rel (%p445) target = $region44
      $region43: #{image_encoder_forward.6} parent=39 // pred_region
        _
      $region44: #{image_encoder_forward.6} parent=39 // pred_fallthru
        _
    $region40: #{image_encoder_forward.6} parent=5 // pred_fallthru
      _
    %p448 = scmp.le.s32.totalorder 2, %s11
    // Predicated region
    $region45: #{image_encoder_forward.6} parent=5 // pred_check
      %p449 = pneg %p448
    $region46: #{image_encoder_forward.6} parent=5 // pred_check_branch
      %451 = sbr.rel (%p449) target = $region48
    $region47: #{image_encoder_forward.6} parent=5 // pred_region
      %s452 = ssub.s32 %s11, 2
      // Predicated region
      $region49: #{image_encoder_forward.6} parent=47 // pred_check
        %p453 = pneg %p150
      $region50: #{image_encoder_forward.6} parent=47 // pred_check_branch
        %455 = sbr.rel (%p453) target = $region52
      $region51: #{image_encoder_forward.6} parent=47 // pred_region
        %p456 = scmp.lt.s32.totalorder %s17, 1
        %s457 = scalar_select %p456, %s17, 1
        %s458 = smul.addr %s457, 3
        %s459 = smul.addr %s458, 4
        %s460 = scalar_lea.vmem %s5, %s459
      $region52: #{image_encoder_forward.6} parent=47 // pred_fallthru
        _
    $region48: #{image_encoder_forward.6} parent=5 // pred_fallthru
      _
  $region6: #{image_encoder_forward.6} parent=0 // loop_footer
    %s15 = sadd.s32 1, %s11
  $region7: #{image_encoder_forward.6} parent=0 // loop_footer_branch
    %10 = sbr.rel target = $region3
  $region8: #{image_encoder_forward.6} parent=0 // loop_exit
    _

// kernel: image_encoder_forward.11
$region0: #{image_encoder_forward.11}
  #allocation0 [shape = 'u32[]', space=smem, size = 0x4, offset = 0x4, fixed_abs, tag = 'smem constant byte address 0x4 - core index']
  #allocation1 [shape = 'u32[144,128]{1,0:T(1,128)}', space=vmem, size = 0x12000, scoped, tag = 'internal scratch']
  %s0 = inlined_call_operand.vmem [shape: bf16[2,24,128], index: 0, kind: input, shape index: {}]
  %s1 = inlined_call_operand.vmem [shape: f32[1,128], index: 1, kind: input, shape index: {}]
  %s2 = inlined_call_operand.vmem [shape: f32[1,128], index: 2, kind: input, shape index: {}]
  %s3 = inlined_call_operand.vmem [shape: f32[2,17,128], index: 3, kind: output, shape index: {}]
  %s4 = sld [smem:[#allocation0]]
  $region45: #{image_encoder_forward.11} parent=0
    _
  %s6 = ssub.s32 1, %s4
  %s7 = scalar_select 0, %s6, %s4
  loop: start=0, step=1, limit=4
  $region2: #{image_encoder_forward.11} parent=0 // loop_pre_header
    _
  $region3: #{image_encoder_forward.11} parent=0 // loop_header
    %s9 = sphi 0, %s13
    %p10 = scmp.ge.s32.totalorder %s9, 4
    %s19 = sphi 0, %s21
    %s22 = sphi 0, %s19
    %s23 = sphi 0, %s22
    %s39 = sphi 0, %s23
    %s43 = sphi 0, %s43
    %s45 = sphi 0, %s43
    %s46 = sphi 0, %s45
    %s60 = sphi 0, %s46
    %s64 = sphi 0, %s64
    %s66 = sphi 0, %s64
    %s67 = sphi 0, %s66
    %s81 = sphi 0, %s67
    %s87 = sphi 0, %s89
    %s90 = sphi 0, %s87
    %s91 = sphi 0, %s90
    %s107 = sphi 0, %s91
  $region4: #{image_encoder_forward.11} parent=0 // loop_header_branch
    %12 = sbr.rel (%p10) target = $region8
  $region5: #{image_encoder_forward.11} parent=0 // loop_body
    %s14 = ssub.s32 %s9, 1
    %s15 = ssub.s32 %s9, 2
    %s16 = sadd.s32 %s9, 1
    %s17 = ssub.s32 %s9, %s16
    %p18 = scmp.eq.s32.totalorder %s17, 0
    %s20 = sadd.s32 %s19, 1
    %s21 = scalar_select %p18, %s19, %s20
    %p24 = pneg %p18
    %p25 = scmp.eq.s32.totalorder %s9, 1
    %p26 = por %p24, %p25
    %p27 = scmp.ne.s32.totalorder %s19, %s22
    %p28 = scmp.eq.s32.totalorder %s9, 0
    %p29 = por %p27, %p28
    %p30 = scmp.ne.s32.totalorder %s19, %s22
    %p31 = scmp.eq.s32.totalorder %s14, 1
    %p32 = por %p30, %p31
    %p33 = scmp.ne.s32.totalorder %s22, %s23
    %p34 = scmp.eq.s32.totalorder %s14, 0
    %p35 = por %p33, %p34
    %p36 = scmp.ne.s32.totalorder %s22, %s23
    %p37 = scmp.eq.s32.totalorder %s15, 1
    %p38 = por %p36, %p37
    %p40 = scmp.ne.s32.totalorder %s23, %s39
    %p41 = scmp.eq.s32.totalorder %s15, 0
    %p42 = por %p40, %p41
    %s44 = sadd.s32 %s43, 1
    %p47 = scmp.eq.s32.totalorder %s9, 1
    %p48 = scmp.ne.s32.totalorder %s43, %s45
    %p49 = scmp.eq.s32.totalorder %s9, 0
    %p50 = por %p48, %p49
    %p51 = scmp.ne.s32.totalorder %s43, %s45
    %p52 = scmp.eq.s32.totalorder %s14, 1
    %p53 = por %p51, %p52
    %p54 = scmp.ne.s32.totalorder %s45, %s46
    %p55 = scmp.eq.s32.totalorder %s14, 0
    %p56 = por %p54, %p55
    %p57 = scmp.ne.s32.totalorder %s45, %s46
    %p58 = scmp.eq.s32.totalorder %s15, 1
    %p59 = por %p57, %p58
    %p61 = scmp.ne.s32.totalorder %s46, %s60
    %p62 = scmp.eq.s32.totalorder %s15, 0
    %p63 = por %p61, %p62
    %s65 = sadd.s32 %s64, 1
    %p68 = scmp.eq.s32.totalorder %s9, 1
    %p69 = scmp.ne.s32.totalorder %s64, %s66
    %p70 = scmp.eq.s32.totalorder %s9, 0
    %p71 = por %p69, %p70
    %p72 = scmp.ne.s32.totalorder %s64, %s66
    %p73 = scmp.eq.s32.totalorder %s14, 1
    %p74 = por %p72, %p73
    %p75 = scmp.ne.s32.totalorder %s66, %s67
    %p76 = scmp.eq.s32.totalorder %s14, 0
    %p77 = por %p75, %p76
    %p78 = scmp.ne.s32.totalorder %s66, %s67
    %p79 = scmp.eq.s32.totalorder %s15, 1
    %p80 = por %p78, %p79
    %p82 = scmp.ne.s32.totalorder %s67, %s81
    %p83 = scmp.eq.s32.totalorder %s15, 0
    %p84 = por %p82, %p83
    %s85 = ssub.s32 %s9, %s16
    %p86 = scmp.eq.s32.totalorder %s85, 0
    %s88 = sadd.s32 %s87, 1
    %s89 = scalar_select %p86, %s87, %s88
    %p92 = pneg %p86
    %p93 = scmp.eq.s32.totalorder %s9, 1
    %p94 = por %p92, %p93
    %p95 = scmp.ne.s32.totalorder %s87, %s90
    %p96 = scmp.eq.s32.totalorder %s9, 0
    %p97 = por %p95, %p96
    %p98 = scmp.ne.s32.totalorder %s87, %s90
    %p99 = scmp.eq.s32.totalorder %s14, 1
    %p100 = por %p98, %p99
    %p101 = scmp.ne.s32.totalorder %s90, %s91
    %p102 = scmp.eq.s32.totalorder %s14, 0
    %p103 = por %p101, %p102
    %p104 = scmp.ne.s32.totalorder %s90, %s91
    %p105 = scmp.eq.s32.totalorder %s15, 1
    %p106 = por %p104, %p105
    %p108 = scmp.ne.s32.totalorder %s91, %s107
    %p109 = scmp.eq.s32.totalorder %s15, 0
    %p110 = por %p108, %p109
    %p111 = scmp.le.s32.totalorder 1, %s9
    %p112 = scmp.lt.s32.totalorder %s9, 3
    %p113 = pnand %p111, %p112
    %p114 = pneg %p113
    // Predicated region
    $region9: #{image_encoder_forward.11} parent=5 // pred_check
      _
    $region10: #{image_encoder_forward.11} parent=5 // pred_check_branch
      %116 = sbr.rel (%p113) target = $region12
    $region11: #{image_encoder_forward.11} parent=5 // pred_region
      %s117 = ssub.s32 %s9, 1
      // Predicated region
      $region13: #{image_encoder_forward.11} parent=11 // pred_check
        %p118 = pneg %p56
      $region14: #{image_encoder_forward.11} parent=11 // pred_check_branch
        %120 = sbr.rel (%p118) target = $region16
      $region15: #{image_encoder_forward.11} parent=11 // pred_region
        _
      $region16: #{image_encoder_forward.11} parent=11 // pred_fallthru
        _
      // Predicated region
      $region17: #{image_encoder_forward.11} parent=11 // pred_check
        %p121 = pneg %p77
      $region18: #{image_encoder_forward.11} parent=11 // pred_check_branch
        %123 = sbr.rel (%p121) target = $region20
      $region19: #{image_encoder_forward.11} parent=11 // pred_region
        _
      $region20: #{image_encoder_forward.11} parent=11 // pred_fallthru
        _
    $region12: #{image_encoder_forward.11} parent=5 // pred_fallthru
      _
    %p124 = scmp.lt.s32.totalorder %s9, 2
    // Predicated region
    $region21: #{image_encoder_forward.11} parent=5 // pred_check
      %p125 = pneg %p124
    $region22: #{image_encoder_forward.11} parent=5 // pred_check_branch
      %127 = sbr.rel (%p125) target = $region24
    $region23: #{image_encoder_forward.11} parent=5 // pred_region
      // Predicated region
      $region25: #{image_encoder_forward.11} parent=23 // pred_check
        %p128 = pneg %p29
      $region26: #{image_encoder_forward.11} parent=23 // pred_check_branch
        %130 = sbr.rel (%p128) target = $region28
      $region27: #{image_encoder_forward.11} parent=23 // pred_region
        %p131 = scmp.lt.s32.totalorder %s9, 1
        %s132 = scalar_select %p131, %s9, 1
        %s133 = smul.addr %s132, 3
        %s134 = smul.addr %s133, 4
        %s135 = scalar_lea.vmem %s0, %s134
      $region28: #{image_encoder_forward.11} parent=23 // pred_fallthru
        _
    $region24: #{image_encoder_forward.11} parent=5 // pred_fallthru
      _
    %p136 = scmp.le.s32.totalorder 1, %s9
    %p137 = scmp.lt.s32.totalorder %s9, 3
    %p138 = pnand %p136, %p137
    %p139 = pneg %p138
    // Predicated region
    $region29: #{image_encoder_forward.11} parent=5 // pred_check
      _
    $region30: #{image_encoder_forward.11} parent=5 // pred_check_branch
      %141 = sbr.rel (%p138) target = $region32
    $region31: #{image_encoder_forward.11} parent=5 // pred_region
      %s142 = ssub.s32 %s9, 1
      %p143 = scmp.lt.s32.totalorder %s14, 1
      %s144 = scalar_select %p143, %s14, 1
      %s145 = smul.addr %s144, 3
      %s146 = smul.addr %s145, 4
      %s147 = scalar_lea.vmem %s0, %s146
      %p148 = pneg %p35
      %p149 = pneg %p32
      %p150 = pneg %p56
      %p151 = pneg %p53
      %p152 = pneg %p77
      %p153 = pneg %p74
      %p154 = pneg %p103
      %p155 = pneg %p100
      %p156 = scmp.lt.s32.totalorder %s14, 1
      %s157 = scalar_select %p156, %s14, 1
      %s158 = smul.addr %s157, 3
      %s159 = smul.addr %s158, 8
      %s160 = scalar_lea.vmem %s3, %s159
      %p161 = scmp.lt.s32.totalorder %s14, 1
      %s162 = scalar_select %p161, %s14, 1
      %s163 = smul.addr %s162, 3
      %s164 = smul.addr %s163, 4
      %s165 = scalar_lea.vmem %s0, %s164
      %p166 = scmp.lt.s32.totalorder %s14, 1
      %s167 = scalar_select %p166, %s14, 1
      %s168 = smul.addr %s167, 3
      %s169 = smul.addr %s168, 8
      %s170 = scalar_lea.vmem %s3, %s169
      %v171 = vld [vmem:[%s165] sm:$0xf]
      %v172 = vld [vmem:[%s165 + $0x4] sm:$0xf]
      %v173 = vld [vmem:[%s165 + $0x8] sm:$0x1]
      %v174 = vunpack.c.l.bf16 %v171
      %v175 = vunpack.c.l.bf16 %v172
      %v176 = vunpack.c.l.bf16 %v173
      %v177 = vld [vmem:[%s1] sm:$0x1]
      %v178 = vld [vmem:[%s2] sm:$0x1]
      %179 = vadd.xlane.f32.xlu0 %v174
      %v180 = vpop.xlane.xlu0 %179
      %181 = vadd.xlane.f32.xlu0 %v175
      %v182 = vpop.xlane.xlu0 %181
      %vm183 = vcmask 1040384
      %v184 = vsel %vm183, %v176, 0.0
      %185 = vadd.xlane.f32.xlu0 %v184
      %v186 = vpop.xlane.xlu0 %185
      %v187 = vrcp.pop 128.0
      %v188 = vmul.f32 %v180, %v187
      %v189 = vmul.f32 %v182, %v187
      %v190 = vmul.f32 %v186, %v187
      %v191 = vsub.f32 %v174, %v188
      %v192 = vsub.f32 %v175, %v189
      %v193 = vsub.f32 %v176, %v190
      %v194 = vmul.f32 %v191, %v191
      %v195 = vmul.f32 %v192, %v192
      %v196 = vmul.f32 %v193, %v193
      %197 = vadd.xlane.f32.xlu0 %v194
      %v198 = vpop.xlane.xlu0 %197
      %199 = vadd.xlane.f32.xlu0 %v195
      %v200 = vpop.xlane.xlu0 %199
      %v201 = vsel %vm183, %v196, 0.0
      %202 = vadd.xlane.f32.xlu0 %v201
      %v203 = vpop.xlane.xlu0 %202
      %v204 = vmul.f32 %v198, %v187
      %v205 = vmul.f32 %v200, %v187
      %v206 = vmul.f32 %v203, %v187
      %v207 = vadd.f32 %v204, 1e-05
      %v208 = vadd.f32 %v205, 1e-05
      %v209 = vadd.f32 %v206, 1e-05
      %v210 = vrsqrt.pop %v207
      %v211 = vrsqrt.pop %v208
      %v212 = vrsqrt.pop %v209
      %v213 = vmul.f32 %v191, %v210
      %v214 = vmul.f32 %v192, %v211
      %v215 = vmul.f32 %v193, %v212
      %v217 = vlaneseq
      %v218 = vshrl.u32 %v217, 7
      %v219 = vsub.s32 0, %v218
      %v220 = vrot.slane %v177, %v219
      %v222 = vmul.f32 %v213, %v220
      %v223 = vmul.f32 %v214, %v220
      %v224 = vmul.f32 %v215, %v220
      %v226 = vlaneseq
      %v227 = vshrl.u32 %v226, 7
      %v228 = vsub.s32 0, %v227
      %v229 = vrot.slane %v178, %v228
      %v231 = vadd.f32 %v222, %v229
      %v232 = vadd.f32 %v223, %v229
      %v233 = vadd.f32 %v224, %v229
      %234 = vst [vmem:[%s170] sm:$0xff] %v231
      %235 = vst [vmem:[%s170 + $0x8] sm:$0xff] %v232
      %236 = vst [vmem:[%s170 + $0x10] sm:$0x1] %v233
      %p237 = scmp.lt.s32.totalorder %s14, 1
      %s238 = scalar_select %p237, %s14, 1
      %s239 = smul.addr %s238, 3
      %s240 = smul.addr %s239, 8
      %s241 = scalar_lea.vmem %s3, %s240
      // Predicated region
      $region33: #{image_encoder_forward.11} parent=31 // pred_check
        %p242 = pneg %p100
      $region34: #{image_encoder_forward.11} parent=31 // pred_check_branch
        %244 = sbr.rel (%p242) target = $region36
      $region35: #{image_encoder_forward.11} parent=31 // pred_region
        _
      $region36: #{image_encoder_forward.11} parent=31 // pred_fallthru
        _
    $region32: #{image_encoder_forward.11} parent=5 // pred_fallthru
      _
    %p245 = scmp.le.s32.totalorder 2, %s9
    // Predicated region
    $region37: #{image_encoder_forward.11} parent=5 // pred_check
      %p246 = pneg %p245
    $region38: #{image_encoder_forward.11} parent=5 // pred_check_branch
      %248 = sbr.rel (%p246) target = $region40
    $region39: #{image_encoder_forward.11} parent=5 // pred_region
      %s249 = ssub.s32 %s9, 2
      // Predicated region
      $region41: #{image_encoder_forward.11} parent=39 // pred_check
        %p250 = pneg %p106
      $region42: #{image_encoder_forward.11} parent=39 // pred_check_branch
        %252 = sbr.rel (%p250) target = $region44
      $region43: #{image_encoder_forward.11} parent=39 // pred_region
        %p253 = scmp.lt.s32.totalorder %s15, 1
        %s254 = scalar_select %p253, %s15, 1
        %s255 = smul.addr %s254, 3
        %s256 = smul.addr %s255, 8
        %s257 = scalar_lea.vmem %s3, %s256
      $region44: #{image_encoder_forward.11} parent=39 // pred_fallthru
        _
    $region40: #{image_encoder_forward.11} parent=5 // pred_fallthru
      _
  $region6: #{image_encoder_forward.11} parent=0 // loop_footer
    %s13 = sadd.s32 1, %s9
  $region7: #{image_encoder_forward.11} parent=0 // loop_footer_branch
    %8 = sbr.rel target = $region3
  $region8: #{image_encoder_forward.11} parent=0 // loop_exit
    _

// kernel: image_encoder_forward.8
$region0: #{image_encoder_forward.8}
  #allocation0 [shape = 'u32[]', space=smem, size = 0x4, offset = 0x4, fixed_abs, tag = 'smem constant byte address 0x4 - core index']
  #allocation1 [shape = 'u32[144,128]{1,0:T(1,128)}', space=vmem, size = 0x12000, scoped, tag = 'internal scratch']
  %s0 = inlined_call_operand.vmem [shape: bf16[2,24,128], index: 0, kind: input, shape index: {}]
  %s1 = inlined_call_operand.vmem [shape: f32[1,128], index: 1, kind: input, shape index: {}]
  %s2 = inlined_call_operand.vmem [shape: f32[1,128], index: 2, kind: input, shape index: {}]
  %s3 = inlined_call_operand.vmem [shape: bf16[128,512], index: 3, kind: input, shape index: {}]
  %s4 = inlined_call_operand.vmem [shape: f32[1,512], index: 4, kind: input, shape index: {}]
  %s5 = inlined_call_operand.vmem [shape: bf16[512,128], index: 5, kind: input, shape index: {}]
  %s6 = inlined_call_operand.vmem [shape: f32[1,128], index: 6, kind: input, shape index: {}]
  %s7 = inlined_call_operand.vmem [shape: bf16[2,24,128], index: 7, kind: output, shape index: {}]
  %s8 = sld [smem:[#allocation0]]
  $region61: #{image_encoder_forward.8} parent=0
    _
  %s10 = ssub.s32 1, %s8
  %s11 = scalar_select 0, %s10, %s8
  loop: start=0, step=1, limit=4
  $region2: #{image_encoder_forward.8} parent=0 // loop_pre_header
    _
  $region3: #{image_encoder_forward.8} parent=0 // loop_header
    %s13 = sphi 0, %s17
    %p14 = scmp.ge.s32.totalorder %s13, 4
    %s20 = sphi 0, %s32
    %s21 = sphi 0, %s28
    %s22 = sphi 0, %s20
    %s23 = sphi 0, %s21
    %s24 = sphi 0, %s22
    %s25 = sphi 0, %s23
    %s37 = sphi 0, %s39
    %s40 = sphi 0, %s37
    %s41 = sphi 0, %s40
    %s57 = sphi 0, %s41
    %s61 = sphi 0, %s61
    %s63 = sphi 0, %s61
    %s64 = sphi 0, %s63
    %s78 = sphi 0, %s64
    %s82 = sphi 0, %s82
    %s84 = sphi 0, %s82
    %s85 = sphi 0, %s84
    %s99 = sphi 0, %s85
    %s103 = sphi 0, %s103
    %s105 = sphi 0, %s103
    %s106 = sphi 0, %s105
    %s120 = sphi 0, %s106
    %s124 = sphi 0, %s124
    %s126 = sphi 0, %s124
    %s127 = sphi 0, %s126
    %s141 = sphi 0, %s127
    %s145 = sphi 0, %s145
    %s147 = sphi 0, %s145
    %s148 = sphi 0, %s147
    %s162 = sphi 0, %s148
    %s166 = sphi 0, %s166
    %s168 = sphi 0, %s166
    %s169 = sphi 0, %s168
    %s183 = sphi 0, %s169
    %s191 = sphi 0, %s193
    %s194 = sphi 0, %s191
    %s195 = sphi 0, %s194
    %s211 = sphi 0, %s195
  $region4: #{image_encoder_forward.8} parent=0 // loop_header_branch
    %16 = sbr.rel (%p14) target = $region8
  $region5: #{image_encoder_forward.8} parent=0 // loop_body
    %s18 = ssub.s32 %s13, 1
    %s19 = ssub.s32 %s13, 2
    %s26 = sadd.s32 1, %s21
    %p27 = scmp.ge.s32.totalorder %s26, 1
    %s28 = scalar_select %p27, 0, %s26
    %s29 = sadd.s32 1, %s20
    %s30 = scalar_select %p27, %s29, %s20
    %p31 = scmp.ge.s32.totalorder %s30, 2
    %s32 = scalar_select %p31, 0, %s30
    %s33 = ssub.s32 %s20, %s32
    %s34 = ssub.s32 %s21, %s28
    %s35 = sor.u32 %s33, %s34
    %p36 = scmp.eq.s32.totalorder %s35, 0
    %s38 = sadd.s32 %s37, 1
    %s39 = scalar_select %p36, %s37, %s38
    %p42 = pneg %p36
    %p43 = scmp.eq.s32.totalorder %s13, 1
    %p44 = por %p42, %p43
    %p45 = scmp.ne.s32.totalorder %s37, %s40
    %p46 = scmp.eq.s32.totalorder %s13, 0
    %p47 = por %p45, %p46
    %p48 = scmp.ne.s32.totalorder %s37, %s40
    %p49 = scmp.eq.s32.totalorder %s18, 1
    %p50 = por %p48, %p49
    %p51 = scmp.ne.s32.totalorder %s40, %s41
    %p52 = scmp.eq.s32.totalorder %s18, 0
    %p53 = por %p51, %p52
    %p54 = scmp.ne.s32.totalorder %s40, %s41
    %p55 = scmp.eq.s32.totalorder %s19, 1
    %p56 = por %p54, %p55
    %p58 = scmp.ne.s32.totalorder %s41, %s57
    %p59 = scmp.eq.s32.totalorder %s19, 0
    %p60 = por %p58, %p59
    %s62 = sadd.s32 %s61, 1
    %p65 = scmp.eq.s32.totalorder %s13, 1
    %p66 = scmp.ne.s32.totalorder %s61, %s63
    %p67 = scmp.eq.s32.totalorder %s13, 0
    %p68 = por %p66, %p67
    %p69 = scmp.ne.s32.totalorder %s61, %s63
    %p70 = scmp.eq.s32.totalorder %s18, 1
    %p71 = por %p69, %p70
    %p72 = scmp.ne.s32.totalorder %s63, %s64
    %p73 = scmp.eq.s32.totalorder %s18, 0
    %p74 = por %p72, %p73
    %p75 = scmp.ne.s32.totalorder %s63, %s64
    %p76 = scmp.eq.s32.totalorder %s19, 1
    %p77 = por %p75, %p76
    %p79 = scmp.ne.s32.totalorder %s64, %s78
    %p80 = scmp.eq.s32.totalorder %s19, 0
    %p81 = por %p79, %p80
    %s83 = sadd.s32 %s82, 1
    %p86 = scmp.eq.s32.totalorder %s13, 1
    %p87 = scmp.ne.s32.totalorder %s82, %s84
    %p88 = scmp.eq.s32.totalorder %s13, 0
    %p89 = por %p87, %p88
    %p90 = scmp.ne.s32.totalorder %s82, %s84
    %p91 = scmp.eq.s32.totalorder %s18, 1
    %p92 = por %p90, %p91
    %p93 = scmp.ne.s32.totalorder %s84, %s85
    %p94 = scmp.eq.s32.totalorder %s18, 0
    %p95 = por %p93, %p94
    %p96 = scmp.ne.s32.totalorder %s84, %s85
    %p97 = scmp.eq.s32.totalorder %s19, 1
    %p98 = por %p96, %p97
    %p100 = scmp.ne.s32.totalorder %s85, %s99
    %p101 = scmp.eq.s32.totalorder %s19, 0
    %p102 = por %p100, %p101
    %s104 = sadd.s32 %s103, 1
    %p107 = scmp.eq.s32.totalorder %s13, 1
    %p108 = scmp.ne.s32.totalorder %s103, %s105
    %p109 = scmp.eq.s32.totalorder %s13, 0
    %p110 = por %p108, %p109
    %p111 = scmp.ne.s32.totalorder %s103, %s105
    %p112 = scmp.eq.s32.totalorder %s18, 1
    %p113 = por %p111, %p112
    %p114 = scmp.ne.s32.totalorder %s105, %s106
    %p115 = scmp.eq.s32.totalorder %s18, 0
    %p116 = por %p114, %p115
    %p117 = scmp.ne.s32.totalorder %s105, %s106
    %p118 = scmp.eq.s32.totalorder %s19, 1
    %p119 = por %p117, %p118
    %p121 = scmp.ne.s32.totalorder %s106, %s120
    %p122 = scmp.eq.s32.totalorder %s19, 0
    %p123 = por %p121, %p122
    %s125 = sadd.s32 %s124, 1
    %p128 = scmp.eq.s32.totalorder %s13, 1
    %p129 = scmp.ne.s32.totalorder %s124, %s126
    %p130 = scmp.eq.s32.totalorder %s13, 0
    %p131 = por %p129, %p130
    %p132 = scmp.ne.s32.totalorder %s124, %s126
    %p133 = scmp.eq.s32.totalorder %s18, 1
    %p134 = por %p132, %p133
    %p135 = scmp.ne.s32.totalorder %s126, %s127
    %p136 = scmp.eq.s32.totalorder %s18, 0
    %p137 = por %p135, %p136
    %p138 = scmp.ne.s32.totalorder %s126, %s127
    %p139 = scmp.eq.s32.totalorder %s19, 1
    %p140 = por %p138, %p139
    %p142 = scmp.ne.s32.totalorder %s127, %s141
    %p143 = scmp.eq.s32.totalorder %s19, 0
    %p144 = por %p142, %p143
    %s146 = sadd.s32 %s145, 1
    %p149 = scmp.eq.s32.totalorder %s13, 1
    %p150 = scmp.ne.s32.totalorder %s145, %s147
    %p151 = scmp.eq.s32.totalorder %s13, 0
    %p152 = por %p150, %p151
    %p153 = scmp.ne.s32.totalorder %s145, %s147
    %p154 = scmp.eq.s32.totalorder %s18, 1
    %p155 = por %p153, %p154
    %p156 = scmp.ne.s32.totalorder %s147, %s148
    %p157 = scmp.eq.s32.totalorder %s18, 0
    %p158 = por %p156, %p157
    %p159 = scmp.ne.s32.totalorder %s147, %s148
    %p160 = scmp.eq.s32.totalorder %s19, 1
    %p161 = por %p159, %p160
    %p163 = scmp.ne.s32.totalorder %s148, %s162
    %p164 = scmp.eq.s32.totalorder %s19, 0
    %p165 = por %p163, %p164
    %s167 = sadd.s32 %s166, 1
    %p170 = scmp.eq.s32.totalorder %s13, 1
    %p171 = scmp.ne.s32.totalorder %s166, %s168
    %p172 = scmp.eq.s32.totalorder %s13, 0
    %p173 = por %p171, %p172
    %p174 = scmp.ne.s32.totalorder %s166, %s168
    %p175 = scmp.eq.s32.totalorder %s18, 1
    %p176 = por %p174, %p175
    %p177 = scmp.ne.s32.totalorder %s168, %s169
    %p178 = scmp.eq.s32.totalorder %s18, 0
    %p179 = por %p177, %p178
    %p180 = scmp.ne.s32.totalorder %s168, %s169
    %p181 = scmp.eq.s32.totalorder %s19, 1
    %p182 = por %p180, %p181
    %p184 = scmp.ne.s32.totalorder %s169, %s183
    %p185 = scmp.eq.s32.totalorder %s19, 0
    %p186 = por %p184, %p185
    %s187 = ssub.s32 %s20, %s32
    %s188 = ssub.s32 %s21, %s28
    %s189 = sor.u32 %s187, %s188
    %p190 = scmp.eq.s32.totalorder %s189, 0
    %s192 = sadd.s32 %s191, 1
    %s193 = scalar_select %p190, %s191, %s192
    %p196 = pneg %p190
    %p197 = scmp.eq.s32.totalorder %s13, 1
    %p198 = por %p196, %p197
    %p199 = scmp.ne.s32.totalorder %s191, %s194
    %p200 = scmp.eq.s32.totalorder %s13, 0
    %p201 = por %p199, %p200
    %p202 = scmp.ne.s32.totalorder %s191, %s194
    %p203 = scmp.eq.s32.totalorder %s18, 1
    %p204 = por %p202, %p203
    %p205 = scmp.ne.s32.totalorder %s194, %s195
    %p206 = scmp.eq.s32.totalorder %s18, 0
    %p207 = por %p205, %p206
    %p208 = scmp.ne.s32.totalorder %s194, %s195
    %p209 = scmp.eq.s32.totalorder %s19, 1
    %p210 = por %p208, %p209
    %p212 = scmp.ne.s32.totalorder %s195, %s211
    %p213 = scmp.eq.s32.totalorder %s19, 0
    %p214 = por %p212, %p213
    %p215 = scmp.le.s32.totalorder 1, %s13
    %p216 = scmp.lt.s32.totalorder %s13, 3
    %p217 = pnand %p215, %p216
    %p218 = pneg %p217
    // Predicated region
    $region9: #{image_encoder_forward.8} parent=5 // pred_check
      _
    $region10: #{image_encoder_forward.8} parent=5 // pred_check_branch
      %220 = sbr.rel (%p217) target = $region12
    $region11: #{image_encoder_forward.8} parent=5 // pred_region
      %s221 = ssub.s32 %s13, 1
      // Predicated region
      $region13: #{image_encoder_forward.8} parent=11 // pred_check
        %p222 = pneg %p74
      $region14: #{image_encoder_forward.8} parent=11 // pred_check_branch
        %224 = sbr.rel (%p222) target = $region16
      $region15: #{image_encoder_forward.8} parent=11 // pred_region
        _
      $region16: #{image_encoder_forward.8} parent=11 // pred_fallthru
        _
      // Predicated region
      $region17: #{image_encoder_forward.8} parent=11 // pred_check
        %p225 = pneg %p95
      $region18: #{image_encoder_forward.8} parent=11 // pred_check_branch
        %227 = sbr.rel (%p225) target = $region20
      $region19: #{image_encoder_forward.8} parent=11 // pred_region
        _
      $region20: #{image_encoder_forward.8} parent=11 // pred_fallthru
        _
      // Predicated region
      $region21: #{image_encoder_forward.8} parent=11 // pred_check
        %p228 = pneg %p116
      $region22: #{image_encoder_forward.8} parent=11 // pred_check_branch
        %230 = sbr.rel (%p228) target = $region24
      $region23: #{image_encoder_forward.8} parent=11 // pred_region
        _
      $region24: #{image_encoder_forward.8} parent=11 // pred_fallthru
        _
      // Predicated region
      $region25: #{image_encoder_forward.8} parent=11 // pred_check
        %p231 = pneg %p137
      $region26: #{image_encoder_forward.8} parent=11 // pred_check_branch
        %233 = sbr.rel (%p231) target = $region28
      $region27: #{image_encoder_forward.8} parent=11 // pred_region
        _
      $region28: #{image_encoder_forward.8} parent=11 // pred_fallthru
        _
      // Predicated region
      $region29: #{image_encoder_forward.8} parent=11 // pred_check
        %p234 = pneg %p158
      $region30: #{image_encoder_forward.8} parent=11 // pred_check_branch
        %236 = sbr.rel (%p234) target = $region32
      $region31: #{image_encoder_forward.8} parent=11 // pred_region
        _
      $region32: #{image_encoder_forward.8} parent=11 // pred_fallthru
        _
      // Predicated region
      $region33: #{image_encoder_forward.8} parent=11 // pred_check
        %p237 = pneg %p179
      $region34: #{image_encoder_forward.8} parent=11 // pred_check_branch
        %239 = sbr.rel (%p237) target = $region36
      $region35: #{image_encoder_forward.8} parent=11 // pred_region
        _
      $region36: #{image_encoder_forward.8} parent=11 // pred_fallthru
        _
    $region12: #{image_encoder_forward.8} parent=5 // pred_fallthru
      _
    %p240 = scmp.lt.s32.totalorder %s13, 2
    // Predicated region
    $region37: #{image_encoder_forward.8} parent=5 // pred_check
      %p241 = pneg %p240
    $region38: #{image_encoder_forward.8} parent=5 // pred_check_branch
      %243 = sbr.rel (%p241) target = $region40
    $region39: #{image_encoder_forward.8} parent=5 // pred_region
      // Predicated region
      $region41: #{image_encoder_forward.8} parent=39 // pred_check
        %p244 = pneg %p47
      $region42: #{image_encoder_forward.8} parent=39 // pred_check_branch
        %246 = sbr.rel (%p244) target = $region44
      $region43: #{image_encoder_forward.8} parent=39 // pred_region
        %s247 = smul.u32 3, %s21
        %p248 = scmp.lt.s32.totalorder %s20, 1
        %s249 = scalar_select %p248, %s20, 1
        %p250 = scmp.lt.s32.totalorder %s247, 2
        %s251 = scalar_select %p250, %s247, 2
        %s252 = smul.addr %s249, 3
        %s253 = sadd.s32 %s251, %s252
        %s254 = smul.addr %s253, 4
        %s255 = scalar_lea.vmem %s0, %s254
        %s256 = smul.u32 3, %s21
      $region44: #{image_encoder_forward.8} parent=39 // pred_fallthru
        _
    $region40: #{image_encoder_forward.8} parent=5 // pred_fallthru
      _
    %p257 = scmp.le.s32.totalorder 1, %s13
    %p258 = scmp.lt.s32.totalorder %s13, 3
    %p259 = pnand %p257, %p258
    %p260 = pneg %p259
    // Predicated region
    $region45: #{image_encoder_forward.8} parent=5 // pred_check
      _
    $region46: #{image_encoder_forward.8} parent=5 // pred_check_branch
      %262 = sbr.rel (%p259) target = $region48
    $region47: #{image_encoder_forward.8} parent=5 // pred_region
      %s263 = ssub.s32 %s13, 1
      %s264 = smul.u32 3, %s23
      %p265 = scmp.lt.s32.totalorder %s22, 1
      %s266 = scalar_select %p265, %s22, 1
      %p267 = scmp.lt.s32.totalorder %s264, 2
      %s268 = scalar_select %p267, %s264, 2
      %s269 = smul.addr %s266, 3
      %s270 = sadd.s32 %s268, %s269
      %s271 = smul.addr %s270, 4
      %s272 = scalar_lea.vmem %s0, %s271
      %p273 = pneg %p53
      %p274 = pneg %p50
      %p275 = pneg %p74
      %p276 = pneg %p71
      %p277 = pneg %p95
      %p278 = pneg %p92
      %p279 = pneg %p116
      %p280 = pneg %p113
      %p281 = pneg %p137
      %p282 = pneg %p134
      %p283 = pneg %p158
      %p284 = pneg %p155
      %p285 = pneg %p179
      %p286 = pneg %p176
      %p287 = pneg %p207
      %p288 = pneg %p204
      %s289 = smul.u32 3, %s23
      %p290 = scmp.lt.s32.totalorder %s22, 1
      %s291 = scalar_select %p290, %s22, 1
      %p292 = scmp.lt.s32.totalorder %s289, 2
      %s293 = scalar_select %p292, %s289, 2
      %s294 = smul.addr %s291, 3
      %s295 = sadd.s32 %s293, %s294
      %s296 = smul.addr %s295, 4
      %s297 = scalar_lea.vmem %s7, %s296
      %s298 = smul.u32 3, %s23
      %p299 = scmp.lt.s32.totalorder %s22, 1
      %s300 = scalar_select %p299, %s22, 1
      %p301 = scmp.lt.s32.totalorder %s298, 2
      %s302 = scalar_select %p301, %s298, 2
      %s303 = smul.addr %s300, 3
      %s304 = sadd.s32 %s302, %s303
      %s305 = smul.addr %s304, 4
      %s306 = scalar_lea.vmem %s0, %s305
      %s307 = smul.u32 3, %s23
      %s308 = smul.u32 3, %s23
      %p309 = scmp.lt.s32.totalorder %s22, 1
      %s310 = scalar_select %p309, %s22, 1
      %p311 = scmp.lt.s32.totalorder %s308, 2
      %s312 = scalar_select %p311, %s308, 2
      %s313 = smul.addr %s310, 3
      %s314 = sadd.s32 %s312, %s313
      %s315 = smul.addr %s314, 4
      %s316 = scalar_lea.vmem %s7, %s315
      %s317 = smul.u32 3, %s23
      %v319 = vld [vmem:[%s306] sm:$0xf]
      %v320 = vld [vmem:[%s306 + $0x4] sm:$0xf]
      %v321 = vld [vmem:[%s306 + $0x8] sm:$0xf]
      %v322 = vunpack.c.l.bf16 %v319
      %v323 = vunpack.c.l.bf16 %v320
      %v324 = vunpack.c.l.bf16 %v321
      %v325 = vld [vmem:[%s1] sm:$0x1]
      %v326 = vld [vmem:[%s2] sm:$0x1]
      %327 = vadd.xlane.f32.xlu0 %v322
      %v328 = vpop.xlane.xlu0 %327
      %329 = vadd.xlane.f32.xlu0 %v323
      %v330 = vpop.xlane.xlu0 %329
      %331 = vadd.xlane.f32.xlu0 %v324
      %v332 = vpop.xlane.xlu0 %331
      %v333 = vrcp.pop 128.0
      %v334 = vmul.f32 %v328, %v333
      %v335 = vmul.f32 %v330, %v333
      %v336 = vmul.f32 %v332, %v333
      %v337 = vsub.f32 %v322, %v334
      %v338 = vsub.f32 %v323, %v335
      %v339 = vsub.f32 %v324, %v336
      %v340 = vmul.f32 %v337, %v337
      %v341 = vmul.f32 %v338, %v338
      %v342 = vmul.f32 %v339, %v339
      %343 = vadd.xlane.f32.xlu0 %v340
      %v344 = vpop.xlane.xlu0 %343
      %345 = vadd.xlane.f32.xlu0 %v341
      %v346 = vpop.xlane.xlu0 %345
      %347 = vadd.xlane.f32.xlu0 %v342
      %v348 = vpop.xlane.xlu0 %347
      %v349 = vmul.f32 %v344, %v333
      %v350 = vmul.f32 %v346, %v333
      %v351 = vmul.f32 %v348, %v333
      %v352 = vadd.f32 %v349, 1e-05
      %v353 = vadd.f32 %v350, 1e-05
      %v354 = vadd.f32 %v351, 1e-05
      %v355 = vrsqrt.pop %v352
      %v356 = vrsqrt.pop %v353
      %v357 = vrsqrt.pop %v354
      %v358 = vmul.f32 %v337, %v355
      %v359 = vmul.f32 %v338, %v356
      %v360 = vmul.f32 %v339, %v357
      %v362 = vlaneseq
      %v363 = vshrl.u32 %v362, 7
      %v364 = vsub.s32 0, %v363
      %v365 = vrot.slane %v325, %v364
      %v367 = vmul.f32 %v358, %v365
      %v368 = vmul.f32 %v359, %v365
      %v369 = vmul.f32 %v360, %v365
      %v371 = vlaneseq
      %v372 = vshrl.u32 %v371, 7
      %v373 = vsub.s32 0, %v372
      %v374 = vrot.slane %v326, %v373
      %v376 = vadd.f32 %v367, %v374
      %v377 = vadd.f32 %v368, %v374
      %v378 = vadd.f32 %v369, %v374
      %v379 = vpack.c.bf16 %v377, %v376
      %v380 = vpack.c.bf16 %v378, %v378
      %v381 = vld [vmem:[%s3] sm:$0xff]
      %v382 = vld [vmem:[%s3 + $0x8] sm:$0xff]
      %v383 = vld [vmem:[%s3 + $0x10] sm:$0xff]
      %v384 = vld [vmem:[%s3 + $0x18] sm:$0xff]
      %v385 = vld [vmem:[%s3 + $0x20] sm:$0xff]
      %v386 = vld [vmem:[%s3 + $0x28] sm:$0xff]
      %v387 = vld [vmem:[%s3 + $0x30] sm:$0xff]
      %v388 = vld [vmem:[%s3 + $0x38] sm:$0xff]
      %v389 = vld [vmem:[%s3 + $0x40] sm:$0xff]
      %v390 = vld [vmem:[%s3 + $0x48] sm:$0xff]
      %v391 = vld [vmem:[%s3 + $0x50] sm:$0xff]
      %v392 = vld [vmem:[%s3 + $0x58] sm:$0xff]
      %v393 = vld [vmem:[%s3 + $0x60] sm:$0xff]
      %v394 = vld [vmem:[%s3 + $0x68] sm:$0xff]
      %v395 = vld [vmem:[%s3 + $0x70] sm:$0xff]
      %v396 = vld [vmem:[%s3 + $0x78] sm:$0xff]
      %v397 = vld [vmem:[%s3 + $0x80] sm:$0xff]
      %v398 = vld [vmem:[%s3 + $0x88] sm:$0xff]
      %v399 = vld [vmem:[%s3 + $0x90] sm:$0xff]
      %v400 = vld [vmem:[%s3 + $0x98] sm:$0xff]
      %v401 = vld [vmem:[%s3 + $0xa0] sm:$0xff]
      %v402 = vld [vmem:[%s3 + $0xa8] sm:$0xff]
      %v403 = vld [vmem:[%s3 + $0xb0] sm:$0xff]
      %v404 = vld [vmem:[%s3 + $0xb8] sm:$0xff]
      %v405 = vld [vmem:[%s3 + $0xc0] sm:$0xff]
      %v406 = vld [vmem:[%s3 + $0xc8] sm:$0xff]
      %v407 = vld [vmem:[%s3 + $0xd0] sm:$0xff]
      %v408 = vld [vmem:[%s3 + $0xd8] sm:$0xff]
      %v409 = vld [vmem:[%s3 + $0xe0] sm:$0xff]
      %v410 = vld [vmem:[%s3 + $0xe8] sm:$0xff]
      %v411 = vld [vmem:[%s3 + $0xf0] sm:$0xff]
      %v412 = vld [vmem:[%s3 + $0xf8] sm:$0xff]
      %v413 = vld [vmem:[%s4] sm:$0xf]
      %v415 = vlaneseq
      %v416 = vshrl.u32 %v415, 7
      %v417 = vsub.s32 0, %v416
      %v418 = vrot.slane %v413, %v417
      %v419 = vlaneseq
      %v420 = vshrl.u32 %v419, 7
      %v421 = vsub.s32 1, %v420
      %v422 = vrot.slane %v413, %v421
      %v423 = vlaneseq
      %v424 = vshrl.u32 %v423, 7
      %v425 = vsub.s32 2, %v424
      %v426 = vrot.slane %v413, %v425
      %v427 = vlaneseq
      %v428 = vshrl.u32 %v427, 7
      %v429 = vsub.s32 3, %v428
      %v430 = vrot.slane %v413, %v429
      %v467 = vunpack.c.l.b16 %v381
      %v468 = vunpack.c.h.b16 %v381
      %v469 = vunpack.c.l.b16 %v382
      %v470 = vunpack.c.h.b16 %v382
      %v471 = vunpack.c.l.b16 %v383
      %v472 = vunpack.c.h.b16 %v383
      %v473 = vunpack.c.l.b16 %v384
      %v474 = vunpack.c.h.b16 %v384
      %v475 = vunpack.c.l.b16 %v385
      %v476 = vunpack.c.h.b16 %v385
      %v477 = vunpack.c.l.b16 %v386
      %v478 = vunpack.c.h.b16 %v386
      %v479 = vunpack.c.l.b16 %v387
      %v480 = vunpack.c.h.b16 %v387
      %v481 = vunpack.c.l.b16 %v388
      %v482 = vunpack.c.h.b16 %v388
      %v483 = vunpack.c.l.b16 %v389
      %v484 = vunpack.c.h.b16 %v389
      %v485 = vunpack.c.l.b16 %v390
      %v486 = vunpack.c.h.b16 %v390
      %v487 = vunpack.c.l.b16 %v391
      %v488 = vunpack.c.h.b16 %v391
      %v489 = vunpack.c.l.b16 %v392
      %v490 = vunpack.c.h.b16 %v392
      %v491 = vunpack.c.l.b16 %v393
      %v492 = vunpack.c.h.b16 %v393
      %v493 = vunpack.c.l.b16 %v394
      %v494 = vunpack.c.h.b16 %v394
      %v495 = vunpack.c.l.b16 %v395
      %v496 = vunpack.c.h.b16 %v395
      %v497 = vunpack.c.l.b16 %v396
      %v498 = vunpack.c.h.b16 %v396
      %v499 = vunpack.c.l.b16 %v397
      %v500 = vunpack.c.h.b16 %v397
      %v501 = vunpack.c.l.b16 %v398
      %v502 = vunpack.c.h.b16 %v398
      %v503 = vunpack.c.l.b16 %v399
      %v504 = vunpack.c.h.b16 %v399
      %v505 = vunpack.c.l.b16 %v400
      %v506 = vunpack.c.h.b16 %v400
      %v507 = vunpack.c.l.b16 %v401
      %v508 = vunpack.c.h.b16 %v401
      %v509 = vunpack.c.l.b16 %v402
      %v510 = vunpack.c.h.b16 %v402
      %v511 = vunpack.c.l.b16 %v403
      %v512 = vunpack.c.h.b16 %v403
      %v513 = vunpack.c.l.b16 %v404
      %v514 = vunpack.c.h.b16 %v404
      %v515 = vunpack.c.l.b16 %v405
      %v516 = vunpack.c.h.b16 %v405
      %v517 = vunpack.c.l.b16 %v406
      %v518 = vunpack.c.h.b16 %v406
      %v519 = vunpack.c.l.b16 %v407
      %v520 = vunpack.c.h.b16 %v407
      %v521 = vunpack.c.l.b16 %v408
      %v522 = vunpack.c.h.b16 %v408
      %v523 = vunpack.c.l.b16 %v409
      %v524 = vunpack.c.h.b16 %v409
      %v525 = vunpack.c.l.b16 %v410
      %v526 = vunpack.c.h.b16 %v410
      %v527 = vunpack.c.l.b16 %v411
      %v528 = vunpack.c.h.b16 %v411
      %v529 = vunpack.c.l.b16 %v412
      %v530 = vunpack.c.h.b16 %v412
      %v531 = vpack.c.b16 %v471, %v467
      %v532 = vpack.c.b16 %v472, %v468
      %v533 = vpack.c.b16 %v473, %v469
      %v534 = vpack.c.b16 %v474, %v470
      %v535 = vpack.c.b16 %v479, %v475
      %v536 = vpack.c.b16 %v480, %v476
      %v537 = vpack.c.b16 %v481, %v477
      %v538 = vpack.c.b16 %v482, %v478
      %v539 = vpack.c.b16 %v487, %v483
      %v540 = vpack.c.b16 %v488, %v484
      %v541 = vpack.c.b16 %v489, %v485
      %v542 = vpack.c.b16 %v490, %v486
      %v543 = vpack.c.b16 %v495, %v491
      %v544 = vpack.c.b16 %v496, %v492
      %v545 = vpack.c.b16 %v497, %v493
      %v546 = vpack.c.b16 %v498, %v494
      %v547 = vpack.c.b16 %v503, %v499
      %v548 = vpack.c.b16 %v504, %v500
      %v549 = vpack.c.b16 %v505, %v501
      %v550 = vpack.c.b16 %v506, %v502
      %v551 = vpack.c.b16 %v511, %v507
      %v552 = vpack.c.b16 %v512, %v508
      %v553 = vpack.c.b16 %v513, %v509
      %v554 = vpack.c.b16 %v514, %v510
      %v555 = vpack.c.b16 %v519, %v515
      %v556 = vpack.c.b16 %v520, %v516
      %v557 = vpack.c.b16 %v521, %v517
      %v558 = vpack.c.b16 %v522, %v518
      %v559 = vpack.c.b16 %v527, %v523
      %v560 = vpack.c.b16 %v528, %v524
      %v561 = vpack.c.b16 %v529, %v525
      %v562 = vpack.c.b16 %v530, %v526
      %595 = vmatprep.subr.bf16.mxu0 %v532
      %596 = vmatpush1.bf16.msra.mxu0 %v531
      %597 = vmatprep.subr.bf16.mxu0 %v536
      %598 = vmatpush1.bf16.msra.mxu0 %v535
      %599 = vmatprep.subr.bf16.mxu0 %v540
      %600 = vmatpush1.bf16.msra.mxu0 %v539
      %601 = vmatprep.subr.bf16.mxu0 %v544
      %602 = vmatpush1.bf16.msra.mxu0 %v543
      %603 = vmatprep.subr.bf16.mxu0 %v548
      %604 = vmatpush1.bf16.msra.mxu0 %v547
      %605 = vmatprep.subr.bf16.mxu0 %v552
      %606 = vmatpush1.bf16.msra.mxu0 %v551
      %607 = vmatprep.subr.bf16.mxu0 %v556
      %608 = vmatpush1.bf16.msra.mxu0 %v555
      %609 = vmatprep.subr.bf16.mxu0 %v560
      %610 = vmatpush1.bf16.msra.mxu0 %v559
      %611 = vmatprep.subr.bf16.mxu0 0
      %612 = vmatpush1.bf16.msra.mxu0 0
      %613 = vmatprep.subr.bf16.mxu0 0
      %614 = vmatpush1.bf16.msra.mxu0 0
      %615 = vmatprep.subr.bf16.mxu0 0
      %616 = vmatpush1.bf16.msra.mxu0 0
      %617 = vmatprep.subr.bf16.mxu0 0
      %618 = vmatpush1.bf16.msra.mxu0 0
      %619 = vmatprep.subr.bf16.mxu0 0
      %620 = vmatpush1.bf16.msra.mxu0 0
      %621 = vmatprep.subr.bf16.mxu0 0
      %622 = vmatpush1.bf16.msra.mxu0 0
      %623 = vmatprep.subr.bf16.mxu0 0
      %624 = vmatpush1.bf16.msra.mxu0 0
      %625 = vmatprep.subr.bf16.mxu0 0
      %626 = vmatpush1.bf16.msra.mxu0 0
      %627 = vmatprep.mubr.bf16.mxu0 0
      %628 = vmatmul.mubr.bf16.gmra.mrb[0].mxu0 %v379
      %v629 = vpop.f32.mrb[0].mxu0
      %v630 = vadd.f32 %v418, %v629
      %v631 = vpop.f32.mrb[0].mxu0
      %v632 = vadd.f32 %v422, %v631
      %v633 = vpop.f32.mrb[0].mxu0
      %v634 = vadd.f32 %v418, %v633
      %v635 = vpop.f32.mrb[0].mxu0
      %v636 = vadd.f32 %v422, %v635
      %637 = vmatprep.mubr.bf16.mxu0 0
      %638 = vmatmul.mubr.bf16.gmra.mrb[0].mxu0 %v380
      %v639 = vpop.f32.mrb[0].mxu0
      %v640 = vadd.f32 %v418, %v639
      %v641 = vpop.f32.mrb[0].mxu0
      %v642 = vadd.f32 %v422, %v641
      %v643 = vpop.f32.mrb[0].mxu0
      %v644 = vpop.f32.mrb[0].mxu0
      %645 = vdwg.mxu0
      %646 = vmatprep.subr.bf16.mxu0 %v534
      %647 = vmatpush1.bf16.msra.mxu0 %v533
      %648 = vmatprep.subr.bf16.mxu0 %v538
      %649 = vmatpush1.bf16.msra.mxu0 %v537
      %650 = vmatprep.subr.bf16.mxu0 %v542
      %651 = vmatpush1.bf16.msra.mxu0 %v541
      %652 = vmatprep.subr.bf16.mxu0 %v546
      %653 = vmatpush1.bf16.msra.mxu0 %v545
      %654 = vmatprep.subr.bf16.mxu0 %v550
      %655 = vmatpush1.bf16.msra.mxu0 %v549
      %656 = vmatprep.subr.bf16.mxu0 %v554
      %657 = vmatpush1.bf16.msra.mxu0 %v553
      %658 = vmatprep.subr.bf16.mxu0 %v558
      %659 = vmatpush1.bf16.msra.mxu0 %v557
      %660 = vmatprep.subr.bf16.mxu0 %v562
      %661 = vmatpush1.bf16.msra.mxu0 %v561
      %662 = vmatprep.subr.bf16.mxu0 0
      %663 = vmatpush1.bf16.msra.mxu0 0
      %664 = vmatprep.subr.bf16.mxu0 0
      %665 = vmatpush1.bf16.msra.mxu0 0
      %666 = vmatprep.subr.bf16.mxu0 0
      %667 = vmatpush1.bf16.msra.mxu0 0
      %668 = vmatprep.subr.bf16.mxu0 0
      %669 = vmatpush1.bf16.msra.mxu0 0
      %670 = vmatprep.subr.bf16.mxu0 0
      %671 = vmatpush1.bf16.msra.mxu0 0
      %672 = vmatprep.subr.bf16.mxu0 0
      %673 = vmatpush1.bf16.msra.mxu0 0
      %674 = vmatprep.subr.bf16.mxu0 0
      %675 = vmatpush1.bf16.msra.mxu0 0
      %676 = vmatprep.subr.bf16.mxu0 0
      %677 = vmatpush1.bf16.msra.mxu0 0
      %678 = vmatprep.mubr.bf16.mxu0 0
      %679 = vmatmul.mubr.bf16.gmra.mrb[0].mxu0 %v379
      %v680 = vpop.f32.mrb[0].mxu0
      %v681 = vadd.f32 %v426, %v680
      %v682 = vpop.f32.mrb[0].mxu0
      %v683 = vadd.f32 %v430, %v682
      %v684 = vpop.f32.mrb[0].mxu0
      %v685 = vadd.f32 %v426, %v684
      %v686 = vpop.f32.mrb[0].mxu0
      %v687 = vadd.f32 %v430, %v686
      %688 = vmatprep.mubr.bf16.mxu0 0
      %689 = vmatmul.mubr.bf16.gmra.mrb[0].mxu0 %v380
      %v690 = vpop.f32.mrb[0].mxu0
      %v691 = vadd.f32 %v426, %v690
      %v692 = vpop.f32.mrb[0].mxu0
      %v693 = vadd.f32 %v430, %v692
      %v694 = vpop.f32.mrb[0].mxu0
      %v695 = vpop.f32.mrb[0].mxu0
      %696 = vdwg.mxu0
      %v697 = vmul.f32 %v630, %v630
      %v698 = vmul.f32 %v632, %v632
      %v699 = vmul.f32 %v681, %v681
      %v700 = vmul.f32 %v683, %v683
      %v701 = vmul.f32 %v634, %v634
      %v702 = vmul.f32 %v636, %v636
      %v703 = vmul.f32 %v685, %v685
      %v704 = vmul.f32 %v687, %v687
      %v705 = vmul.f32 %v640, %v640
      %v706 = vmul.f32 %v642, %v642
      %v707 = vmul.f32 %v691, %v691
      %v708 = vmul.f32 %v693, %v693
      %v709 = vmul.f32 %v630, %v697
      %v710 = vmul.f32 %v632, %v698
      %v711 = vmul.f32 %v681, %v699
      %v712 = vmul.f32 %v683, %v700
      %v713 = vmul.f32 %v634, %v701
      %v714 = vmul.f32 %v636, %v702
      %v715 = vmul.f32 %v685, %v703
      %v716 = vmul.f32 %v687, %v704
      %v717 = vmul.f32 %v640, %v705
      %v718 = vmul.f32 %v642, %v706
      %v719 = vmul.f32 %v691, %v707
      %v720 = vmul.f32 %v693, %v708
      %v721 = vmul.f32 %v709, 0.044715
      %v722 = vmul.f32 %v710, 0.044715
      %v723 = vmul.f32 %v711, 0.044715
      %v724 = vmul.f32 %v712, 0.044715
      %v725 = vmul.f32 %v713, 0.044715
      %v726 = vmul.f32 %v714, 0.044715
      %v727 = vmul.f32 %v715, 0.044715
      %v728 = vmul.f32 %v716, 0.044715
      %v729 = vmul.f32 %v717, 0.044715
      %v730 = vmul.f32 %v718, 0.044715
      %v731 = vmul.f32 %v719, 0.044715
      %v732 = vmul.f32 %v720, 0.044715
      %v733 = vadd.f32 %v630, %v721
      %v734 = vadd.f32 %v632, %v722
      %v735 = vadd.f32 %v681, %v723
      %v736 = vadd.f32 %v683, %v724
      %v737 = vadd.f32 %v634, %v725
      %v738 = vadd.f32 %v636, %v726
      %v739 = vadd.f32 %v685, %v727
      %v740 = vadd.f32 %v687, %v728
      %v741 = vadd.f32 %v640, %v729
      %v742 = vadd.f32 %v642, %v730
      %v743 = vadd.f32 %v691, %v731
      %v744 = vadd.f32 %v693, %v732
      %v745 = vmul.f32 %v733, 0.7978846
      %v746 = vmul.f32 %v734, 0.7978846
      %v747 = vmul.f32 %v735, 0.7978846
      %v748 = vmul.f32 %v736, 0.7978846
      %v749 = vmul.f32 %v737, 0.7978846
      %v750 = vmul.f32 %v738, 0.7978846
      %v751 = vmul.f32 %v739, 0.7978846
      %v752 = vmul.f32 %v740, 0.7978846
      %v753 = vmul.f32 %v741, 0.7978846
      %v754 = vmul.f32 %v742, 0.7978846
      %v755 = vmul.f32 %v743, 0.7978846
      %v756 = vmul.f32 %v744, 0.7978846
      %v757 = vtanh.pop %v745
      %v758 = vtanh.pop %v746
      %v759 = vtanh.pop %v747
      %v760 = vtanh.pop %v748
      %v761 = vtanh.pop %v749
      %v762 = vtanh.pop %v750
      %v763 = vtanh.pop %v751
      %v764 = vtanh.pop %v752
      %v765 = vtanh.pop %v753
      %v766 = vtanh.pop %v754
      %v767 = vtanh.pop %v755
      %v768 = vtanh.pop %v756
      %v769 = vadd.f32 %v757, 1.0
      %v770 = vadd.f32 %v758, 1.0
      %v771 = vadd.f32 %v759, 1.0
      %v772 = vadd.f32 %v760, 1.0
      %v773 = vadd.f32 %v761, 1.0
      %v774 = vadd.f32 %v762, 1.0
      %v775 = vadd.f32 %v763, 1.0
      %v776 = vadd.f32 %v764, 1.0
      %v777 = vadd.f32 %v765, 1.0
      %v778 = vadd.f32 %v766, 1.0
      %v779 = vadd.f32 %v767, 1.0
      %v780 = vadd.f32 %v768, 1.0
      %v781 = vmul.f32 %v769, 0.5
      %v782 = vmul.f32 %v770, 0.5
      %v783 = vmul.f32 %v771, 0.5
      %v784 = vmul.f32 %v772, 0.5
      %v785 = vmul.f32 %v773, 0.5
      %v786 = vmul.f32 %v774, 0.5
      %v787 = vmul.f32 %v775, 0.5
      %v788 = vmul.f32 %v776, 0.5
      %v789 = vmul.f32 %v777, 0.5
      %v790 = vmul.f32 %v778, 0.5
      %v791 = vmul.f32 %v779, 0.5
      %v792 = vmul.f32 %v780, 0.5
      %v793 = vmul.f32 %v630, %v781
      %v794 = vmul.f32 %v632, %v782
      %v795 = vmul.f32 %v681, %v783
      %v796 = vmul.f32 %v683, %v784
      %v797 = vmul.f32 %v634, %v785
      %v798 = vmul.f32 %v636, %v786
      %v799 = vmul.f32 %v685, %v787
      %v800 = vmul.f32 %v687, %v788
      %v801 = vmul.f32 %v640, %v789
      %v802 = vmul.f32 %v642, %v790
      %v803 = vmul.f32 %v691, %v791
      %v804 = vmul.f32 %v693, %v792
      %v805 = vpack.c.bf16 %v797, %v793
      %v806 = vpack.c.bf16 %v798, %v794
      %v807 = vpack.c.bf16 %v799, %v795
      %v808 = vpack.c.bf16 %v800, %v796
      %v809 = vpack.c.bf16 %v801, %v801
      %v810 = vpack.c.bf16 %v802, %v802
      %v811 = vpack.c.bf16 %v803, %v803
      %v812 = vpack.c.bf16 %v804, %v804
      %v813 = vld [vmem:[%s5] sm:$0xf]
      %v814 = vld [vmem:[%s5 + $0x4] sm:$0xf]
      %v815 = vld [vmem:[%s5 + $0x8] sm:$0xf]
      %v816 = vld [vmem:[%s5 + $0xc] sm:$0xf]
      %v817 = vld [vmem:[%s5 + $0x10] sm:$0xf]
      %v818 = vld [vmem:[%s5 + $0x14] sm:$0xf]
      %v819 = vld [vmem:[%s5 + $0x18] sm:$0xf]
      %v820 = vld [vmem:[%s5 + $0x1c] sm:$0xf]
      %v821 = vld [vmem:[%s5 + $0x20] sm:$0xf]
      %v822 = vld [vmem:[%s5 + $0x24] sm:$0xf]
      %v823 = vld [vmem:[%s5 + $0x28] sm:$0xf]
      %v824 = vld [vmem:[%s5 + $0x2c] sm:$0xf]
      %v825 = vld [vmem:[%s5 + $0x30] sm:$0xf]
      %v826 = vld [vmem:[%s5 + $0x34] sm:$0xf]
      %v827 = vld [vmem:[%s5 + $0x38] sm:$0xf]
      %v828 = vld [vmem:[%s5 + $0x3c] sm:$0xf]
      %v829 = vld [vmem:[%s5 + $0x40] sm:$0xf]
      %v830 = vld [vmem:[%s5 + $0x44] sm:$0xf]
      %v831 = vld [vmem:[%s5 + $0x48] sm:$0xf]
      %v832 = vld [vmem:[%s5 + $0x4c] sm:$0xf]
      %v833 = vld [vmem:[%s5 + $0x50] sm:$0xf]
      %v834 = vld [vmem:[%s5 + $0x54] sm:$0xf]
      %v835 = vld [vmem:[%s5 + $0x58] sm:$0xf]
      %v836 = vld [vmem:[%s5 + $0x5c] sm:$0xf]
      %v837 = vld [vmem:[%s5 + $0x60] sm:$0xf]
      %v838 = vld [vmem:[%s5 + $0x64] sm:$0xf]
      %v839 = vld [vmem:[%s5 + $0x68] sm:$0xf]
      %v840 = vld [vmem:[%s5 + $0x6c] sm:$0xf]
      %v841 = vld [vmem:[%s5 + $0x70] sm:$0xf]
      %v842 = vld [vmem:[%s5 + $0x74] sm:$0xf]
      %v843 = vld [vmem:[%s5 + $0x78] sm:$0xf]
      %v844 = vld [vmem:[%s5 + $0x7c] sm:$0xf]
      %v845 = vld [vmem:[%s5 + $0x80] sm:$0xf]
      %v846 = vld [vmem:[%s5 + $0x84] sm:$0xf]
      %v847 = vld [vmem:[%s5 + $0x88] sm:$0xf]
      %v848 = vld [vmem:[%s5 + $0x8c] sm:$0xf]
      %v849 = vld [vmem:[%s5 + $0x90] sm:$0xf]
      %v850 = vld [vmem:[%s5 + $0x94] sm:$0xf]
      %v851 = vld [vmem:[%s5 + $0x98] sm:$0xf]
      %v852 = vld [vmem:[%s5 + $0x9c] sm:$0xf]
      %v853 = vld [vmem:[%s5 + $0xa0] sm:$0xf]
      %v854 = vld [vmem:[%s5 + $0xa4] sm:$0xf]
      %v855 = vld [vmem:[%s5 + $0xa8] sm:$0xf]
      %v856 = vld [vmem:[%s5 + $0xac] sm:$0xf]
      %v857 = vld [vmem:[%s5 + $0xb0] sm:$0xf]
      %v858 = vld [vmem:[%s5 + $0xb4] sm:$0xf]
      %v859 = vld [vmem:[%s5 + $0xb8] sm:$0xf]
      %v860 = vld [vmem:[%s5 + $0xbc] sm:$0xf]
      %v861 = vld [vmem:[%s5 + $0xc0] sm:$0xf]
      %v862 = vld [vmem:[%s5 + $0xc4] sm:$0xf]
      %v863 = vld [vmem:[%s5 + $0xc8] sm:$0xf]
      %v864 = vld [vmem:[%s5 + $0xcc] sm:$0xf]
      %v865 = vld [vmem:[%s5 + $0xd0] sm:$0xf]
      %v866 = vld [vmem:[%s5 + $0xd4] sm:$0xf]
      %v867 = vld [vmem:[%s5 + $0xd8] sm:$0xf]
      %v868 = vld [vmem:[%s5 + $0xdc] sm:$0xf]
      %v869 = vld [vmem:[%s5 + $0xe0] sm:$0xf]
      %v870 = vld [vmem:[%s5 + $0xe4] sm:$0xf]
      %v871 = vld [vmem:[%s5 + $0xe8] sm:$0xf]
      %v872 = vld [vmem:[%s5 + $0xec] sm:$0xf]
      %v873 = vld [vmem:[%s5 + $0xf0] sm:$0xf]
      %v874 = vld [vmem:[%s5 + $0xf4] sm:$0xf]
      %v875 = vld [vmem:[%s5 + $0xf8] sm:$0xf]
      %v876 = vld [vmem:[%s5 + $0xfc] sm:$0xf]
      %v941 = vunpack.c.l.b16 %v813
      %v942 = vunpack.c.l.b16 %v814
      %v943 = vunpack.c.l.b16 %v815
      %v944 = vunpack.c.l.b16 %v816
      %v945 = vunpack.c.l.b16 %v817
      %v946 = vunpack.c.l.b16 %v818
      %v947 = vunpack.c.l.b16 %v819
      %v948 = vunpack.c.l.b16 %v820
      %v949 = vunpack.c.l.b16 %v821
      %v950 = vunpack.c.l.b16 %v822
      %v951 = vunpack.c.l.b16 %v823
      %v952 = vunpack.c.l.b16 %v824
      %v953 = vunpack.c.l.b16 %v825
      %v954 = vunpack.c.l.b16 %v826
      %v955 = vunpack.c.l.b16 %v827
      %v956 = vunpack.c.l.b16 %v828
      %v957 = vunpack.c.l.b16 %v829
      %v958 = vunpack.c.l.b16 %v830
      %v959 = vunpack.c.l.b16 %v831
      %v960 = vunpack.c.l.b16 %v832
      %v961 = vunpack.c.l.b16 %v833
      %v962 = vunpack.c.l.b16 %v834
      %v963 = vunpack.c.l.b16 %v835
      %v964 = vunpack.c.l.b16 %v836
      %v965 = vunpack.c.l.b16 %v837
      %v966 = vunpack.c.l.b16 %v838
      %v967 = vunpack.c.l.b16 %v839
      %v968 = vunpack.c.l.b16 %v840
      %v969 = vunpack.c.l.b16 %v841
      %v970 = vunpack.c.l.b16 %v842
      %v971 = vunpack.c.l.b16 %v843
      %v972 = vunpack.c.l.b16 %v844
      %v973 = vunpack.c.l.b16 %v845
      %v974 = vunpack.c.l.b16 %v846
      %v975 = vunpack.c.l.b16 %v847
      %v976 = vunpack.c.l.b16 %v848
      %v977 = vunpack.c.l.b16 %v849
      %v978 = vunpack.c.l.b16 %v850
      %v979 = vunpack.c.l.b16 %v851
      %v980 = vunpack.c.l.b16 %v852
      %v981 = vunpack.c.l.b16 %v853
      %v982 = vunpack.c.l.b16 %v854
      %v983 = vunpack.c.l.b16 %v855
      %v984 = vunpack.c.l.b16 %v856
      %v985 = vunpack.c.l.b16 %v857
      %v986 = vunpack.c.l.b16 %v858
      %v987 = vunpack.c.l.b16 %v859
      %v988 = vunpack.c.l.b16 %v860
      %v989 = vunpack.c.l.b16 %v861
      %v990 = vunpack.c.l.b16 %v862
      %v991 = vunpack.c.l.b16 %v863
      %v992 = vunpack.c.l.b16 %v864
      %v993 = vunpack.c.l.b16 %v865
      %v994 = vunpack.c.l.b16 %v866
      %v995 = vunpack.c.l.b16 %v867
      %v996 = vunpack.c.l.b16 %v868
      %v997 = vunpack.c.l.b16 %v869
      %v998 = vunpack.c.l.b16 %v870
      %v999 = vunpack.c.l.b16 %v871
      %v1000 = vunpack.c.l.b16 %v872
      %v1001 = vunpack.c.l.b16 %v873
      %v1002 = vunpack.c.l.b16 %v874
      %v1003 = vunpack.c.l.b16 %v875
      %v1004 = vunpack.c.l.b16 %v876
      %v1005 = vpack.c.b16 %v942, %v941
      %v1006 = vpack.c.b16 %v944, %v943
      %v1007 = vpack.c.b16 %v946, %v945
      %v1008 = vpack.c.b16 %v948, %v947
      %v1009 = vpack.c.b16 %v950, %v949
      %v1010 = vpack.c.b16 %v952, %v951
      %v1011 = vpack.c.b16 %v954, %v953
      %v1012 = vpack.c.b16 %v956, %v955
      %v1013 = vpack.c.b16 %v958, %v957
      %v1014 = vpack.c.b16 %v960, %v959
      %v1015 = vpack.c.b16 %v962, %v961
      %v1016 = vpack.c.b16 %v964, %v963
      %v1017 = vpack.c.b16 %v966, %v965
      %v1018 = vpack.c.b16 %v968, %v967
      %v1019 = vpack.c.b16 %v970, %v969
      %v1020 = vpack.c.b16 %v972, %v971
      %v1021 = vpack.c.b16 %v974, %v973
      %v1022 = vpack.c.b16 %v976, %v975
      %v1023 = vpack.c.b16 %v978, %v977
      %v1024 = vpack.c.b16 %v980, %v979
      %v1025 = vpack.c.b16 %v982, %v981
      %v1026 = vpack.c.b16 %v984, %v983
      %v1027 = vpack.c.b16 %v986, %v985
      %v1028 = vpack.c.b16 %v988, %v987
      %v1029 = vpack.c.b16 %v990, %v989
      %v1030 = vpack.c.b16 %v992, %v991
      %v1031 = vpack.c.b16 %v994, %v993
      %v1032 = vpack.c.b16 %v996, %v995
      %v1033 = vpack.c.b16 %v998, %v997
      %v1034 = vpack.c.b16 %v1000, %v999
      %v1035 = vpack.c.b16 %v1002, %v1001
      %v1036 = vpack.c.b16 %v1004, %v1003
      %1069 = vmatprep.subr.bf16.mxu0 0
      %1070 = vmatpush1.bf16.msra.mxu0 %v1005
      %1071 = vmatprep.subr.bf16.mxu0 0
      %1072 = vmatpush1.bf16.msra.mxu0 %v1006
      %1073 = vmatprep.subr.bf16.mxu0 0
      %1074 = vmatpush1.bf16.msra.mxu0 %v1007
      %1075 = vmatprep.subr.bf16.mxu0 0
      %1076 = vmatpush1.bf16.msra.mxu0 %v1008
      %1077 = vmatprep.subr.bf16.mxu0 0
      %1078 = vmatpush1.bf16.msra.mxu0 %v1009
      %1079 = vmatprep.subr.bf16.mxu0 0
      %1080 = vmatpush1.bf16.msra.mxu0 %v1010
      %1081 = vmatprep.subr.bf16.mxu0 0
      %1082 = vmatpush1.bf16.msra.mxu0 %v1011
      %1083 = vmatprep.subr.bf16.mxu0 0
      %1084 = vmatpush1.bf16.msra.mxu0 %v1012
      %1085 = vmatprep.subr.bf16.mxu0 0
      %1086 = vmatpush1.bf16.msra.mxu0 %v1013
      %1087 = vmatprep.subr.bf16.mxu0 0
      %1088 = vmatpush1.bf16.msra.mxu0 %v1014
      %1089 = vmatprep.subr.bf16.mxu0 0
      %1090 = vmatpush1.bf16.msra.mxu0 %v1015
      %1091 = vmatprep.subr.bf16.mxu0 0
      %1092 = vmatpush1.bf16.msra.mxu0 %v1016
      %1093 = vmatprep.subr.bf16.mxu0 0
      %1094 = vmatpush1.bf16.msra.mxu0 %v1017
      %1095 = vmatprep.subr.bf16.mxu0 0
      %1096 = vmatpush1.bf16.msra.mxu0 %v1018
      %1097 = vmatprep.subr.bf16.mxu0 0
      %1098 = vmatpush1.bf16.msra.mxu0 %v1019
      %1099 = vmatprep.subr.bf16.mxu0 0
      %1100 = vmatpush1.bf16.msra.mxu0 %v1020
      %1101 = vmatprep.mubr.bf16.mxu0 %v806
      %1102 = vmatmul.mubr.bf16.gmra.mrb[0].mxu0 %v805
      %v1103 = vpop.f32.mrb[0].mxu0
      %v1104 = vadd.f32 0.0, %v1103
      %v1105 = vpop.f32.mrb[0].mxu0
      %v1106 = vpop.f32.mrb[0].mxu0
      %v1107 = vadd.f32 0.0, %v1106
      %v1108 = vpop.f32.mrb[0].mxu0
      %1109 = vmatprep.mubr.bf16.mxu0 %v810
      %1110 = vmatmul.mubr.bf16.gmra.mrb[0].mxu0 %v809
      %v1111 = vpop.f32.mrb[0].mxu0
      %v1112 = vadd.f32 0.0, %v1111
      %v1113 = vpop.f32.mrb[0].mxu0
      %v1114 = vpop.f32.mrb[0].mxu0
      %v1115 = vpop.f32.mrb[0].mxu0
      %1116 = vdwg.mxu0
      %1117 = vmatprep.subr.bf16.mxu0 0
      %1118 = vmatpush1.bf16.msra.mxu0 %v1021
      %1119 = vmatprep.subr.bf16.mxu0 0
      %1120 = vmatpush1.bf16.msra.mxu0 %v1022
      %1121 = vmatprep.subr.bf16.mxu0 0
      %1122 = vmatpush1.bf16.msra.mxu0 %v1023
      %1123 = vmatprep.subr.bf16.mxu0 0
      %1124 = vmatpush1.bf16.msra.mxu0 %v1024
      %1125 = vmatprep.subr.bf16.mxu0 0
      %1126 = vmatpush1.bf16.msra.mxu0 %v1025
      %1127 = vmatprep.subr.bf16.mxu0 0
      %1128 = vmatpush1.bf16.msra.mxu0 %v1026
      %1129 = vmatprep.subr.bf16.mxu0 0
      %1130 = vmatpush1.bf16.msra.mxu0 %v1027
      %1131 = vmatprep.subr.bf16.mxu0 0
      %1132 = vmatpush1.bf16.msra.mxu0 %v1028
      %1133 = vmatprep.subr.bf16.mxu0 0
      %1134 = vmatpush1.bf16.msra.mxu0 %v1029
      %1135 = vmatprep.subr.bf16.mxu0 0
      %1136 = vmatpush1.bf16.msra.mxu0 %v1030
      %1137 = vmatprep.subr.bf16.mxu0 0
      %1138 = vmatpush1.bf16.msra.mxu0 %v1031
      %1139 = vmatprep.subr.bf16.mxu0 0
      %1140 = vmatpush1.bf16.msra.mxu0 %v1032
      %1141 = vmatprep.subr.bf16.mxu0 0
      %1142 = vmatpush1.bf16.msra.mxu0 %v1033
      %1143 = vmatprep.subr.bf16.mxu0 0
      %1144 = vmatpush1.bf16.msra.mxu0 %v1034
      %1145 = vmatprep.subr.bf16.mxu0 0
      %1146 = vmatpush1.bf16.msra.mxu0 %v1035
      %1147 = vmatprep.subr.bf16.mxu0 0
      %1148 = vmatpush1.bf16.msra.mxu0 %v1036
      %1149 = vmatprep.mubr.bf16.mxu0 %v808
      %1150 = vmatmul.mubr.bf16.gmra.mrb[0].mxu0 %v807
      %v1151 = vpop.f32.mrb[0].mxu0
      %v1152 = vadd.f32 %v1104, %v1151
      %v1153 = vpop.f32.mrb[0].mxu0
      %v1154 = vpop.f32.mrb[0].mxu0
      %v1155 = vadd.f32 %v1107, %v1154
      %v1156 = vpop.f32.mrb[0].mxu0
      %1157 = vmatprep.mubr.bf16.mxu0 %v812
      %1158 = vmatmul.mubr.bf16.gmra.mrb[0].mxu0 %v811
      %v1159 = vpop.f32.mrb[0].mxu0
      %v1160 = vadd.f32 %v1112, %v1159
      %v1161 = vpop.f32.mrb[0].mxu0
      %v1162 = vpop.f32.mrb[0].mxu0
      %v1163 = vpop.f32.mrb[0].mxu0
      %1164 = vdwg.mxu0
      %v1165 = vadd.f32 %v322, %v1152
      %v1166 = vadd.f32 %v323, %v1155
      %v1167 = vadd.f32 %v324, %v1160
      %v1168 = vld [vmem:[%s6] sm:$0x1]
      %v1170 = vlaneseq
      %v1171 = vshrl.u32 %v1170, 7
      %v1172 = vsub.s32 0, %v1171
      %v1173 = vrot.slane %v1168, %v1172
      %v1175 = vadd.f32 %v1165, %v1173
      %v1176 = vadd.f32 %v1166, %v1173
      %v1177 = vadd.f32 %v1167, %v1173
      %v1178 = vpack.c.bf16 %v1176, %v1175
      %v1179 = vpack.c.bf16 %v1177, %v1177
      %v1182 = vunpack.c.l.b16 %v1178
      %v1183 = vunpack.c.h.b16 %v1178
      %v1184 = vunpack.c.l.b16 %v1179
      %v1185 = vpack.c.b16 %v1182, %v1182
      %v1186 = vpack.c.b16 %v1183, %v1183
      %v1187 = vpack.c.b16 %v1184, %v1184
      %1191 = vst [vmem:[%s316] sm:$0xf] %v1185
      %1192 = vst [vmem:[%s316 + $0x4] sm:$0xf] %v1186
      %1193 = vst [vmem:[%s316 + $0x8] sm:$0xf] %v1187
      %s1194 = smul.u32 3, %s23
      %p1195 = scmp.lt.s32.totalorder %s22, 1
      %s1196 = scalar_select %p1195, %s22, 1
      %p1197 = scmp.lt.s32.totalorder %s1194, 2
      %s1198 = scalar_select %p1197, %s1194, 2
      %s1199 = smul.addr %s1196, 3
      %s1200 = sadd.s32 %s1198, %s1199
      %s1201 = smul.addr %s1200, 4
      %s1202 = scalar_lea.vmem %s7, %s1201
      // Predicated region
      $region49: #{image_encoder_forward.8} parent=47 // pred_check
        %p1203 = pneg %p204
      $region50: #{image_encoder_forward.8} parent=47 // pred_check_branch
        %1205 = sbr.rel (%p1203) target = $region52
      $region51: #{image_encoder_forward.8} parent=47 // pred_region
        %s1206 = smul.u32 3, %s23
      $region52: #{image_encoder_forward.8} parent=47 // pred_fallthru
        _
    $region48: #{image_encoder_forward.8} parent=5 // pred_fallthru
      _
    %p1207 = scmp.le.s32.totalorder 2, %s13
    // Predicated region
    $region53: #{image_encoder_forward.8} parent=5 // pred_check
      %p1208 = pneg %p1207
    $region54: #{image_encoder_forward.8} parent=5 // pred_check_branch
      %1210 = sbr.rel (%p1208) target = $region56
    $region55: #{image_encoder_forward.8} parent=5 // pred_region
      %s1211 = ssub.s32 %s13, 2
      // Predicated region
      $region57: #{image_encoder_forward.8} parent=55 // pred_check
        %p1212 = pneg %p210
      $region58: #{image_encoder_forward.8} parent=55 // pred_check_branch
        %1214 = sbr.rel (%p1212) target = $region60
      $region59: #{image_encoder_forward.8} parent=55 // pred_region
        %s1215 = smul.u32 3, %s25
        %p1216 = scmp.lt.s32.totalorder %s24, 1
        %s1217 = scalar_select %p1216, %s24, 1
        %p1218 = scmp.lt.s32.totalorder %s1215, 2
        %s1219 = scalar_select %p1218, %s1215, 2
        %s1220 = smul.addr %s1217, 3
        %s1221 = sadd.s32 %s1219, %s1220
        %s1222 = smul.addr %s1221, 4
        %s1223 = scalar_lea.vmem %s7, %s1222
      $region60: #{image_encoder_forward.8} parent=55 // pred_fallthru
        _
    $region56: #{image_encoder_forward.8} parent=5 // pred_fallthru
      _
  $region6: #{image_encoder_forward.8} parent=0 // loop_footer
    %s17 = sadd.s32 1, %s13
  $region7: #{image_encoder_forward.8} parent=0 // loop_footer_branch
    %12 = sbr.rel target = $region3
  $region8: #{image_encoder_forward.8} parent=0 // loop_exit
    _

// kernel: image_encoder_forward.7
$region0: #{image_encoder_forward.7}
  #allocation0 [shape = 'u32[]', space=smem, size = 0x4, offset = 0x4, fixed_abs, tag = 'smem constant byte address 0x4 - core index']
  #allocation1 [shape = 'u32[144,128]{1,0:T(1,128)}', space=vmem, size = 0x12000, scoped, tag = 'internal scratch']
  %s0 = inlined_call_operand.vmem [shape: bf16[2,24,128], index: 0, kind: input, shape index: {}]
  %s1 = inlined_call_operand.vmem [shape: f32[1,128], index: 1, kind: input, shape index: {}]
  %s2 = inlined_call_operand.vmem [shape: f32[1,128], index: 2, kind: input, shape index: {}]
  %s3 = inlined_call_operand.vmem [shape: bf16[4,128,32], index: 3, kind: input, shape index: {}]
  %s4 = inlined_call_operand.vmem [shape: bf16[4,128,32], index: 4, kind: input, shape index: {}]
  %s5 = inlined_call_operand.vmem [shape: bf16[4,128,32], index: 5, kind: input, shape index: {}]
  %s6 = inlined_call_operand.vmem [shape: f32[4,1,32], index: 6, kind: input, shape index: {}]
  %s7 = inlined_call_operand.vmem [shape: f32[4,1,32], index: 7, kind: input, shape index: {}]
  %s8 = inlined_call_operand.vmem [shape: f32[4,1,32], index: 8, kind: input, shape index: {}]
  %s9 = inlined_call_operand.vmem [shape: bf16[4,32,128], index: 9, kind: input, shape index: {}]
  %s10 = inlined_call_operand.vmem [shape: f32[1,128], index: 10, kind: input, shape index: {}]
  %s11 = inlined_call_operand.vmem [shape: bf16[2,24,128], index: 11, kind: output, shape index: {}]
  %s12 = sld [smem:[#allocation0]]
  $region77: #{image_encoder_forward.7} parent=0
    _
  %s14 = ssub.s32 1, %s12
  %s15 = scalar_select 0, %s14, %s12
  loop: start=0, step=1, limit=4
  $region2: #{image_encoder_forward.7} parent=0 // loop_pre_header
    _
  $region3: #{image_encoder_forward.7} parent=0 // loop_header
    %s17 = sphi 0, %s21
    %p18 = scmp.ge.s32.totalorder %s17, 4
    %s27 = sphi 0, %s29
    %s30 = sphi 0, %s27
    %s31 = sphi 0, %s30
    %s47 = sphi 0, %s31
    %s51 = sphi 0, %s51
    %s53 = sphi 0, %s51
    %s54 = sphi 0, %s53
    %s68 = sphi 0, %s54
    %s72 = sphi 0, %s72
    %s74 = sphi 0, %s72
    %s75 = sphi 0, %s74
    %s89 = sphi 0, %s75
    %s93 = sphi 0, %s93
    %s95 = sphi 0, %s93
    %s96 = sphi 0, %s95
    %s110 = sphi 0, %s96
    %s114 = sphi 0, %s114
    %s116 = sphi 0, %s114
    %s117 = sphi 0, %s116
    %s131 = sphi 0, %s117
    %s135 = sphi 0, %s135
    %s137 = sphi 0, %s135
    %s138 = sphi 0, %s137
    %s152 = sphi 0, %s138
    %s156 = sphi 0, %s156
    %s158 = sphi 0, %s156
    %s159 = sphi 0, %s158
    %s173 = sphi 0, %s159
    %s177 = sphi 0, %s177
    %s179 = sphi 0, %s177
    %s180 = sphi 0, %s179
    %s194 = sphi 0, %s180
    %s198 = sphi 0, %s198
    %s200 = sphi 0, %s198
    %s201 = sphi 0, %s200
    %s215 = sphi 0, %s201
    %s219 = sphi 0, %s219
    %s221 = sphi 0, %s219
    %s222 = sphi 0, %s221
    %s236 = sphi 0, %s222
    %s240 = sphi 0, %s240
    %s242 = sphi 0, %s240
    %s243 = sphi 0, %s242
    %s257 = sphi 0, %s243
    %s263 = sphi 0, %s265
    %s266 = sphi 0, %s263
    %s267 = sphi 0, %s266
    %s283 = sphi 0, %s267
  $region4: #{image_encoder_forward.7} parent=0 // loop_header_branch
    %20 = sbr.rel (%p18) target = $region8
  $region5: #{image_encoder_forward.7} parent=0 // loop_body
    %s22 = ssub.s32 %s17, 1
    %s23 = ssub.s32 %s17, 2
    %s24 = sadd.s32 %s17, 1
    %s25 = ssub.s32 %s17, %s24
    %p26 = scmp.eq.s32.totalorder %s25, 0
    %s28 = sadd.s32 %s27, 1
    %s29 = scalar_select %p26, %s27, %s28
    %p32 = pneg %p26
    %p33 = scmp.eq.s32.totalorder %s17, 1
    %p34 = por %p32, %p33
    %p35 = scmp.ne.s32.totalorder %s27, %s30
    %p36 = scmp.eq.s32.totalorder %s17, 0
    %p37 = por %p35, %p36
    %p38 = scmp.ne.s32.totalorder %s27, %s30
    %p39 = scmp.eq.s32.totalorder %s22, 1
    %p40 = por %p38, %p39
    %p41 = scmp.ne.s32.totalorder %s30, %s31
    %p42 = scmp.eq.s32.totalorder %s22, 0
    %p43 = por %p41, %p42
    %p44 = scmp.ne.s32.totalorder %s30, %s31
    %p45 = scmp.eq.s32.totalorder %s23, 1
    %p46 = por %p44, %p45
    %p48 = scmp.ne.s32.totalorder %s31, %s47
    %p49 = scmp.eq.s32.totalorder %s23, 0
    %p50 = por %p48, %p49
    %s52 = sadd.s32 %s51, 1
    %p55 = scmp.eq.s32.totalorder %s17, 1
    %p56 = scmp.ne.s32.totalorder %s51, %s53
    %p57 = scmp.eq.s32.totalorder %s17, 0
    %p58 = por %p56, %p57
    %p59 = scmp.ne.s32.totalorder %s51, %s53
    %p60 = scmp.eq.s32.totalorder %s22, 1
    %p61 = por %p59, %p60
    %p62 = scmp.ne.s32.totalorder %s53, %s54
    %p63 = scmp.eq.s32.totalorder %s22, 0
    %p64 = por %p62, %p63
    %p65 = scmp.ne.s32.totalorder %s53, %s54
    %p66 = scmp.eq.s32.totalorder %s23, 1
    %p67 = por %p65, %p66
    %p69 = scmp.ne.s32.totalorder %s54, %s68
    %p70 = scmp.eq.s32.totalorder %s23, 0
    %p71 = por %p69, %p70
    %s73 = sadd.s32 %s72, 1
    %p76 = scmp.eq.s32.totalorder %s17, 1
    %p77 = scmp.ne.s32.totalorder %s72, %s74
    %p78 = scmp.eq.s32.totalorder %s17, 0
    %p79 = por %p77, %p78
    %p80 = scmp.ne.s32.totalorder %s72, %s74
    %p81 = scmp.eq.s32.totalorder %s22, 1
    %p82 = por %p80, %p81
    %p83 = scmp.ne.s32.totalorder %s74, %s75
    %p84 = scmp.eq.s32.totalorder %s22, 0
    %p85 = por %p83, %p84
    %p86 = scmp.ne.s32.totalorder %s74, %s75
    %p87 = scmp.eq.s32.totalorder %s23, 1
    %p88 = por %p86, %p87
    %p90 = scmp.ne.s32.totalorder %s75, %s89
    %p91 = scmp.eq.s32.totalorder %s23, 0
    %p92 = por %p90, %p91
    %s94 = sadd.s32 %s93, 1
    %p97 = scmp.eq.s32.totalorder %s17, 1
    %p98 = scmp.ne.s32.totalorder %s93, %s95
    %p99 = scmp.eq.s32.totalorder %s17, 0
    %p100 = por %p98, %p99
    %p101 = scmp.ne.s32.totalorder %s93, %s95
    %p102 = scmp.eq.s32.totalorder %s22, 1
    %p103 = por %p101, %p102
    %p104 = scmp.ne.s32.totalorder %s95, %s96
    %p105 = scmp.eq.s32.totalorder %s22, 0
    %p106 = por %p104, %p105
    %p107 = scmp.ne.s32.totalorder %s95, %s96
    %p108 = scmp.eq.s32.totalorder %s23, 1
    %p109 = por %p107, %p108
    %p111 = scmp.ne.s32.totalorder %s96, %s110
    %p112 = scmp.eq.s32.totalorder %s23, 0
    %p113 = por %p111, %p112
    %s115 = sadd.s32 %s114, 1
    %p118 = scmp.eq.s32.totalorder %s17, 1
    %p119 = scmp.ne.s32.totalorder %s114, %s116
    %p120 = scmp.eq.s32.totalorder %s17, 0
    %p121 = por %p119, %p120
    %p122 = scmp.ne.s32.totalorder %s114, %s116
    %p123 = scmp.eq.s32.totalorder %s22, 1
    %p124 = por %p122, %p123
    %p125 = scmp.ne.s32.totalorder %s116, %s117
    %p126 = scmp.eq.s32.totalorder %s22, 0
    %p127 = por %p125, %p126
    %p128 = scmp.ne.s32.totalorder %s116, %s117
    %p129 = scmp.eq.s32.totalorder %s23, 1
    %p130 = por %p128, %p129
    %p132 = scmp.ne.s32.totalorder %s117, %s131
    %p133 = scmp.eq.s32.totalorder %s23, 0
    %p134 = por %p132, %p133
    %s136 = sadd.s32 %s135, 1
    %p139 = scmp.eq.s32.totalorder %s17, 1
    %p140 = scmp.ne.s32.totalorder %s135, %s137
    %p141 = scmp.eq.s32.totalorder %s17, 0
    %p142 = por %p140, %p141
    %p143 = scmp.ne.s32.totalorder %s135, %s137
    %p144 = scmp.eq.s32.totalorder %s22, 1
    %p145 = por %p143, %p144
    %p146 = scmp.ne.s32.totalorder %s137, %s138
    %p147 = scmp.eq.s32.totalorder %s22, 0
    %p148 = por %p146, %p147
    %p149 = scmp.ne.s32.totalorder %s137, %s138
    %p150 = scmp.eq.s32.totalorder %s23, 1
    %p151 = por %p149, %p150
    %p153 = scmp.ne.s32.totalorder %s138, %s152
    %p154 = scmp.eq.s32.totalorder %s23, 0
    %p155 = por %p153, %p154
    %s157 = sadd.s32 %s156, 1
    %p160 = scmp.eq.s32.totalorder %s17, 1
    %p161 = scmp.ne.s32.totalorder %s156, %s158
    %p162 = scmp.eq.s32.totalorder %s17, 0
    %p163 = por %p161, %p162
    %p164 = scmp.ne.s32.totalorder %s156, %s158
    %p165 = scmp.eq.s32.totalorder %s22, 1
    %p166 = por %p164, %p165
    %p167 = scmp.ne.s32.totalorder %s158, %s159
    %p168 = scmp.eq.s32.totalorder %s22, 0
    %p169 = por %p167, %p168
    %p170 = scmp.ne.s32.totalorder %s158, %s159
    %p171 = scmp.eq.s32.totalorder %s23, 1
    %p172 = por %p170, %p171
    %p174 = scmp.ne.s32.totalorder %s159, %s173
    %p175 = scmp.eq.s32.totalorder %s23, 0
    %p176 = por %p174, %p175
    %s178 = sadd.s32 %s177, 1
    %p181 = scmp.eq.s32.totalorder %s17, 1
    %p182 = scmp.ne.s32.totalorder %s177, %s179
    %p183 = scmp.eq.s32.totalorder %s17, 0
    %p184 = por %p182, %p183
    %p185 = scmp.ne.s32.totalorder %s177, %s179
    %p186 = scmp.eq.s32.totalorder %s22, 1
    %p187 = por %p185, %p186
    %p188 = scmp.ne.s32.totalorder %s179, %s180
    %p189 = scmp.eq.s32.totalorder %s22, 0
    %p190 = por %p188, %p189
    %p191 = scmp.ne.s32.totalorder %s179, %s180
    %p192 = scmp.eq.s32.totalorder %s23, 1
    %p193 = por %p191, %p192
    %p195 = scmp.ne.s32.totalorder %s180, %s194
    %p196 = scmp.eq.s32.totalorder %s23, 0
    %p197 = por %p195, %p196
    %s199 = sadd.s32 %s198, 1
    %p202 = scmp.eq.s32.totalorder %s17, 1
    %p203 = scmp.ne.s32.totalorder %s198, %s200
    %p204 = scmp.eq.s32.totalorder %s17, 0
    %p205 = por %p203, %p204
    %p206 = scmp.ne.s32.totalorder %s198, %s200
    %p207 = scmp.eq.s32.totalorder %s22, 1
    %p208 = por %p206, %p207
    %p209 = scmp.ne.s32.totalorder %s200, %s201
    %p210 = scmp.eq.s32.totalorder %s22, 0
    %p211 = por %p209, %p210
    %p212 = scmp.ne.s32.totalorder %s200, %s201
    %p213 = scmp.eq.s32.totalorder %s23, 1
    %p214 = por %p212, %p213
    %p216 = scmp.ne.s32.totalorder %s201, %s215
    %p217 = scmp.eq.s32.totalorder %s23, 0
    %p218 = por %p216, %p217
    %s220 = sadd.s32 %s219, 1
    %p223 = scmp.eq.s32.totalorder %s17, 1
    %p224 = scmp.ne.s32.totalorder %s219, %s221
    %p225 = scmp.eq.s32.totalorder %s17, 0
    %p226 = por %p224, %p225
    %p227 = scmp.ne.s32.totalorder %s219, %s221
    %p228 = scmp.eq.s32.totalorder %s22, 1
    %p229 = por %p227, %p228
    %p230 = scmp.ne.s32.totalorder %s221, %s222
    %p231 = scmp.eq.s32.totalorder %s22, 0
    %p232 = por %p230, %p231
    %p233 = scmp.ne.s32.totalorder %s221, %s222
    %p234 = scmp.eq.s32.totalorder %s23, 1
    %p235 = por %p233, %p234
    %p237 = scmp.ne.s32.totalorder %s222, %s236
    %p238 = scmp.eq.s32.totalorder %s23, 0
    %p239 = por %p237, %p238
    %s241 = sadd.s32 %s240, 1
    %p244 = scmp.eq.s32.totalorder %s17, 1
    %p245 = scmp.ne.s32.totalorder %s240, %s242
    %p246 = scmp.eq.s32.totalorder %s17, 0
    %p247 = por %p245, %p246
    %p248 = scmp.ne.s32.totalorder %s240, %s242
    %p249 = scmp.eq.s32.totalorder %s22, 1
    %p250 = por %p248, %p249
    %p251 = scmp.ne.s32.totalorder %s242, %s243
    %p252 = scmp.eq.s32.totalorder %s22, 0
    %p253 = por %p251, %p252
    %p254 = scmp.ne.s32.totalorder %s242, %s243
    %p255 = scmp.eq.s32.totalorder %s23, 1
    %p256 = por %p254, %p255
    %p258 = scmp.ne.s32.totalorder %s243, %s257
    %p259 = scmp.eq.s32.totalorder %s23, 0
    %p260 = por %p258, %p259
    %s261 = ssub.s32 %s17, %s24
    %p262 = scmp.eq.s32.totalorder %s261, 0
    %s264 = sadd.s32 %s263, 1
    %s265 = scalar_select %p262, %s263, %s264
    %p268 = pneg %p262
    %p269 = scmp.eq.s32.totalorder %s17, 1
    %p270 = por %p268, %p269
    %p271 = scmp.ne.s32.totalorder %s263, %s266
    %p272 = scmp.eq.s32.totalorder %s17, 0
    %p273 = por %p271, %p272
    %p274 = scmp.ne.s32.totalorder %s263, %s266
    %p275 = scmp.eq.s32.totalorder %s22, 1
    %p276 = por %p274, %p275
    %p277 = scmp.ne.s32.totalorder %s266, %s267
    %p278 = scmp.eq.s32.totalorder %s22, 0
    %p279 = por %p277, %p278
    %p280 = scmp.ne.s32.totalorder %s266, %s267
    %p281 = scmp.eq.s32.totalorder %s23, 1
    %p282 = por %p280, %p281
    %p284 = scmp.ne.s32.totalorder %s267, %s283
    %p285 = scmp.eq.s32.totalorder %s23, 0
    %p286 = por %p284, %p285
    %p287 = scmp.le.s32.totalorder 1, %s17
    %p288 = scmp.lt.s32.totalorder %s17, 3
    %p289 = pnand %p287, %p288
    %p290 = pneg %p289
    // Predicated region
    $region9: #{image_encoder_forward.7} parent=5 // pred_check
      _
    $region10: #{image_encoder_forward.7} parent=5 // pred_check_branch
      %292 = sbr.rel (%p289) target = $region12
    $region11: #{image_encoder_forward.7} parent=5 // pred_region
      %s293 = ssub.s32 %s17, 1
      // Predicated region
      $region13: #{image_encoder_forward.7} parent=11 // pred_check
        %p294 = pneg %p64
      $region14: #{image_encoder_forward.7} parent=11 // pred_check_branch
        %296 = sbr.rel (%p294) target = $region16
      $region15: #{image_encoder_forward.7} parent=11 // pred_region
        _
      $region16: #{image_encoder_forward.7} parent=11 // pred_fallthru
        _
      // Predicated region
      $region17: #{image_encoder_forward.7} parent=11 // pred_check
        %p297 = pneg %p85
      $region18: #{image_encoder_forward.7} parent=11 // pred_check_branch
        %299 = sbr.rel (%p297) target = $region20
      $region19: #{image_encoder_forward.7} parent=11 // pred_region
        _
      $region20: #{image_encoder_forward.7} parent=11 // pred_fallthru
        _
      // Predicated region
      $region21: #{image_encoder_forward.7} parent=11 // pred_check
        %p300 = pneg %p106
      $region22: #{image_encoder_forward.7} parent=11 // pred_check_branch
        %302 = sbr.rel (%p300) target = $region24
      $region23: #{image_encoder_forward.7} parent=11 // pred_region
        _
      $region24: #{image_encoder_forward.7} parent=11 // pred_fallthru
        _
      // Predicated region
      $region25: #{image_encoder_forward.7} parent=11 // pred_check
        %p303 = pneg %p127
      $region26: #{image_encoder_forward.7} parent=11 // pred_check_branch
        %305 = sbr.rel (%p303) target = $region28
      $region27: #{image_encoder_forward.7} parent=11 // pred_region
        _
      $region28: #{image_encoder_forward.7} parent=11 // pred_fallthru
        _
      // Predicated region
      $region29: #{image_encoder_forward.7} parent=11 // pred_check
        %p306 = pneg %p148
      $region30: #{image_encoder_forward.7} parent=11 // pred_check_branch
        %308 = sbr.rel (%p306) target = $region32
      $region31: #{image_encoder_forward.7} parent=11 // pred_region
        _
      $region32: #{image_encoder_forward.7} parent=11 // pred_fallthru
        _
      // Predicated region
      $region33: #{image_encoder_forward.7} parent=11 // pred_check
        %p309 = pneg %p169
      $region34: #{image_encoder_forward.7} parent=11 // pred_check_branch
        %311 = sbr.rel (%p309) target = $region36
      $region35: #{image_encoder_forward.7} parent=11 // pred_region
        _
      $region36: #{image_encoder_forward.7} parent=11 // pred_fallthru
        _
      // Predicated region
      $region37: #{image_encoder_forward.7} parent=11 // pred_check
        %p312 = pneg %p190
      $region38: #{image_encoder_forward.7} parent=11 // pred_check_branch
        %314 = sbr.rel (%p312) target = $region40
      $region39: #{image_encoder_forward.7} parent=11 // pred_region
        _
      $region40: #{image_encoder_forward.7} parent=11 // pred_fallthru
        _
      // Predicated region
      $region41: #{image_encoder_forward.7} parent=11 // pred_check
        %p315 = pneg %p211
      $region42: #{image_encoder_forward.7} parent=11 // pred_check_branch
        %317 = sbr.rel (%p315) target = $region44
      $region43: #{image_encoder_forward.7} parent=11 // pred_region
        _
      $region44: #{image_encoder_forward.7} parent=11 // pred_fallthru
        _
      // Predicated region
      $region45: #{image_encoder_forward.7} parent=11 // pred_check
        %p318 = pneg %p232
      $region46: #{image_encoder_forward.7} parent=11 // pred_check_branch
        %320 = sbr.rel (%p318) target = $region48
      $region47: #{image_encoder_forward.7} parent=11 // pred_region
        _
      $region48: #{image_encoder_forward.7} parent=11 // pred_fallthru
        _
      // Predicated region
      $region49: #{image_encoder_forward.7} parent=11 // pred_check
        %p321 = pneg %p253
      $region50: #{image_encoder_forward.7} parent=11 // pred_check_branch
        %323 = sbr.rel (%p321) target = $region52
      $region51: #{image_encoder_forward.7} parent=11 // pred_region
        _
      $region52: #{image_encoder_forward.7} parent=11 // pred_fallthru
        _
    $region12: #{image_encoder_forward.7} parent=5 // pred_fallthru
      _
    %p324 = scmp.lt.s32.totalorder %s17, 2
    // Predicated region
    $region53: #{image_encoder_forward.7} parent=5 // pred_check
      %p325 = pneg %p324
    $region54: #{image_encoder_forward.7} parent=5 // pred_check_branch
      %327 = sbr.rel (%p325) target = $region56
    $region55: #{image_encoder_forward.7} parent=5 // pred_region
      // Predicated region
      $region57: #{image_encoder_forward.7} parent=55 // pred_check
        %p328 = pneg %p37
      $region58: #{image_encoder_forward.7} parent=55 // pred_check_branch
        %330 = sbr.rel (%p328) target = $region60
      $region59: #{image_encoder_forward.7} parent=55 // pred_region
        %p331 = scmp.lt.s32.totalorder %s17, 1
        %s332 = scalar_select %p331, %s17, 1
        %s333 = smul.addr %s332, 3
        %s334 = smul.addr %s333, 4
        %s335 = scalar_lea.vmem %s0, %s334
      $region60: #{image_encoder_forward.7} parent=55 // pred_fallthru
        _
    $region56: #{image_encoder_forward.7} parent=5 // pred_fallthru
      _
    %p336 = scmp.le.s32.totalorder 1, %s17
    %p337 = scmp.lt.s32.totalorder %s17, 3
    %p338 = pnand %p336, %p337
    %p339 = pneg %p338
    // Predicated region
    $region61: #{image_encoder_forward.7} parent=5 // pred_check
      _
    $region62: #{image_encoder_forward.7} parent=5 // pred_check_branch
      %341 = sbr.rel (%p338) target = $region64
    $region63: #{image_encoder_forward.7} parent=5 // pred_region
      %s342 = ssub.s32 %s17, 1
      %p343 = scmp.lt.s32.totalorder %s22, 1
      %s344 = scalar_select %p343, %s22, 1
      %s345 = smul.addr %s344, 3
      %s346 = smul.addr %s345, 4
      %s347 = scalar_lea.vmem %s0, %s346
      %p348 = pneg %p43
      %p349 = pneg %p40
      %p350 = pneg %p64
      %p351 = pneg %p61
      %p352 = pneg %p85
      %p353 = pneg %p82
      %p354 = pneg %p106
      %p355 = pneg %p103
      %p356 = pneg %p127
      %p357 = pneg %p124
      %p358 = pneg %p148
      %p359 = pneg %p145
      %p360 = pneg %p169
      %p361 = pneg %p166
      %p362 = pneg %p190
      %p363 = pneg %p187
      %p364 = pneg %p211
      %p365 = pneg %p208
      %p366 = pneg %p232
      %p367 = pneg %p229
      %p368 = pneg %p253
      %p369 = pneg %p250
      %p370 = pneg %p279
      %p371 = pneg %p276
      %p372 = scmp.lt.s32.totalorder %s22, 1
      %s373 = scalar_select %p372, %s22, 1
      %s374 = smul.addr %s373, 3
      %s375 = smul.addr %s374, 4
      %s376 = scalar_lea.vmem %s11, %s375
      %p377 = scmp.lt.s32.totalorder %s22, 1
      %s378 = scalar_select %p377, %s22, 1
      %s379 = smul.addr %s378, 3
      %s380 = smul.addr %s379, 4
      %s381 = scalar_lea.vmem %s0, %s380
      %p382 = scmp.lt.s32.totalorder %s22, 1
      %s383 = scalar_select %p382, %s22, 1
      %s384 = smul.addr %s383, 3
      %s385 = smul.addr %s384, 4
      %s386 = scalar_lea.vmem %s11, %s385
      %v388 = vld [vmem:[%s381] sm:$0xf]
      %v389 = vld [vmem:[%s381 + $0x4] sm:$0xf]
      %v390 = vld [vmem:[%s381 + $0x8] sm:$0xf]
      %v391 = vunpack.c.l.bf16 %v388
      %v392 = vunpack.c.l.bf16 %v389
      %v393 = vunpack.c.l.bf16 %v390
      %v394 = vld [vmem:[%s1] sm:$0x1]
      %v395 = vld [vmem:[%s2] sm:$0x1]
      %396 = vadd.xlane.f32.xlu0 %v391
      %v397 = vpop.xlane.xlu0 %396
      %398 = vadd.xlane.f32.xlu0 %v392
      %v399 = vpop.xlane.xlu0 %398
      %400 = vadd.xlane.f32.xlu0 %v393
      %v401 = vpop.xlane.xlu0 %400
      %v402 = vrcp.pop 128.0
      %v403 = vmul.f32 %v397, %v402
      %v404 = vmul.f32 %v399, %v402
      %v405 = vmul.f32 %v401, %v402
      %v406 = vsub.f32 %v391, %v403
      %v407 = vsub.f32 %v392, %v404
      %v408 = vsub.f32 %v393, %v405
      %v409 = vmul.f32 %v406, %v406
      %v410 = vmul.f32 %v407, %v407
      %v411 = vmul.f32 %v408, %v408
      %412 = vadd.xlane.f32.xlu0 %v409
      %v413 = vpop.xlane.xlu0 %412
      %414 = vadd.xlane.f32.xlu0 %v410
      %v415 = vpop.xlane.xlu0 %414
      %416 = vadd.xlane.f32.xlu0 %v411
      %v417 = vpop.xlane.xlu0 %416
      %v418 = vmul.f32 %v413, %v402
      %v419 = vmul.f32 %v415, %v402
      %v420 = vmul.f32 %v417, %v402
      %v421 = vadd.f32 %v418, 1e-05
      %v422 = vadd.f32 %v419, 1e-05
      %v423 = vadd.f32 %v420, 1e-05
      %v424 = vrsqrt.pop %v421
      %v425 = vrsqrt.pop %v422
      %v426 = vrsqrt.pop %v423
      %v427 = vmul.f32 %v406, %v424
      %v428 = vmul.f32 %v407, %v425
      %v429 = vmul.f32 %v408, %v426
      %v431 = vlaneseq
      %v432 = vshrl.u32 %v431, 7
      %v433 = vsub.s32 0, %v432
      %v434 = vrot.slane %v394, %v433
      %v436 = vmul.f32 %v427, %v434
      %v437 = vmul.f32 %v428, %v434
      %v438 = vmul.f32 %v429, %v434
      %v440 = vlaneseq
      %v441 = vshrl.u32 %v440, 7
      %v442 = vsub.s32 0, %v441
      %v443 = vrot.slane %v395, %v442
      %v445 = vadd.f32 %v436, %v443
      %v446 = vadd.f32 %v437, %v443
      %v447 = vadd.f32 %v438, %v443
      %v448 = vpack.c.bf16 %v446, %v445
      %v449 = vpack.c.bf16 %v447, %v447
      %v450 = vlaneseq
      %v451 = vand.u32 %v450, 127
      %vm452 = vcmp.lt.s32.totalorder %v451, 17
      %v453 = vld [vmem:[%s3] sm:$0xf]
      %v454 = vld [vmem:[%s3 + $0x4] sm:$0xf]
      %v455 = vld [vmem:[%s3 + $0x8] sm:$0xf]
      %v456 = vld [vmem:[%s3 + $0xc] sm:$0xf]
      %v457 = vld [vmem:[%s3 + $0x10] sm:$0xf]
      %v458 = vld [vmem:[%s3 + $0x14] sm:$0xf]
      %v459 = vld [vmem:[%s3 + $0x18] sm:$0xf]
      %v460 = vld [vmem:[%s3 + $0x1c] sm:$0xf]
      %v461 = vld [vmem:[%s3 + $0x20] sm:$0xf]
      %v462 = vld [vmem:[%s3 + $0x24] sm:$0xf]
      %v463 = vld [vmem:[%s3 + $0x28] sm:$0xf]
      %v464 = vld [vmem:[%s3 + $0x2c] sm:$0xf]
      %v465 = vld [vmem:[%s3 + $0x30] sm:$0xf]
      %v466 = vld [vmem:[%s3 + $0x34] sm:$0xf]
      %v467 = vld [vmem:[%s3 + $0x38] sm:$0xf]
      %v468 = vld [vmem:[%s3 + $0x3c] sm:$0xf]
      %v469 = vld [vmem:[%s6] sm:$0x1]
      %v471 = vlaneseq
      %v472 = vshrl.u32 %v471, 7
      %v473 = vsub.s32 0, %v472
      %v474 = vrot.slane %v469, %v473
      %v492 = vunpack.c.l.b16 %v453
      %v493 = vunpack.c.l.b16 %v454
      %v494 = vunpack.c.l.b16 %v455
      %v495 = vunpack.c.l.b16 %v456
      %v496 = vunpack.c.l.b16 %v457
      %v497 = vunpack.c.l.b16 %v458
      %v498 = vunpack.c.l.b16 %v459
      %v499 = vunpack.c.l.b16 %v460
      %v500 = vunpack.c.l.b16 %v461
      %v501 = vunpack.c.l.b16 %v462
      %v502 = vunpack.c.l.b16 %v463
      %v503 = vunpack.c.l.b16 %v464
      %v504 = vunpack.c.l.b16 %v465
      %v505 = vunpack.c.l.b16 %v466
      %v506 = vunpack.c.l.b16 %v467
      %v507 = vunpack.c.l.b16 %v468
      %v508 = vpack.c.b16 %v493, %v492
      %v509 = vpack.c.b16 %v495, %v494
      %v510 = vpack.c.b16 %v497, %v496
      %v511 = vpack.c.b16 %v499, %v498
      %v512 = vpack.c.b16 %v501, %v500
      %v513 = vpack.c.b16 %v503, %v502
      %v514 = vpack.c.b16 %v505, %v504
      %v515 = vpack.c.b16 %v507, %v506
      %524 = vmatprep.subr.bf16.mxu0 0
      %525 = vmatpush1.bf16.msra.mxu0 %v508
      %526 = vmatprep.subr.bf16.mxu0 0
      %527 = vmatpush1.bf16.msra.mxu0 %v509
      %528 = vmatprep.subr.bf16.mxu0 0
      %529 = vmatpush1.bf16.msra.mxu0 %v510
      %530 = vmatprep.subr.bf16.mxu0 0
      %531 = vmatpush1.bf16.msra.mxu0 %v511
      %532 = vmatprep.subr.bf16.mxu0 0
      %533 = vmatpush1.bf16.msra.mxu0 %v512
      %534 = vmatprep.subr.bf16.mxu0 0
      %535 = vmatpush1.bf16.msra.mxu0 %v513
      %536 = vmatprep.subr.bf16.mxu0 0
      %537 = vmatpush1.bf16.msra.mxu0 %v514
      %538 = vmatprep.subr.bf16.mxu0 0
      %539 = vmatpush1.bf16.msra.mxu0 %v515
      %540 = vmatprep.subr.bf16.mxu0 0
      %541 = vmatpush1.bf16.msra.mxu0 0
      %542 = vmatprep.subr.bf16.mxu0 0
      %543 = vmatpush1.bf16.msra.mxu0 0
      %544 = vmatprep.subr.bf16.mxu0 0
      %545 = vmatpush1.bf16.msra.mxu0 0
      %546 = vmatprep.subr.bf16.mxu0 0
      %547 = vmatpush1.bf16.msra.mxu0 0
      %548 = vmatprep.subr.bf16.mxu0 0
      %549 = vmatpush1.bf16.msra.mxu0 0
      %550 = vmatprep.subr.bf16.mxu0 0
      %551 = vmatpush1.bf16.msra.mxu0 0
      %552 = vmatprep.subr.bf16.mxu0 0
      %553 = vmatpush1.bf16.msra.mxu0 0
      %554 = vmatprep.subr.bf16.mxu0 0
      %555 = vmatpush1.bf16.msra.mxu0 0
      %556 = vmatprep.mubr.bf16.mxu0 0
      %557 = vmatmul.mubr.bf16.gmra.mrb[0].mxu0 %v448
      %v558 = vpop.f32.mrb[0].mxu0
      %v559 = vadd.f32 %v474, %v558
      %v560 = vpop.f32.mrb[0].mxu0
      %v561 = vpop.f32.mrb[0].mxu0
      %v562 = vadd.f32 %v474, %v561
      %v563 = vpop.f32.mrb[0].mxu0
      %564 = vmatprep.mubr.bf16.mxu0 0
      %565 = vmatmul.mubr.bf16.gmra.mrb[0].mxu0 %v449
      %v566 = vpop.f32.mrb[0].mxu0
      %v567 = vadd.f32 %v474, %v566
      %v568 = vpop.f32.mrb[0].mxu0
      %v569 = vpop.f32.mrb[0].mxu0
      %v570 = vpop.f32.mrb[0].mxu0
      %571 = vdwg.mxu0
      %v572 = vld [vmem:[%s4] sm:$0xf]
      %v573 = vld [vmem:[%s4 + $0x4] sm:$0xf]
      %v574 = vld [vmem:[%s4 + $0x8] sm:$0xf]
      %v575 = vld [vmem:[%s4 + $0xc] sm:$0xf]
      %v576 = vld [vmem:[%s4 + $0x10] sm:$0xf]
      %v577 = vld [vmem:[%s4 + $0x14] sm:$0xf]
      %v578 = vld [vmem:[%s4 + $0x18] sm:$0xf]
      %v579 = vld [vmem:[%s4 + $0x1c] sm:$0xf]
      %v580 = vld [vmem:[%s4 + $0x20] sm:$0xf]
      %v581 = vld [vmem:[%s4 + $0x24] sm:$0xf]
      %v582 = vld [vmem:[%s4 + $0x28] sm:$0xf]
      %v583 = vld [vmem:[%s4 + $0x2c] sm:$0xf]
      %v584 = vld [vmem:[%s4 + $0x30] sm:$0xf]
      %v585 = vld [vmem:[%s4 + $0x34] sm:$0xf]
      %v586 = vld [vmem:[%s4 + $0x38] sm:$0xf]
      %v587 = vld [vmem:[%s4 + $0x3c] sm:$0xf]
      %v588 = vld [vmem:[%s7] sm:$0x1]
      %v590 = vlaneseq
      %v591 = vshrl.u32 %v590, 7
      %v592 = vsub.s32 0, %v591
      %v593 = vrot.slane %v588, %v592
      %v611 = vunpack.c.l.b16 %v572
      %v612 = vunpack.c.l.b16 %v573
      %v613 = vunpack.c.l.b16 %v574
      %v614 = vunpack.c.l.b16 %v575
      %v615 = vunpack.c.l.b16 %v576
      %v616 = vunpack.c.l.b16 %v577
      %v617 = vunpack.c.l.b16 %v578
      %v618 = vunpack.c.l.b16 %v579
      %v619 = vunpack.c.l.b16 %v580
      %v620 = vunpack.c.l.b16 %v581
      %v621 = vunpack.c.l.b16 %v582
      %v622 = vunpack.c.l.b16 %v583
      %v623 = vunpack.c.l.b16 %v584
      %v624 = vunpack.c.l.b16 %v585
      %v625 = vunpack.c.l.b16 %v586
      %v626 = vunpack.c.l.b16 %v587
      %v627 = vpack.c.b16 %v612, %v611
      %v628 = vpack.c.b16 %v614, %v613
      %v629 = vpack.c.b16 %v616, %v615
      %v630 = vpack.c.b16 %v618, %v617
      %v631 = vpack.c.b16 %v620, %v619
      %v632 = vpack.c.b16 %v622, %v621
      %v633 = vpack.c.b16 %v624, %v623
      %v634 = vpack.c.b16 %v626, %v625
      %643 = vmatprep.subr.bf16.mxu0 0
      %644 = vmatpush1.bf16.msra.mxu0 %v627
      %645 = vmatprep.subr.bf16.mxu0 0
      %646 = vmatpush1.bf16.msra.mxu0 %v628
      %647 = vmatprep.subr.bf16.mxu0 0
      %648 = vmatpush1.bf16.msra.mxu0 %v629
      %649 = vmatprep.subr.bf16.mxu0 0
      %650 = vmatpush1.bf16.msra.mxu0 %v630
      %651 = vmatprep.subr.bf16.mxu0 0
      %652 = vmatpush1.bf16.msra.mxu0 %v631
      %653 = vmatprep.subr.bf16.mxu0 0
      %654 = vmatpush1.bf16.msra.mxu0 %v632
      %655 = vmatprep.subr.bf16.mxu0 0
      %656 = vmatpush1.bf16.msra.mxu0 %v633
      %657 = vmatprep.subr.bf16.mxu0 0
      %658 = vmatpush1.bf16.msra.mxu0 %v634
      %659 = vmatprep.subr.bf16.mxu0 0
      %660 = vmatpush1.bf16.msra.mxu0 0
      %661 = vmatprep.subr.bf16.mxu0 0
      %662 = vmatpush1.bf16.msra.mxu0 0
      %663 = vmatprep.subr.bf16.mxu0 0
      %664 = vmatpush1.bf16.msra.mxu0 0
      %665 = vmatprep.subr.bf16.mxu0 0
      %666 = vmatpush1.bf16.msra.mxu0 0
      %667 = vmatprep.subr.bf16.mxu0 0
      %668 = vmatpush1.bf16.msra.mxu0 0
      %669 = vmatprep.subr.bf16.mxu0 0
      %670 = vmatpush1.bf16.msra.mxu0 0
      %671 = vmatprep.subr.bf16.mxu0 0
      %672 = vmatpush1.bf16.msra.mxu0 0
      %673 = vmatprep.subr.bf16.mxu0 0
      %674 = vmatpush1.bf16.msra.mxu0 0
      %675 = vmatprep.mubr.bf16.mxu0 0
      %676 = vmatmul.mubr.bf16.gmra.mrb[0].mxu0 %v448
      %v677 = vpop.f32.mrb[0].mxu0
      %v678 = vadd.f32 %v593, %v677
      %v679 = vpop.f32.mrb[0].mxu0
      %v680 = vpop.f32.mrb[0].mxu0
      %v681 = vadd.f32 %v593, %v680
      %v682 = vpop.f32.mrb[0].mxu0
      %683 = vmatprep.mubr.bf16.mxu0 0
      %684 = vmatmul.mubr.bf16.gmra.mrb[0].mxu0 %v449
      %v685 = vpop.f32.mrb[0].mxu0
      %v686 = vadd.f32 %v593, %v685
      %v687 = vpop.f32.mrb[0].mxu0
      %v688 = vpop.f32.mrb[0].mxu0
      %v689 = vpop.f32.mrb[0].mxu0
      %690 = vdwg.mxu0
      %v691 = vld [vmem:[%s5] sm:$0xf]
      %v692 = vld [vmem:[%s5 + $0x4] sm:$0xf]
      %v693 = vld [vmem:[%s5 + $0x8] sm:$0xf]
      %v694 = vld [vmem:[%s5 + $0xc] sm:$0xf]
      %v695 = vld [vmem:[%s5 + $0x10] sm:$0xf]
      %v696 = vld [vmem:[%s5 + $0x14] sm:$0xf]
      %v697 = vld [vmem:[%s5 + $0x18] sm:$0xf]
      %v698 = vld [vmem:[%s5 + $0x1c] sm:$0xf]
      %v699 = vld [vmem:[%s5 + $0x20] sm:$0xf]
      %v700 = vld [vmem:[%s5 + $0x24] sm:$0xf]
      %v701 = vld [vmem:[%s5 + $0x28] sm:$0xf]
      %v702 = vld [vmem:[%s5 + $0x2c] sm:$0xf]
      %v703 = vld [vmem:[%s5 + $0x30] sm:$0xf]
      %v704 = vld [vmem:[%s5 + $0x34] sm:$0xf]
      %v705 = vld [vmem:[%s5 + $0x38] sm:$0xf]
      %v706 = vld [vmem:[%s5 + $0x3c] sm:$0xf]
      %v707 = vld [vmem:[%s8] sm:$0x1]
      %v709 = vlaneseq
      %v710 = vshrl.u32 %v709, 7
      %v711 = vsub.s32 0, %v710
      %v712 = vrot.slane %v707, %v711
      %v730 = vunpack.c.l.b16 %v691
      %v731 = vunpack.c.l.b16 %v692
      %v732 = vunpack.c.l.b16 %v693
      %v733 = vunpack.c.l.b16 %v694
      %v734 = vunpack.c.l.b16 %v695
      %v735 = vunpack.c.l.b16 %v696
      %v736 = vunpack.c.l.b16 %v697
      %v737 = vunpack.c.l.b16 %v698
      %v738 = vunpack.c.l.b16 %v699
      %v739 = vunpack.c.l.b16 %v700
      %v740 = vunpack.c.l.b16 %v701
      %v741 = vunpack.c.l.b16 %v702
      %v742 = vunpack.c.l.b16 %v703
      %v743 = vunpack.c.l.b16 %v704
      %v744 = vunpack.c.l.b16 %v705
      %v745 = vunpack.c.l.b16 %v706
      %v746 = vpack.c.b16 %v731, %v730
      %v747 = vpack.c.b16 %v733, %v732
      %v748 = vpack.c.b16 %v735, %v734
      %v749 = vpack.c.b16 %v737, %v736
      %v750 = vpack.c.b16 %v739, %v738
      %v751 = vpack.c.b16 %v741, %v740
      %v752 = vpack.c.b16 %v743, %v742
      %v753 = vpack.c.b16 %v745, %v744
      %762 = vmatprep.subr.bf16.mxu0 0
      %763 = vmatpush1.bf16.msra.mxu0 %v746
      %764 = vmatprep.subr.bf16.mxu0 0
      %765 = vmatpush1.bf16.msra.mxu0 %v747
      %766 = vmatprep.subr.bf16.mxu0 0
      %767 = vmatpush1.bf16.msra.mxu0 %v748
      %768 = vmatprep.subr.bf16.mxu0 0
      %769 = vmatpush1.bf16.msra.mxu0 %v749
      %770 = vmatprep.subr.bf16.mxu0 0
      %771 = vmatpush1.bf16.msra.mxu0 %v750
      %772 = vmatprep.subr.bf16.mxu0 0
      %773 = vmatpush1.bf16.msra.mxu0 %v751
      %774 = vmatprep.subr.bf16.mxu0 0
      %775 = vmatpush1.bf16.msra.mxu0 %v752
      %776 = vmatprep.subr.bf16.mxu0 0
      %777 = vmatpush1.bf16.msra.mxu0 %v753
      %778 = vmatprep.subr.bf16.mxu0 0
      %779 = vmatpush1.bf16.msra.mxu0 0
      %780 = vmatprep.subr.bf16.mxu0 0
      %781 = vmatpush1.bf16.msra.mxu0 0
      %782 = vmatprep.subr.bf16.mxu0 0
      %783 = vmatpush1.bf16.msra.mxu0 0
      %784 = vmatprep.subr.bf16.mxu0 0
      %785 = vmatpush1.bf16.msra.mxu0 0
      %786 = vmatprep.subr.bf16.mxu0 0
      %787 = vmatpush1.bf16.msra.mxu0 0
      %788 = vmatprep.subr.bf16.mxu0 0
      %789 = vmatpush1.bf16.msra.mxu0 0
      %790 = vmatprep.subr.bf16.mxu0 0
      %791 = vmatpush1.bf16.msra.mxu0 0
      %792 = vmatprep.subr.bf16.mxu0 0
      %793 = vmatpush1.bf16.msra.mxu0 0
      %794 = vmatprep.mubr.bf16.mxu0 0
      %795 = vmatmul.mubr.bf16.gmra.mrb[0].mxu0 %v448
      %v796 = vpop.f32.mrb[0].mxu0
      %v797 = vadd.f32 %v712, %v796
      %v798 = vpop.f32.mrb[0].mxu0
      %v799 = vpop.f32.mrb[0].mxu0
      %v800 = vadd.f32 %v712, %v799
      %v801 = vpop.f32.mrb[0].mxu0
      %802 = vmatprep.mubr.bf16.mxu0 0
      %803 = vmatmul.mubr.bf16.gmra.mrb[0].mxu0 %v449
      %v804 = vpop.f32.mrb[0].mxu0
      %v805 = vadd.f32 %v712, %v804
      %v806 = vpop.f32.mrb[0].mxu0
      %v807 = vpop.f32.mrb[0].mxu0
      %v808 = vpop.f32.mrb[0].mxu0
      %809 = vdwg.mxu0
      %v810 = vpack.c.bf16 %v562, %v559
      %v811 = vpack.c.bf16 %v567, %v567
      %v812 = vpack.c.bf16 %v681, %v678
      %v813 = vpack.c.bf16 %v686, %v686
      %vm814 = vcmask 261120
      %v816 = vsel %vm814, %v810, 0
      %v819 = vsel %vm814, %v811, 0
      %v822 = vsel %vm814, %v812, 0
      %v825 = vsel %vm814, %v813, 0
      %827 = vmatprep.subr.bf16.mxu0 0
      %828 = vmatpush1.bf16.xpose.msra.mxu0 %v822
      %829 = vmatprep.subr.bf16.mxu0 0
      %830 = vmatpush1.bf16.xpose.msra.mxu0 %v825
      %831 = vmatprep.subr.bf16.mxu0 0
      %832 = vmatpush1.bf16.xpose.msra.mxu0 0
      %833 = vmatprep.subr.bf16.mxu0 0
      %834 = vmatpush1.bf16.xpose.msra.mxu0 0
      %835 = vmatprep.subr.bf16.mxu0 0
      %836 = vmatpush1.bf16.xpose.msra.mxu0 0
      %837 = vmatprep.subr.bf16.mxu0 0
      %838 = vmatpush1.bf16.xpose.msra.mxu0 0
      %839 = vmatprep.subr.bf16.mxu0 0
      %840 = vmatpush1.bf16.xpose.msra.mxu0 0
      %841 = vmatprep.subr.bf16.mxu0 0
      %842 = vmatpush1.bf16.xpose.msra.mxu0 0
      %843 = vmatprep.subr.bf16.mxu0 0
      %844 = vmatpush1.bf16.xpose.msra.mxu0 0
      %845 = vmatprep.subr.bf16.mxu0 0
      %846 = vmatpush1.bf16.xpose.msra.mxu0 0
      %847 = vmatprep.subr.bf16.mxu0 0
      %848 = vmatpush1.bf16.xpose.msra.mxu0 0
      %849 = vmatprep.subr.bf16.mxu0 0
      %850 = vmatpush1.bf16.xpose.msra.mxu0 0
      %851 = vmatprep.subr.bf16.mxu0 0
      %852 = vmatpush1.bf16.xpose.msra.mxu0 0
      %853 = vmatprep.subr.bf16.mxu0 0
      %854 = vmatpush1.bf16.xpose.msra.mxu0 0
      %855 = vmatprep.subr.bf16.mxu0 0
      %856 = vmatpush1.bf16.xpose.msra.mxu0 0
      %857 = vmatprep.subr.bf16.mxu0 0
      %858 = vmatpush1.bf16.xpose.msra.mxu0 0
      %859 = vmatprep.mubr.bf16.mxu0 0
      %860 = vmatmul.mubr.bf16.gmra.mrb[0].mxu0 %v816
      %v861 = vpop.f32.mrb[0].mxu0
      %v862 = vadd.f32 0.0, %v861
      %v863 = vpop.f32.mrb[0].mxu0
      %v864 = vpop.f32.mrb[0].mxu0
      %v865 = vadd.f32 0.0, %v864
      %v866 = vpop.f32.mrb[0].mxu0
      %867 = vmatprep.mubr.bf16.mxu0 0
      %868 = vmatmul.mubr.bf16.gmra.mrb[0].mxu0 %v819
      %v869 = vpop.f32.mrb[0].mxu0
      %v870 = vadd.f32 0.0, %v869
      %v871 = vpop.f32.mrb[0].mxu0
      %v872 = vpop.f32.mrb[0].mxu0
      %v873 = vpop.f32.mrb[0].mxu0
      %874 = vdwg.mxu0
      %v875 = vmul.f32 %v862, 0.17677669
      %v876 = vmul.f32 %v865, 0.17677669
      %v877 = vmul.f32 %v870, 0.17677669
      %v878 = vsel %vm452, %v875, -1e+30
      %v879 = vsel %vm452, %v876, -1e+30
      %v880 = vsel %vm452, %v877, -1e+30
      %vm881 = vcmask 195584
      %v882 = vsel %vm881, %v878, -inf
      %883 = vmax.xlane.f32.xlu0 %v882
      %v884 = vpop.xlane.xlu0 %883
      %v885 = vsel %vm881, %v879, -inf
      %886 = vmax.xlane.f32.xlu0 %v885
      %v887 = vpop.xlane.xlu0 %886
      %v888 = vsel %vm881, %v880, -inf
      %889 = vmax.xlane.f32.xlu0 %v888
      %v890 = vpop.xlane.xlu0 %889
      %v891 = vsub.f32 %v878, %v884
      %v892 = vsub.f32 %v879, %v887
      %v893 = vsub.f32 %v880, %v890
      %v894 = vmul.f32 %v891, 1.442695
      %v895 = vpow.pop %v894
      %v896 = vmul.f32 %v892, 1.442695
      %v897 = vpow.pop %v896
      %v898 = vmul.f32 %v893, 1.442695
      %v899 = vpow.pop %v898
      %v900 = vsel %vm881, %v895, 0.0
      %901 = vadd.xlane.f32.xlu0 %v900
      %v902 = vpop.xlane.xlu0 %901
      %v903 = vsel %vm881, %v897, 0.0
      %904 = vadd.xlane.f32.xlu0 %v903
      %v905 = vpop.xlane.xlu0 %904
      %v906 = vsel %vm881, %v899, 0.0
      %907 = vadd.xlane.f32.xlu0 %v906
      %v908 = vpop.xlane.xlu0 %907
      %v909 = vrcp.pop %v902
      %v910 = vrcp.pop %v905
      %v911 = vrcp.pop %v908
      %v912 = vmul.f32 %v895, %v909
      %v913 = vmul.f32 %v897, %v910
      %v914 = vmul.f32 %v899, %v911
      %v915 = vpack.c.bf16 %v913, %v912
      %v916 = vpack.c.bf16 %v914, %v914
      %v917 = vpack.c.bf16 %v800, %v797
      %v918 = vpack.c.bf16 %v805, %v805
      %v920 = vsel %vm881, %v915, 0
      %v923 = vsel %vm881, %v916, 0
      %vm925 = vcmask 1043456
      %v927 = vsel %vm925, %v918, 0
      %929 = vmatprep.subr.bf16.mxu0 0
      %930 = vmatpush1.bf16.msra.mxu0 %v917
      %931 = vmatprep.subr.bf16.mxu0 0
      %932 = vmatpush1.bf16.msra.mxu0 %v927
      %933 = vmatprep.subr.bf16.mxu0 0
      %934 = vmatpush1.bf16.msra.mxu0 0
      %935 = vmatprep.subr.bf16.mxu0 0
      %936 = vmatpush1.bf16.msra.mxu0 0
      %937 = vmatprep.subr.bf16.mxu0 0
      %938 = vmatpush1.bf16.msra.mxu0 0
      %939 = vmatprep.subr.bf16.mxu0 0
      %940 = vmatpush1.bf16.msra.mxu0 0
      %941 = vmatprep.subr.bf16.mxu0 0
      %942 = vmatpush1.bf16.msra.mxu0 0
      %943 = vmatprep.subr.bf16.mxu0 0
      %944 = vmatpush1.bf16.msra.mxu0 0
      %945 = vmatprep.subr.bf16.mxu0 0
      %946 = vmatpush1.bf16.msra.mxu0 0
      %947 = vmatprep.subr.bf16.mxu0 0
      %948 = vmatpush1.bf16.msra.mxu0 0
      %949 = vmatprep.subr.bf16.mxu0 0
      %950 = vmatpush1.bf16.msra.mxu0 0
      %951 = vmatprep.subr.bf16.mxu0 0
      %952 = vmatpush1.bf16.msra.mxu0 0
      %953 = vmatprep.subr.bf16.mxu0 0
      %954 = vmatpush1.bf16.msra.mxu0 0
      %955 = vmatprep.subr.bf16.mxu0 0
      %956 = vmatpush1.bf16.msra.mxu0 0
      %957 = vmatprep.subr.bf16.mxu0 0
      %958 = vmatpush1.bf16.msra.mxu0 0
      %959 = vmatprep.subr.bf16.mxu0 0
      %960 = vmatpush1.bf16.msra.mxu0 0
      %961 = vmatprep.mubr.bf16.mxu0 0
      %962 = vmatmul.mubr.bf16.gmra.mrb[0].mxu0 %v920
      %v963 = vpop.f32.mrb[0].mxu0
      %v964 = vadd.f32 0.0, %v963
      %v965 = vpop.f32.mrb[0].mxu0
      %v966 = vpop.f32.mrb[0].mxu0
      %v967 = vadd.f32 0.0, %v966
      %v968 = vpop.f32.mrb[0].mxu0
      %969 = vmatprep.mubr.bf16.mxu0 0
      %970 = vmatmul.mubr.bf16.gmra.mrb[0].mxu0 %v923
      %v971 = vpop.f32.mrb[0].mxu0
      %v972 = vadd.f32 0.0, %v971
      %v973 = vpop.f32.mrb[0].mxu0
      %v974 = vpop.f32.mrb[0].mxu0
      %v975 = vpop.f32.mrb[0].mxu0
      %976 = vdwg.mxu0
      %v977 = vpack.c.bf16 %v967, %v964
      %v978 = vpack.c.bf16 %v972, %v972
      %v979 = vld [vmem:[%s9] sm:$0xf]
      %v980 = vld [vmem:[%s9 + $0x4] sm:$0xf]
      %v981 = vld [vmem:[%s9 + $0x8] sm:$0xf]
      %v982 = vld [vmem:[%s9 + $0xc] sm:$0xf]
      %s983 = scalar_lea.vmem %s3, 64
      %v984 = vld [vmem:[%s983] sm:$0xf]
      %v985 = vld [vmem:[%s983 + $0x4] sm:$0xf]
      %v986 = vld [vmem:[%s983 + $0x8] sm:$0xf]
      %v987 = vld [vmem:[%s983 + $0xc] sm:$0xf]
      %v988 = vld [vmem:[%s983 + $0x10] sm:$0xf]
      %v989 = vld [vmem:[%s983 + $0x14] sm:$0xf]
      %v990 = vld [vmem:[%s983 + $0x18] sm:$0xf]
      %v991 = vld [vmem:[%s983 + $0x1c] sm:$0xf]
      %v992 = vld [vmem:[%s983 + $0x20] sm:$0xf]
      %v993 = vld [vmem:[%s983 + $0x24] sm:$0xf]
      %v994 = vld [vmem:[%s983 + $0x28] sm:$0xf]
      %v995 = vld [vmem:[%s983 + $0x2c] sm:$0xf]
      %v996 = vld [vmem:[%s983 + $0x30] sm:$0xf]
      %v997 = vld [vmem:[%s983 + $0x34] sm:$0xf]
      %v998 = vld [vmem:[%s983 + $0x38] sm:$0xf]
      %v999 = vld [vmem:[%s983 + $0x3c] sm:$0xf]
      %s1000 = scalar_lea.vmem %s6, 1
      %v1001 = vld [vmem:[%s1000] sm:$0x1]
      %v1003 = vlaneseq
      %v1004 = vshrl.u32 %v1003, 7
      %v1005 = vsub.s32 0, %v1004
      %v1006 = vrot.slane %v1001, %v1005
      %v1024 = vunpack.c.l.b16 %v984
      %v1025 = vunpack.c.l.b16 %v985
      %v1026 = vunpack.c.l.b16 %v986
      %v1027 = vunpack.c.l.b16 %v987
      %v1028 = vunpack.c.l.b16 %v988
      %v1029 = vunpack.c.l.b16 %v989
      %v1030 = vunpack.c.l.b16 %v990
      %v1031 = vunpack.c.l.b16 %v991
      %v1032 = vunpack.c.l.b16 %v992
      %v1033 = vunpack.c.l.b16 %v993
      %v1034 = vunpack.c.l.b16 %v994
      %v1035 = vunpack.c.l.b16 %v995
      %v1036 = vunpack.c.l.b16 %v996
      %v1037 = vunpack.c.l.b16 %v997
      %v1038 = vunpack.c.l.b16 %v998
      %v1039 = vunpack.c.l.b16 %v999
      %v1040 = vpack.c.b16 %v1025, %v1024
      %v1041 = vpack.c.b16 %v1027, %v1026
      %v1042 = vpack.c.b16 %v1029, %v1028
      %v1043 = vpack.c.b16 %v1031, %v1030
      %v1044 = vpack.c.b16 %v1033, %v1032
      %v1045 = vpack.c.b16 %v1035, %v1034
      %v1046 = vpack.c.b16 %v1037, %v1036
      %v1047 = vpack.c.b16 %v1039, %v1038
      %1056 = vmatprep.subr.bf16.mxu0 0
      %1057 = vmatpush1.bf16.msra.mxu0 %v1040
      %1058 = vmatprep.subr.bf16.mxu0 0
      %1059 = vmatpush1.bf16.msra.mxu0 %v1041
      %1060 = vmatprep.subr.bf16.mxu0 0
      %1061 = vmatpush1.bf16.msra.mxu0 %v1042
      %1062 = vmatprep.subr.bf16.mxu0 0
      %1063 = vmatpush1.bf16.msra.mxu0 %v1043
      %1064 = vmatprep.subr.bf16.mxu0 0
      %1065 = vmatpush1.bf16.msra.mxu0 %v1044
      %1066 = vmatprep.subr.bf16.mxu0 0
      %1067 = vmatpush1.bf16.msra.mxu0 %v1045
      %1068 = vmatprep.subr.bf16.mxu0 0
      %1069 = vmatpush1.bf16.msra.mxu0 %v1046
      %1070 = vmatprep.subr.bf16.mxu0 0
      %1071 = vmatpush1.bf16.msra.mxu0 %v1047
      %1072 = vmatprep.subr.bf16.mxu0 0
      %1073 = vmatpush1.bf16.msra.mxu0 0
      %1074 = vmatprep.subr.bf16.mxu0 0
      %1075 = vmatpush1.bf16.msra.mxu0 0
      %1076 = vmatprep.subr.bf16.mxu0 0
      %1077 = vmatpush1.bf16.msra.mxu0 0
      %1078 = vmatprep.subr.bf16.mxu0 0
      %1079 = vmatpush1.bf16.msra.mxu0 0
      %1080 = vmatprep.subr.bf16.mxu0 0
      %1081 = vmatpush1.bf16.msra.mxu0 0
      %1082 = vmatprep.subr.bf16.mxu0 0
      %1083 = vmatpush1.bf16.msra.mxu0 0
      %1084 = vmatprep.subr.bf16.mxu0 0
      %1085 = vmatpush1.bf16.msra.mxu0 0
      %1086 = vmatprep.subr.bf16.mxu0 0
      %1087 = vmatpush1.bf16.msra.mxu0 0
      %1088 = vmatprep.mubr.bf16.mxu0 0
      %1089 = vmatmul.mubr.bf16.gmra.mrb[0].mxu0 %v448
      %v1090 = vpop.f32.mrb[0].mxu0
      %v1091 = vadd.f32 %v1006, %v1090
      %v1092 = vpop.f32.mrb[0].mxu0
      %v1093 = vpop.f32.mrb[0].mxu0
      %v1094 = vadd.f32 %v1006, %v1093
      %v1095 = vpop.f32.mrb[0].mxu0
      %1096 = vmatprep.mubr.bf16.mxu0 0
      %1097 = vmatmul.mubr.bf16.gmra.mrb[0].mxu0 %v449
      %v1098 = vpop.f32.mrb[0].mxu0
      %v1099 = vadd.f32 %v1006, %v1098
      %v1100 = vpop.f32.mrb[0].mxu0
      %v1101 = vpop.f32.mrb[0].mxu0
      %v1102 = vpop.f32.mrb[0].mxu0
      %1103 = vdwg.mxu0
      %s1104 = scalar_lea.vmem %s4, 64
      %v1105 = vld [vmem:[%s1104] sm:$0xf]
      %v1106 = vld [vmem:[%s1104 + $0x4] sm:$0xf]
      %v1107 = vld [vmem:[%s1104 + $0x8] sm:$0xf]
      %v1108 = vld [vmem:[%s1104 + $0xc] sm:$0xf]
      %v1109 = vld [vmem:[%s1104 + $0x10] sm:$0xf]
      %v1110 = vld [vmem:[%s1104 + $0x14] sm:$0xf]
      %v1111 = vld [vmem:[%s1104 + $0x18] sm:$0xf]
      %v1112 = vld [vmem:[%s1104 + $0x1c] sm:$0xf]
      %v1113 = vld [vmem:[%s1104 + $0x20] sm:$0xf]
      %v1114 = vld [vmem:[%s1104 + $0x24] sm:$0xf]
      %v1115 = vld [vmem:[%s1104 + $0x28] sm:$0xf]
      %v1116 = vld [vmem:[%s1104 + $0x2c] sm:$0xf]
      %v1117 = vld [vmem:[%s1104 + $0x30] sm:$0xf]
      %v1118 = vld [vmem:[%s1104 + $0x34] sm:$0xf]
      %v1119 = vld [vmem:[%s1104 + $0x38] sm:$0xf]
      %v1120 = vld [vmem:[%s1104 + $0x3c] sm:$0xf]
      %s1121 = scalar_lea.vmem %s7, 1
      %v1122 = vld [vmem:[%s1121] sm:$0x1]
      %v1124 = vlaneseq
      %v1125 = vshrl.u32 %v1124, 7
      %v1126 = vsub.s32 0, %v1125
      %v1127 = vrot.slane %v1122, %v1126
      %v1145 = vunpack.c.l.b16 %v1105
      %v1146 = vunpack.c.l.b16 %v1106
      %v1147 = vunpack.c.l.b16 %v1107
      %v1148 = vunpack.c.l.b16 %v1108
      %v1149 = vunpack.c.l.b16 %v1109
      %v1150 = vunpack.c.l.b16 %v1110
      %v1151 = vunpack.c.l.b16 %v1111
      %v1152 = vunpack.c.l.b16 %v1112
      %v1153 = vunpack.c.l.b16 %v1113
      %v1154 = vunpack.c.l.b16 %v1114
      %v1155 = vunpack.c.l.b16 %v1115
      %v1156 = vunpack.c.l.b16 %v1116
      %v1157 = vunpack.c.l.b16 %v1117
      %v1158 = vunpack.c.l.b16 %v1118
      %v1159 = vunpack.c.l.b16 %v1119
      %v1160 = vunpack.c.l.b16 %v1120
      %v1161 = vpack.c.b16 %v1146, %v1145
      %v1162 = vpack.c.b16 %v1148, %v1147
      %v1163 = vpack.c.b16 %v1150, %v1149
      %v1164 = vpack.c.b16 %v1152, %v1151
      %v1165 = vpack.c.b16 %v1154, %v1153
      %v1166 = vpack.c.b16 %v1156, %v1155
      %v1167 = vpack.c.b16 %v1158, %v1157
      %v1168 = vpack.c.b16 %v1160, %v1159
      %1177 = vmatprep.subr.bf16.mxu0 0
      %1178 = vmatpush1.bf16.msra.mxu0 %v1161
      %1179 = vmatprep.subr.bf16.mxu0 0
      %1180 = vmatpush1.bf16.msra.mxu0 %v1162
      %1181 = vmatprep.subr.bf16.mxu0 0
      %1182 = vmatpush1.bf16.msra.mxu0 %v1163
      %1183 = vmatprep.subr.bf16.mxu0 0
      %1184 = vmatpush1.bf16.msra.mxu0 %v1164
      %1185 = vmatprep.subr.bf16.mxu0 0
      %1186 = vmatpush1.bf16.msra.mxu0 %v1165
      %1187 = vmatprep.subr.bf16.mxu0 0
      %1188 = vmatpush1.bf16.msra.mxu0 %v1166
      %1189 = vmatprep.subr.bf16.mxu0 0
      %1190 = vmatpush1.bf16.msra.mxu0 %v1167
      %1191 = vmatprep.subr.bf16.mxu0 0
      %1192 = vmatpush1.bf16.msra.mxu0 %v1168
      %1193 = vmatprep.subr.bf16.mxu0 0
      %1194 = vmatpush1.bf16.msra.mxu0 0
      %1195 = vmatprep.subr.bf16.mxu0 0
      %1196 = vmatpush1.bf16.msra.mxu0 0
      %1197 = vmatprep.subr.bf16.mxu0 0
      %1198 = vmatpush1.bf16.msra.mxu0 0
      %1199 = vmatprep.subr.bf16.mxu0 0
      %1200 = vmatpush1.bf16.msra.mxu0 0
      %1201 = vmatprep.subr.bf16.mxu0 0
      %1202 = vmatpush1.bf16.msra.mxu0 0
      %1203 = vmatprep.subr.bf16.mxu0 0
      %1204 = vmatpush1.bf16.msra.mxu0 0
      %1205 = vmatprep.subr.bf16.mxu0 0
      %1206 = vmatpush1.bf16.msra.mxu0 0
      %1207 = vmatprep.subr.bf16.mxu0 0
      %1208 = vmatpush1.bf16.msra.mxu0 0
      %1209 = vmatprep.mubr.bf16.mxu0 0
      %1210 = vmatmul.mubr.bf16.gmra.mrb[0].mxu0 %v448
      %v1211 = vpop.f32.mrb[0].mxu0
      %v1212 = vadd.f32 %v1127, %v1211
      %v1213 = vpop.f32.mrb[0].mxu0
      %v1214 = vpop.f32.mrb[0].mxu0
      %v1215 = vadd.f32 %v1127, %v1214
      %v1216 = vpop.f32.mrb[0].mxu0
      %1217 = vmatprep.mubr.bf16.mxu0 0
      %1218 = vmatmul.mubr.bf16.gmra.mrb[0].mxu0 %v449
      %v1219 = vpop.f32.mrb[0].mxu0
      %v1220 = vadd.f32 %v1127, %v1219
      %v1221 = vpop.f32.mrb[0].mxu0
      %v1222 = vpop.f32.mrb[0].mxu0
      %v1223 = vpop.f32.mrb[0].mxu0
      %1224 = vdwg.mxu0
      %s1225 = scalar_lea.vmem %s5, 64
      %v1226 = vld [vmem:[%s1225] sm:$0xf]
      %v1227 = vld [vmem:[%s1225 + $0x4] sm:$0xf]
      %v1228 = vld [vmem:[%s1225 + $0x8] sm:$0xf]
      %v1229 = vld [vmem:[%s1225 + $0xc] sm:$0xf]
      %v1230 = vld [vmem:[%s1225 + $0x10] sm:$0xf]
      %v1231 = vld [vmem:[%s1225 + $0x14] sm:$0xf]
      %v1232 = vld [vmem:[%s1225 + $0x18] sm:$0xf]
      %v1233 = vld [vmem:[%s1225 + $0x1c] sm:$0xf]
      %v1234 = vld [vmem:[%s1225 + $0x20] sm:$0xf]
      %v1235 = vld [vmem:[%s1225 + $0x24] sm:$0xf]
      %v1236 = vld [vmem:[%s1225 + $0x28] sm:$0xf]
      %v1237 = vld [vmem:[%s1225 + $0x2c] sm:$0xf]
      %v1238 = vld [vmem:[%s1225 + $0x30] sm:$0xf]
      %v1239 = vld [vmem:[%s1225 + $0x34] sm:$0xf]
      %v1240 = vld [vmem:[%s1225 + $0x38] sm:$0xf]
      %v1241 = vld [vmem:[%s1225 + $0x3c] sm:$0xf]
      %s1242 = scalar_lea.vmem %s8, 1
      %v1243 = vld [vmem:[%s1242] sm:$0x1]
      %v1245 = vlaneseq
      %v1246 = vshrl.u32 %v1245, 7
      %v1247 = vsub.s32 0, %v1246
      %v1248 = vrot.slane %v1243, %v1247
      %v1266 = vunpack.c.l.b16 %v1226
      %v1267 = vunpack.c.l.b16 %v1227
      %v1268 = vunpack.c.l.b16 %v1228
      %v1269 = vunpack.c.l.b16 %v1229
      %v1270 = vunpack.c.l.b16 %v1230
      %v1271 = vunpack.c.l.b16 %v1231
      %v1272 = vunpack.c.l.b16 %v1232
      %v1273 = vunpack.c.l.b16 %v1233
      %v1274 = vunpack.c.l.b16 %v1234
      %v1275 = vunpack.c.l.b16 %v1235
      %v1276 = vunpack.c.l.b16 %v1236
      %v1277 = vunpack.c.l.b16 %v1237
      %v1278 = vunpack.c.l.b16 %v1238
      %v1279 = vunpack.c.l.b16 %v1239
      %v1280 = vunpack.c.l.b16 %v1240
      %v1281 = vunpack.c.l.b16 %v1241
      %v1282 = vpack.c.b16 %v1267, %v1266
      %v1283 = vpack.c.b16 %v1269, %v1268
      %v1284 = vpack.c.b16 %v1271, %v1270
      %v1285 = vpack.c.b16 %v1273, %v1272
      %v1286 = vpack.c.b16 %v1275, %v1274
      %v1287 = vpack.c.b16 %v1277, %v1276
      %v1288 = vpack.c.b16 %v1279, %v1278
      %v1289 = vpack.c.b16 %v1281, %v1280
      %1298 = vmatprep.subr.bf16.mxu0 0
      %1299 = vmatpush1.bf16.msra.mxu0 %v1282
      %1300 = vmatprep.subr.bf16.mxu0 0
      %1301 = vmatpush1.bf16.msra.mxu0 %v1283
      %1302 = vmatprep.subr.bf16.mxu0 0
      %1303 = vmatpush1.bf16.msra.mxu0 %v1284
      %1304 = vmatprep.subr.bf16.mxu0 0
      %1305 = vmatpush1.bf16.msra.mxu0 %v1285
      %1306 = vmatprep.subr.bf16.mxu0 0
      %1307 = vmatpush1.bf16.msra.mxu0 %v1286
      %1308 = vmatprep.subr.bf16.mxu0 0
      %1309 = vmatpush1.bf16.msra.mxu0 %v1287
      %1310 = vmatprep.subr.bf16.mxu0 0
      %1311 = vmatpush1.bf16.msra.mxu0 %v1288
      %1312 = vmatprep.subr.bf16.mxu0 0
      %1313 = vmatpush1.bf16.msra.mxu0 %v1289
      %1314 = vmatprep.subr.bf16.mxu0 0
      %1315 = vmatpush1.bf16.msra.mxu0 0
      %1316 = vmatprep.subr.bf16.mxu0 0
      %1317 = vmatpush1.bf16.msra.mxu0 0
      %1318 = vmatprep.subr.bf16.mxu0 0
      %1319 = vmatpush1.bf16.msra.mxu0 0
      %1320 = vmatprep.subr.bf16.mxu0 0
      %1321 = vmatpush1.bf16.msra.mxu0 0
      %1322 = vmatprep.subr.bf16.mxu0 0
      %1323 = vmatpush1.bf16.msra.mxu0 0
      %1324 = vmatprep.subr.bf16.mxu0 0
      %1325 = vmatpush1.bf16.msra.mxu0 0
      %1326 = vmatprep.subr.bf16.mxu0 0
      %1327 = vmatpush1.bf16.msra.mxu0 0
      %1328 = vmatprep.subr.bf16.mxu0 0
      %1329 = vmatpush1.bf16.msra.mxu0 0
      %1330 = vmatprep.mubr.bf16.mxu0 0
      %1331 = vmatmul.mubr.bf16.gmra.mrb[0].mxu0 %v448
      %v1332 = vpop.f32.mrb[0].mxu0
      %v1333 = vadd.f32 %v1248, %v1332
      %v1334 = vpop.f32.mrb[0].mxu0
      %v1335 = vpop.f32.mrb[0].mxu0
      %v1336 = vadd.f32 %v1248, %v1335
      %v1337 = vpop.f32.mrb[0].mxu0
      %1338 = vmatprep.mubr.bf16.mxu0 0
      %1339 = vmatmul.mubr.bf16.gmra.mrb[0].mxu0 %v449
      %v1340 = vpop.f32.mrb[0].mxu0
      %v1341 = vadd.f32 %v1248, %v1340
      %v1342 = vpop.f32.mrb[0].mxu0
      %v1343 = vpop.f32.mrb[0].mxu0
      %v1344 = vpop.f32.mrb[0].mxu0
      %1345 = vdwg.mxu0
      %v1346 = vpack.c.bf16 %v1094, %v1091
      %v1347 = vpack.c.bf16 %v1099, %v1099
      %v1348 = vpack.c.bf16 %v1215, %v1212
      %v1349 = vpack.c.bf16 %v1220, %v1220
      %v1351 = vsel %vm814, %v1346, 0
      %v1354 = vsel %vm814, %v1347, 0
      %v1357 = vsel %vm814, %v1348, 0
      %v1360 = vsel %vm814, %v1349, 0
      %1362 = vmatprep.subr.bf16.mxu0 0
      %1363 = vmatpush1.bf16.xpose.msra.mxu0 %v1357
      %1364 = vmatprep.subr.bf16.mxu0 0
      %1365 = vmatpush1.bf16.xpose.msra.mxu0 %v1360
      %1366 = vmatprep.subr.bf16.mxu0 0
      %1367 = vmatpush1.bf16.xpose.msra.mxu0 0
      %1368 = vmatprep.subr.bf16.mxu0 0
      %1369 = vmatpush1.bf16.xpose.msra.mxu0 0
      %1370 = vmatprep.subr.bf16.mxu0 0
      %1371 = vmatpush1.bf16.xpose.msra.mxu0 0
      %1372 = vmatprep.subr.bf16.mxu0 0
      %1373 = vmatpush1.bf16.xpose.msra.mxu0 0
      %1374 = vmatprep.subr.bf16.mxu0 0
      %1375 = vmatpush1.bf16.xpose.msra.mxu0 0
      %1376 = vmatprep.subr.bf16.mxu0 0
      %1377 = vmatpush1.bf16.xpose.msra.mxu0 0
      %1378 = vmatprep.subr.bf16.mxu0 0
      %1379 = vmatpush1.bf16.xpose.msra.mxu0 0
      %1380 = vmatprep.subr.bf16.mxu0 0
      %1381 = vmatpush1.bf16.xpose.msra.mxu0 0
      %1382 = vmatprep.subr.bf16.mxu0 0
      %1383 = vmatpush1.bf16.xpose.msra.mxu0 0
      %1384 = vmatprep.subr.bf16.mxu0 0
      %1385 = vmatpush1.bf16.xpose.msra.mxu0 0
      %1386 = vmatprep.subr.bf16.mxu0 0
      %1387 = vmatpush1.bf16.xpose.msra.mxu0 0
      %1388 = vmatprep.subr.bf16.mxu0 0
      %1389 = vmatpush1.bf16.xpose.msra.mxu0 0
      %1390 = vmatprep.subr.bf16.mxu0 0
      %1391 = vmatpush1.bf16.xpose.msra.mxu0 0
      %1392 = vmatprep.subr.bf16.mxu0 0
      %1393 = vmatpush1.bf16.xpose.msra.mxu0 0
      %1394 = vmatprep.mubr.bf16.mxu0 0
      %1395 = vmatmul.mubr.bf16.gmra.mrb[0].mxu0 %v1351
      %v1396 = vpop.f32.mrb[0].mxu0
      %v1397 = vadd.f32 0.0, %v1396
      %v1398 = vpop.f32.mrb[0].mxu0
      %v1399 = vpop.f32.mrb[0].mxu0
      %v1400 = vadd.f32 0.0, %v1399
      %v1401 = vpop.f32.mrb[0].mxu0
      %1402 = vmatprep.mubr.bf16.mxu0 0
      %1403 = vmatmul.mubr.bf16.gmra.mrb[0].mxu0 %v1354
      %v1404 = vpop.f32.mrb[0].mxu0
      %v1405 = vadd.f32 0.0, %v1404
      %v1406 = vpop.f32.mrb[0].mxu0
      %v1407 = vpop.f32.mrb[0].mxu0
      %v1408 = vpop.f32.mrb[0].mxu0
      %1409 = vdwg.mxu0
      %v1410 = vmul.f32 %v1397, 0.17677669
      %v1411 = vmul.f32 %v1400, 0.17677669
      %v1412 = vmul.f32 %v1405, 0.17677669
      %v1413 = vsel %vm452, %v1410, -1e+30
      %v1414 = vsel %vm452, %v1411, -1e+30
      %v1415 = vsel %vm452, %v1412, -1e+30
      %v1416 = vsel %vm881, %v1413, -inf
      %1417 = vmax.xlane.f32.xlu0 %v1416
      %v1418 = vpop.xlane.xlu0 %1417
      %v1419 = vsel %vm881, %v1414, -inf
      %1420 = vmax.xlane.f32.xlu0 %v1419
      %v1421 = vpop.xlane.xlu0 %1420
      %v1422 = vsel %vm881, %v1415, -inf
      %1423 = vmax.xlane.f32.xlu0 %v1422
      %v1424 = vpop.xlane.xlu0 %1423
      %v1425 = vsub.f32 %v1413, %v1418
      %v1426 = vsub.f32 %v1414, %v1421
      %v1427 = vsub.f32 %v1415, %v1424
      %v1428 = vmul.f32 %v1425, 1.442695
      %v1429 = vpow.pop %v1428
      %v1430 = vmul.f32 %v1426, 1.442695
      %v1431 = vpow.pop %v1430
      %v1432 = vmul.f32 %v1427, 1.442695
      %v1433 = vpow.pop %v1432
      %v1434 = vsel %vm881, %v1429, 0.0
      %1435 = vadd.xlane.f32.xlu0 %v1434
      %v1436 = vpop.xlane.xlu0 %1435
      %v1437 = vsel %vm881, %v1431, 0.0
      %1438 = vadd.xlane.f32.xlu0 %v1437
      %v1439 = vpop.xlane.xlu0 %1438
      %v1440 = vsel %vm881, %v1433, 0.0
      %1441 = vadd.xlane.f32.xlu0 %v1440
      %v1442 = vpop.xlane.xlu0 %1441
      %v1443 = vrcp.pop %v1436
      %v1444 = vrcp.pop %v1439
      %v1445 = vrcp.pop %v1442
      %v1446 = vmul.f32 %v1429, %v1443
      %v1447 = vmul.f32 %v1431, %v1444
      %v1448 = vmul.f32 %v1433, %v1445
      %v1449 = vpack.c.bf16 %v1447, %v1446
      %v1450 = vpack.c.bf16 %v1448, %v1448
      %v1451 = vpack.c.bf16 %v1336, %v1333
      %v1452 = vpack.c.bf16 %v1341, %v1341
      %v1454 = vsel %vm881, %v1449, 0
      %v1457 = vsel %vm881, %v1450, 0
      %v1460 = vsel %vm925, %v1452, 0
      %1462 = vmatprep.subr.bf16.mxu0 0
      %1463 = vmatpush1.bf16.msra.mxu0 %v1451
      %1464 = vmatprep.subr.bf16.mxu0 0
      %1465 = vmatpush1.bf16.msra.mxu0 %v1460
      %1466 = vmatprep.subr.bf16.mxu0 0
      %1467 = vmatpush1.bf16.msra.mxu0 0
      %1468 = vmatprep.subr.bf16.mxu0 0
      %1469 = vmatpush1.bf16.msra.mxu0 0
      %1470 = vmatprep.subr.bf16.mxu0 0
      %1471 = vmatpush1.bf16.msra.mxu0 0
      %1472 = vmatprep.subr.bf16.mxu0 0
      %1473 = vmatpush1.bf16.msra.mxu0 0
      %1474 = vmatprep.subr.bf16.mxu0 0
      %1475 = vmatpush1.bf16.msra.mxu0 0
      %1476 = vmatprep.subr.bf16.mxu0 0
      %1477 = vmatpush1.bf16.msra.mxu0 0
      %1478 = vmatprep.subr.bf16.mxu0 0
      %1479 = vmatpush1.bf16.msra.mxu0 0
      %1480 = vmatprep.subr.bf16.mxu0 0
      %1481 = vmatpush1.bf16.msra.mxu0 0
      %1482 = vmatprep.subr.bf16.mxu0 0
      %1483 = vmatpush1.bf16.msra.mxu0 0
      %1484 = vmatprep.subr.bf16.mxu0 0
      %1485 = vmatpush1.bf16.msra.mxu0 0
      %1486 = vmatprep.subr.bf16.mxu0 0
      %1487 = vmatpush1.bf16.msra.mxu0 0
      %1488 = vmatprep.subr.bf16.mxu0 0
      %1489 = vmatpush1.bf16.msra.mxu0 0
      %1490 = vmatprep.subr.bf16.mxu0 0
      %1491 = vmatpush1.bf16.msra.mxu0 0
      %1492 = vmatprep.subr.bf16.mxu0 0
      %1493 = vmatpush1.bf16.msra.mxu0 0
      %1494 = vmatprep.mubr.bf16.mxu0 0
      %1495 = vmatmul.mubr.bf16.gmra.mrb[0].mxu0 %v1454
      %v1496 = vpop.f32.mrb[0].mxu0
      %v1497 = vadd.f32 0.0, %v1496
      %v1498 = vpop.f32.mrb[0].mxu0
      %v1499 = vpop.f32.mrb[0].mxu0
      %v1500 = vadd.f32 0.0, %v1499
      %v1501 = vpop.f32.mrb[0].mxu0
      %1502 = vmatprep.mubr.bf16.mxu0 0
      %1503 = vmatmul.mubr.bf16.gmra.mrb[0].mxu0 %v1457
      %v1504 = vpop.f32.mrb[0].mxu0
      %v1505 = vadd.f32 0.0, %v1504
      %v1506 = vpop.f32.mrb[0].mxu0
      %v1507 = vpop.f32.mrb[0].mxu0
      %v1508 = vpop.f32.mrb[0].mxu0
      %1509 = vdwg.mxu0
      %v1510 = vpack.c.bf16 %v1500, %v1497
      %v1511 = vpack.c.bf16 %v1505, %v1505
      %s1512 = scalar_lea.vmem %s9, 16
      %v1513 = vld [vmem:[%s1512] sm:$0xf]
      %v1514 = vld [vmem:[%s1512 + $0x4] sm:$0xf]
      %v1515 = vld [vmem:[%s1512 + $0x8] sm:$0xf]
      %v1516 = vld [vmem:[%s1512 + $0xc] sm:$0xf]
      %v1521 = vunpack.c.l.b16 %v1513
      %v1522 = vunpack.c.l.b16 %v1514
      %v1523 = vunpack.c.l.b16 %v1515
      %v1524 = vunpack.c.l.b16 %v1516
      %v1525 = vpack.c.b16 %v1522, %v1521
      %v1526 = vpack.c.b16 %v1524, %v1523
      %v1530 = vsel %vm814, %v1510, 0
      %v1533 = vsel %vm814, %v1511, 0
      %1535 = vmatprep.subr.bf16.mxu0 0
      %1536 = vmatpush1.bf16.msra.mxu0 %v1525
      %1537 = vmatprep.subr.bf16.mxu0 0
      %1538 = vmatpush1.bf16.msra.mxu0 %v1526
      %1539 = vmatprep.subr.bf16.mxu0 0
      %1540 = vmatpush1.bf16.msra.mxu0 0
      %1541 = vmatprep.subr.bf16.mxu0 0
      %1542 = vmatpush1.bf16.msra.mxu0 0
      %1543 = vmatprep.subr.bf16.mxu0 0
      %1544 = vmatpush1.bf16.msra.mxu0 0
      %1545 = vmatprep.subr.bf16.mxu0 0
      %1546 = vmatpush1.bf16.msra.mxu0 0
      %1547 = vmatprep.subr.bf16.mxu0 0
      %1548 = vmatpush1.bf16.msra.mxu0 0
      %1549 = vmatprep.subr.bf16.mxu0 0
      %1550 = vmatpush1.bf16.msra.mxu0 0
      %1551 = vmatprep.subr.bf16.mxu0 0
      %1552 = vmatpush1.bf16.msra.mxu0 0
      %1553 = vmatprep.subr.bf16.mxu0 0
      %1554 = vmatpush1.bf16.msra.mxu0 0
      %1555 = vmatprep.subr.bf16.mxu0 0
      %1556 = vmatpush1.bf16.msra.mxu0 0
      %1557 = vmatprep.subr.bf16.mxu0 0
      %1558 = vmatpush1.bf16.msra.mxu0 0
      %1559 = vmatprep.subr.bf16.mxu0 0
      %1560 = vmatpush1.bf16.msra.mxu0 0
      %1561 = vmatprep.subr.bf16.mxu0 0
      %1562 = vmatpush1.bf16.msra.mxu0 0
      %1563 = vmatprep.subr.bf16.mxu0 0
      %1564 = vmatpush1.bf16.msra.mxu0 0
      %1565 = vmatprep.subr.bf16.mxu0 0
      %1566 = vmatpush1.bf16.msra.mxu0 0
      %1567 = vmatprep.mubr.bf16.mxu0 0
      %1568 = vmatmul.mubr.bf16.gmra.mrb[0].mxu0 %v1530
      %v1569 = vpop.f32.mrb[0].mxu0
      %v1570 = vadd.f32 0.0, %v1569
      %v1571 = vpop.f32.mrb[0].mxu0
      %v1572 = vpop.f32.mrb[0].mxu0
      %v1573 = vadd.f32 0.0, %v1572
      %v1574 = vpop.f32.mrb[0].mxu0
      %1575 = vmatprep.mubr.bf16.mxu0 0
      %1576 = vmatmul.mubr.bf16.gmra.mrb[0].mxu0 %v1533
      %v1577 = vpop.f32.mrb[0].mxu0
      %v1578 = vadd.f32 0.0, %v1577
      %v1579 = vpop.f32.mrb[0].mxu0
      %v1580 = vpop.f32.mrb[0].mxu0
      %v1581 = vpop.f32.mrb[0].mxu0
      %1582 = vdwg.mxu0
      %v1587 = vunpack.c.l.b16 %v979
      %v1588 = vunpack.c.l.b16 %v980
      %v1589 = vunpack.c.l.b16 %v981
      %v1590 = vunpack.c.l.b16 %v982
      %v1591 = vpack.c.b16 %v1588, %v1587
      %v1592 = vpack.c.b16 %v1590, %v1589
      %v1596 = vsel %vm814, %v977, 0
      %v1599 = vsel %vm814, %v978, 0
      %1601 = vmatprep.subr.bf16.mxu0 0
      %1602 = vmatpush1.bf16.msra.mxu0 %v1591
      %1603 = vmatprep.subr.bf16.mxu0 0
      %1604 = vmatpush1.bf16.msra.mxu0 %v1592
      %1605 = vmatprep.subr.bf16.mxu0 0
      %1606 = vmatpush1.bf16.msra.mxu0 0
      %1607 = vmatprep.subr.bf16.mxu0 0
      %1608 = vmatpush1.bf16.msra.mxu0 0
      %1609 = vmatprep.subr.bf16.mxu0 0
      %1610 = vmatpush1.bf16.msra.mxu0 0
      %1611 = vmatprep.subr.bf16.mxu0 0
      %1612 = vmatpush1.bf16.msra.mxu0 0
      %1613 = vmatprep.subr.bf16.mxu0 0
      %1614 = vmatpush1.bf16.msra.mxu0 0
      %1615 = vmatprep.subr.bf16.mxu0 0
      %1616 = vmatpush1.bf16.msra.mxu0 0
      %1617 = vmatprep.subr.bf16.mxu0 0
      %1618 = vmatpush1.bf16.msra.mxu0 0
      %1619 = vmatprep.subr.bf16.mxu0 0
      %1620 = vmatpush1.bf16.msra.mxu0 0
      %1621 = vmatprep.subr.bf16.mxu0 0
      %1622 = vmatpush1.bf16.msra.mxu0 0
      %1623 = vmatprep.subr.bf16.mxu0 0
      %1624 = vmatpush1.bf16.msra.mxu0 0
      %1625 = vmatprep.subr.bf16.mxu0 0
      %1626 = vmatpush1.bf16.msra.mxu0 0
      %1627 = vmatprep.subr.bf16.mxu0 0
      %1628 = vmatpush1.bf16.msra.mxu0 0
      %1629 = vmatprep.subr.bf16.mxu0 0
      %1630 = vmatpush1.bf16.msra.mxu0 0
      %1631 = vmatprep.subr.bf16.mxu0 0
      %1632 = vmatpush1.bf16.msra.mxu0 0
      %1633 = vmatprep.mubr.bf16.mxu0 0
      %1634 = vmatmul.mubr.bf16.gmra.mrb[0].mxu0 %v1596
      %v1635 = vpop.f32.mrb[0].mxu0
      %v1636 = vadd.f32 %v1570, %v1635
      %v1637 = vpop.f32.mrb[0].mxu0
      %v1638 = vpop.f32.mrb[0].mxu0
      %v1639 = vadd.f32 %v1573, %v1638
      %v1640 = vpop.f32.mrb[0].mxu0
      %1641 = vmatprep.mubr.bf16.mxu0 0
      %1642 = vmatmul.mubr.bf16.gmra.mrb[0].mxu0 %v1599
      %v1643 = vpop.f32.mrb[0].mxu0
      %v1644 = vadd.f32 %v1578, %v1643
      %v1645 = vpop.f32.mrb[0].mxu0
      %v1646 = vpop.f32.mrb[0].mxu0
      %v1647 = vpop.f32.mrb[0].mxu0
      %1648 = vdwg.mxu0
      %s1649 = scalar_lea.vmem %s3, 128
      %v1650 = vld [vmem:[%s1649] sm:$0xf]
      %v1651 = vld [vmem:[%s1649 + $0x4] sm:$0xf]
      %v1652 = vld [vmem:[%s1649 + $0x8] sm:$0xf]
      %v1653 = vld [vmem:[%s1649 + $0xc] sm:$0xf]
      %v1654 = vld [vmem:[%s1649 + $0x10] sm:$0xf]
      %v1655 = vld [vmem:[%s1649 + $0x14] sm:$0xf]
      %v1656 = vld [vmem:[%s1649 + $0x18] sm:$0xf]
      %v1657 = vld [vmem:[%s1649 + $0x1c] sm:$0xf]
      %v1658 = vld [vmem:[%s1649 + $0x20] sm:$0xf]
      %v1659 = vld [vmem:[%s1649 + $0x24] sm:$0xf]
      %v1660 = vld [vmem:[%s1649 + $0x28] sm:$0xf]
      %v1661 = vld [vmem:[%s1649 + $0x2c] sm:$0xf]
      %v1662 = vld [vmem:[%s1649 + $0x30] sm:$0xf]
      %v1663 = vld [vmem:[%s1649 + $0x34] sm:$0xf]
      %v1664 = vld [vmem:[%s1649 + $0x38] sm:$0xf]
      %v1665 = vld [vmem:[%s1649 + $0x3c] sm:$0xf]
      %s1666 = scalar_lea.vmem %s6, 2
      %v1667 = vld [vmem:[%s1666] sm:$0x1]
      %v1669 = vlaneseq
      %v1670 = vshrl.u32 %v1669, 7
      %v1671 = vsub.s32 0, %v1670
      %v1672 = vrot.slane %v1667, %v1671
      %v1690 = vunpack.c.l.b16 %v1650
      %v1691 = vunpack.c.l.b16 %v1651
      %v1692 = vunpack.c.l.b16 %v1652
      %v1693 = vunpack.c.l.b16 %v1653
      %v1694 = vunpack.c.l.b16 %v1654
      %v1695 = vunpack.c.l.b16 %v1655
      %v1696 = vunpack.c.l.b16 %v1656
      %v1697 = vunpack.c.l.b16 %v1657
      %v1698 = vunpack.c.l.b16 %v1658
      %v1699 = vunpack.c.l.b16 %v1659
      %v1700 = vunpack.c.l.b16 %v1660
      %v1701 = vunpack.c.l.b16 %v1661
      %v1702 = vunpack.c.l.b16 %v1662
      %v1703 = vunpack.c.l.b16 %v1663
      %v1704 = vunpack.c.l.b16 %v1664
      %v1705 = vunpack.c.l.b16 %v1665
      %v1706 = vpack.c.b16 %v1691, %v1690
      %v1707 = vpack.c.b16 %v1693, %v1692
      %v1708 = vpack.c.b16 %v1695, %v1694
      %v1709 = vpack.c.b16 %v1697, %v1696
      %v1710 = vpack.c.b16 %v1699, %v1698
      %v1711 = vpack.c.b16 %v1701, %v1700
      %v1712 = vpack.c.b16 %v1703, %v1702
      %v1713 = vpack.c.b16 %v1705, %v1704
      %1722 = vmatprep.subr.bf16.mxu0 0
      %1723 = vmatpush1.bf16.msra.mxu0 %v1706
      %1724 = vmatprep.subr.bf16.mxu0 0
      %1725 = vmatpush1.bf16.msra.mxu0 %v1707
      %1726 = vmatprep.subr.bf16.mxu0 0
      %1727 = vmatpush1.bf16.msra.mxu0 %v1708
      %1728 = vmatprep.subr.bf16.mxu0 0
      %1729 = vmatpush1.bf16.msra.mxu0 %v1709
      %1730 = vmatprep.subr.bf16.mxu0 0
      %1731 = vmatpush1.bf16.msra.mxu0 %v1710
      %1732 = vmatprep.subr.bf16.mxu0 0
      %1733 = vmatpush1.bf16.msra.mxu0 %v1711
      %1734 = vmatprep.subr.bf16.mxu0 0
      %1735 = vmatpush1.bf16.msra.mxu0 %v1712
      %1736 = vmatprep.subr.bf16.mxu0 0
      %1737 = vmatpush1.bf16.msra.mxu0 %v1713
      %1738 = vmatprep.subr.bf16.mxu0 0
      %1739 = vmatpush1.bf16.msra.mxu0 0
      %1740 = vmatprep.subr.bf16.mxu0 0
      %1741 = vmatpush1.bf16.msra.mxu0 0
      %1742 = vmatprep.subr.bf16.mxu0 0
      %1743 = vmatpush1.bf16.msra.mxu0 0
      %1744 = vmatprep.subr.bf16.mxu0 0
      %1745 = vmatpush1.bf16.msra.mxu0 0
      %1746 = vmatprep.subr.bf16.mxu0 0
      %1747 = vmatpush1.bf16.msra.mxu0 0
      %1748 = vmatprep.subr.bf16.mxu0 0
      %1749 = vmatpush1.bf16.msra.mxu0 0
      %1750 = vmatprep.subr.bf16.mxu0 0
      %1751 = vmatpush1.bf16.msra.mxu0 0
      %1752 = vmatprep.subr.bf16.mxu0 0
      %1753 = vmatpush1.bf16.msra.mxu0 0
      %1754 = vmatprep.mubr.bf16.mxu0 0
      %1755 = vmatmul.mubr.bf16.gmra.mrb[0].mxu0 %v448
      %v1756 = vpop.f32.mrb[0].mxu0
      %v1757 = vadd.f32 %v1672, %v1756
      %v1758 = vpop.f32.mrb[0].mxu0
      %v1759 = vpop.f32.mrb[0].mxu0
      %v1760 = vadd.f32 %v1672, %v1759
      %v1761 = vpop.f32.mrb[0].mxu0
      %1762 = vmatprep.mubr.bf16.mxu0 0
      %1763 = vmatmul.mubr.bf16.gmra.mrb[0].mxu0 %v449
      %v1764 = vpop.f32.mrb[0].mxu0
      %v1765 = vadd.f32 %v1672, %v1764
      %v1766 = vpop.f32.mrb[0].mxu0
      %v1767 = vpop.f32.mrb[0].mxu0
      %v1768 = vpop.f32.mrb[0].mxu0
      %1769 = vdwg.mxu0
      %s1770 = scalar_lea.vmem %s4, 128
      %v1771 = vld [vmem:[%s1770] sm:$0xf]
      %v1772 = vld [vmem:[%s1770 + $0x4] sm:$0xf]
      %v1773 = vld [vmem:[%s1770 + $0x8] sm:$0xf]
      %v1774 = vld [vmem:[%s1770 + $0xc] sm:$0xf]
      %v1775 = vld [vmem:[%s1770 + $0x10] sm:$0xf]
      %v1776 = vld [vmem:[%s1770 + $0x14] sm:$0xf]
      %v1777 = vld [vmem:[%s1770 + $0x18] sm:$0xf]
      %v1778 = vld [vmem:[%s1770 + $0x1c] sm:$0xf]
      %v1779 = vld [vmem:[%s1770 + $0x20] sm:$0xf]
      %v1780 = vld [vmem:[%s1770 + $0x24] sm:$0xf]
      %v1781 = vld [vmem:[%s1770 + $0x28] sm:$0xf]
      %v1782 = vld [vmem:[%s1770 + $0x2c] sm:$0xf]
      %v1783 = vld [vmem:[%s1770 + $0x30] sm:$0xf]
      %v1784 = vld [vmem:[%s1770 + $0x34] sm:$0xf]
      %v1785 = vld [vmem:[%s1770 + $0x38] sm:$0xf]
      %v1786 = vld [vmem:[%s1770 + $0x3c] sm:$0xf]
      %s1787 = scalar_lea.vmem %s7, 2
      %v1788 = vld [vmem:[%s1787] sm:$0x1]
      %v1790 = vlaneseq
      %v1791 = vshrl.u32 %v1790, 7
      %v1792 = vsub.s32 0, %v1791
      %v1793 = vrot.slane %v1788, %v1792
      %v1811 = vunpack.c.l.b16 %v1771
      %v1812 = vunpack.c.l.b16 %v1772
      %v1813 = vunpack.c.l.b16 %v1773
      %v1814 = vunpack.c.l.b16 %v1774
      %v1815 = vunpack.c.l.b16 %v1775
      %v1816 = vunpack.c.l.b16 %v1776
      %v1817 = vunpack.c.l.b16 %v1777
      %v1818 = vunpack.c.l.b16 %v1778
      %v1819 = vunpack.c.l.b16 %v1779
      %v1820 = vunpack.c.l.b16 %v1780
      %v1821 = vunpack.c.l.b16 %v1781
      %v1822 = vunpack.c.l.b16 %v1782
      %v1823 = vunpack.c.l.b16 %v1783
      %v1824 = vunpack.c.l.b16 %v1784
      %v1825 = vunpack.c.l.b16 %v1785
      %v1826 = vunpack.c.l.b16 %v1786
      %v1827 = vpack.c.b16 %v1812, %v1811
      %v1828 = vpack.c.b16 %v1814, %v1813
      %v1829 = vpack.c.b16 %v1816, %v1815
      %v1830 = vpack.c.b16 %v1818, %v1817
      %v1831 = vpack.c.b16 %v1820, %v1819
      %v1832 = vpack.c.b16 %v1822, %v1821
      %v1833 = vpack.c.b16 %v1824, %v1823
      %v1834 = vpack.c.b16 %v1826, %v1825
      %1843 = vmatprep.subr.bf16.mxu0 0
      %1844 = vmatpush1.bf16.msra.mxu0 %v1827
      %1845 = vmatprep.subr.bf16.mxu0 0
      %1846 = vmatpush1.bf16.msra.mxu0 %v1828
      %1847 = vmatprep.subr.bf16.mxu0 0
      %1848 = vmatpush1.bf16.msra.mxu0 %v1829
      %1849 = vmatprep.subr.bf16.mxu0 0
      %1850 = vmatpush1.bf16.msra.mxu0 %v1830
      %1851 = vmatprep.subr.bf16.mxu0 0
      %1852 = vmatpush1.bf16.msra.mxu0 %v1831
      %1853 = vmatprep.subr.bf16.mxu0 0
      %1854 = vmatpush1.bf16.msra.mxu0 %v1832
      %1855 = vmatprep.subr.bf16.mxu0 0
      %1856 = vmatpush1.bf16.msra.mxu0 %v1833
      %1857 = vmatprep.subr.bf16.mxu0 0
      %1858 = vmatpush1.bf16.msra.mxu0 %v1834
      %1859 = vmatprep.subr.bf16.mxu0 0
      %1860 = vmatpush1.bf16.msra.mxu0 0
      %1861 = vmatprep.subr.bf16.mxu0 0
      %1862 = vmatpush1.bf16.msra.mxu0 0
      %1863 = vmatprep.subr.bf16.mxu0 0
      %1864 = vmatpush1.bf16.msra.mxu0 0
      %1865 = vmatprep.subr.bf16.mxu0 0
      %1866 = vmatpush1.bf16.msra.mxu0 0
      %1867 = vmatprep.subr.bf16.mxu0 0
      %1868 = vmatpush1.bf16.msra.mxu0 0
      %1869 = vmatprep.subr.bf16.mxu0 0
      %1870 = vmatpush1.bf16.msra.mxu0 0
      %1871 = vmatprep.subr.bf16.mxu0 0
      %1872 = vmatpush1.bf16.msra.mxu0 0
      %1873 = vmatprep.subr.bf16.mxu0 0
      %1874 = vmatpush1.bf16.msra.mxu0 0
      %1875 = vmatprep.mubr.bf16.mxu0 0
      %1876 = vmatmul.mubr.bf16.gmra.mrb[0].mxu0 %v448
      %v1877 = vpop.f32.mrb[0].mxu0
      %v1878 = vadd.f32 %v1793, %v1877
      %v1879 = vpop.f32.mrb[0].mxu0
      %v1880 = vpop.f32.mrb[0].mxu0
      %v1881 = vadd.f32 %v1793, %v1880
      %v1882 = vpop.f32.mrb[0].mxu0
      %1883 = vmatprep.mubr.bf16.mxu0 0
      %1884 = vmatmul.mubr.bf16.gmra.mrb[0].mxu0 %v449
      %v1885 = vpop.f32.mrb[0].mxu0
      %v1886 = vadd.f32 %v1793, %v1885
      %v1887 = vpop.f32.mrb[0].mxu0
      %v1888 = vpop.f32.mrb[0].mxu0
      %v1889 = vpop.f32.mrb[0].mxu0
      %1890 = vdwg.mxu0
      %s1891 = scalar_lea.vmem %s5, 128
      %v1892 = vld [vmem:[%s1891] sm:$0xf]
      %v1893 = vld [vmem:[%s1891 + $0x4] sm:$0xf]
      %v1894 = vld [vmem:[%s1891 + $0x8] sm:$0xf]
      %v1895 = vld [vmem:[%s1891 + $0xc] sm:$0xf]
      %v1896 = vld [vmem:[%s1891 + $0x10] sm:$0xf]
      %v1897 = vld [vmem:[%s1891 + $0x14] sm:$0xf]
      %v1898 = vld [vmem:[%s1891 + $0x18] sm:$0xf]
      %v1899 = vld [vmem:[%s1891 + $0x1c] sm:$0xf]
      %v1900 = vld [vmem:[%s1891 + $0x20] sm:$0xf]
      %v1901 = vld [vmem:[%s1891 + $0x24] sm:$0xf]
      %v1902 = vld [vmem:[%s1891 + $0x28] sm:$0xf]
      %v1903 = vld [vmem:[%s1891 + $0x2c] sm:$0xf]
      %v1904 = vld [vmem:[%s1891 + $0x30] sm:$0xf]
      %v1905 = vld [vmem:[%s1891 + $0x34] sm:$0xf]
      %v1906 = vld [vmem:[%s1891 + $0x38] sm:$0xf]
      %v1907 = vld [vmem:[%s1891 + $0x3c] sm:$0xf]
      %s1908 = scalar_lea.vmem %s8, 2
      %v1909 = vld [vmem:[%s1908] sm:$0x1]
      %v1911 = vlaneseq
      %v1912 = vshrl.u32 %v1911, 7
      %v1913 = vsub.s32 0, %v1912
      %v1914 = vrot.slane %v1909, %v1913
      %v1932 = vunpack.c.l.b16 %v1892
      %v1933 = vunpack.c.l.b16 %v1893
      %v1934 = vunpack.c.l.b16 %v1894
      %v1935 = vunpack.c.l.b16 %v1895
      %v1936 = vunpack.c.l.b16 %v1896
      %v1937 = vunpack.c.l.b16 %v1897
      %v1938 = vunpack.c.l.b16 %v1898
      %v1939 = vunpack.c.l.b16 %v1899
      %v1940 = vunpack.c.l.b16 %v1900
      %v1941 = vunpack.c.l.b16 %v1901
      %v1942 = vunpack.c.l.b16 %v1902
      %v1943 = vunpack.c.l.b16 %v1903
      %v1944 = vunpack.c.l.b16 %v1904
      %v1945 = vunpack.c.l.b16 %v1905
      %v1946 = vunpack.c.l.b16 %v1906
      %v1947 = vunpack.c.l.b16 %v1907
      %v1948 = vpack.c.b16 %v1933, %v1932
      %v1949 = vpack.c.b16 %v1935, %v1934
      %v1950 = vpack.c.b16 %v1937, %v1936
      %v1951 = vpack.c.b16 %v1939, %v1938
      %v1952 = vpack.c.b16 %v1941, %v1940
      %v1953 = vpack.c.b16 %v1943, %v1942
      %v1954 = vpack.c.b16 %v1945, %v1944
      %v1955 = vpack.c.b16 %v1947, %v1946
      %1964 = vmatprep.subr.bf16.mxu0 0
      %1965 = vmatpush1.bf16.msra.mxu0 %v1948
      %1966 = vmatprep.subr.bf16.mxu0 0
      %1967 = vmatpush1.bf16.msra.mxu0 %v1949
      %1968 = vmatprep.subr.bf16.mxu0 0
      %1969 = vmatpush1.bf16.msra.mxu0 %v1950
      %1970 = vmatprep.subr.bf16.mxu0 0
      %1971 = vmatpush1.bf16.msra.mxu0 %v1951
      %1972 = vmatprep.subr.bf16.mxu0 0
      %1973 = vmatpush1.bf16.msra.mxu0 %v1952
      %1974 = vmatprep.subr.bf16.mxu0 0
      %1975 = vmatpush1.bf16.msra.mxu0 %v1953
      %1976 = vmatprep.subr.bf16.mxu0 0
      %1977 = vmatpush1.bf16.msra.mxu0 %v1954
      %1978 = vmatprep.subr.bf16.mxu0 0
      %1979 = vmatpush1.bf16.msra.mxu0 %v1955
      %1980 = vmatprep.subr.bf16.mxu0 0
      %1981 = vmatpush1.bf16.msra.mxu0 0
      %1982 = vmatprep.subr.bf16.mxu0 0
      %1983 = vmatpush1.bf16.msra.mxu0 0
      %1984 = vmatprep.subr.bf16.mxu0 0
      %1985 = vmatpush1.bf16.msra.mxu0 0
      %1986 = vmatprep.subr.bf16.mxu0 0
      %1987 = vmatpush1.bf16.msra.mxu0 0
      %1988 = vmatprep.subr.bf16.mxu0 0
      %1989 = vmatpush1.bf16.msra.mxu0 0
      %1990 = vmatprep.subr.bf16.mxu0 0
      %1991 = vmatpush1.bf16.msra.mxu0 0
      %1992 = vmatprep.subr.bf16.mxu0 0
      %1993 = vmatpush1.bf16.msra.mxu0 0
      %1994 = vmatprep.subr.bf16.mxu0 0
      %1995 = vmatpush1.bf16.msra.mxu0 0
      %1996 = vmatprep.mubr.bf16.mxu0 0
      %1997 = vmatmul.mubr.bf16.gmra.mrb[0].mxu0 %v448
      %v1998 = vpop.f32.mrb[0].mxu0
      %v1999 = vadd.f32 %v1914, %v1998
      %v2000 = vpop.f32.mrb[0].mxu0
      %v2001 = vpop.f32.mrb[0].mxu0
      %v2002 = vadd.f32 %v1914, %v2001
      %v2003 = vpop.f32.mrb[0].mxu0
      %2004 = vmatprep.mubr.bf16.mxu0 0
      %2005 = vmatmul.mubr.bf16.gmra.mrb[0].mxu0 %v449
      %v2006 = vpop.f32.mrb[0].mxu0
      %v2007 = vadd.f32 %v1914, %v2006
      %v2008 = vpop.f32.mrb[0].mxu0
      %v2009 = vpop.f32.mrb[0].mxu0
      %v2010 = vpop.f32.mrb[0].mxu0
      %2011 = vdwg.mxu0
      %v2012 = vpack.c.bf16 %v1760, %v1757
      %v2013 = vpack.c.bf16 %v1765, %v1765
      %v2014 = vpack.c.bf16 %v1881, %v1878
      %v2015 = vpack.c.bf16 %v1886, %v1886
      %v2017 = vsel %vm814, %v2012, 0
      %v2020 = vsel %vm814, %v2013, 0
      %v2023 = vsel %vm814, %v2014, 0
      %v2026 = vsel %vm814, %v2015, 0
      %2028 = vmatprep.subr.bf16.mxu0 0
      %2029 = vmatpush1.bf16.xpose.msra.mxu0 %v2023
      %2030 = vmatprep.subr.bf16.mxu0 0
      %2031 = vmatpush1.bf16.xpose.msra.mxu0 %v2026
      %2032 = vmatprep.subr.bf16.mxu0 0
      %2033 = vmatpush1.bf16.xpose.msra.mxu0 0
      %2034 = vmatprep.subr.bf16.mxu0 0
      %2035 = vmatpush1.bf16.xpose.msra.mxu0 0
      %2036 = vmatprep.subr.bf16.mxu0 0
      %2037 = vmatpush1.bf16.xpose.msra.mxu0 0
      %2038 = vmatprep.subr.bf16.mxu0 0
      %2039 = vmatpush1.bf16.xpose.msra.mxu0 0
      %2040 = vmatprep.subr.bf16.mxu0 0
      %2041 = vmatpush1.bf16.xpose.msra.mxu0 0
      %2042 = vmatprep.subr.bf16.mxu0 0
      %2043 = vmatpush1.bf16.xpose.msra.mxu0 0
      %2044 = vmatprep.subr.bf16.mxu0 0
      %2045 = vmatpush1.bf16.xpose.msra.mxu0 0
      %2046 = vmatprep.subr.bf16.mxu0 0
      %2047 = vmatpush1.bf16.xpose.msra.mxu0 0
      %2048 = vmatprep.subr.bf16.mxu0 0
      %2049 = vmatpush1.bf16.xpose.msra.mxu0 0
      %2050 = vmatprep.subr.bf16.mxu0 0
      %2051 = vmatpush1.bf16.xpose.msra.mxu0 0
      %2052 = vmatprep.subr.bf16.mxu0 0
      %2053 = vmatpush1.bf16.xpose.msra.mxu0 0
      %2054 = vmatprep.subr.bf16.mxu0 0
      %2055 = vmatpush1.bf16.xpose.msra.mxu0 0
      %2056 = vmatprep.subr.bf16.mxu0 0
      %2057 = vmatpush1.bf16.xpose.msra.mxu0 0
      %2058 = vmatprep.subr.bf16.mxu0 0
      %2059 = vmatpush1.bf16.xpose.msra.mxu0 0
      %2060 = vmatprep.mubr.bf16.mxu0 0
      %2061 = vmatmul.mubr.bf16.gmra.mrb[0].mxu0 %v2017
      %v2062 = vpop.f32.mrb[0].mxu0
      %v2063 = vadd.f32 0.0, %v2062
      %v2064 = vpop.f32.mrb[0].mxu0
      %v2065 = vpop.f32.mrb[0].mxu0
      %v2066 = vadd.f32 0.0, %v2065
      %v2067 = vpop.f32.mrb[0].mxu0
      %2068 = vmatprep.mubr.bf16.mxu0 0
      %2069 = vmatmul.mubr.bf16.gmra.mrb[0].mxu0 %v2020
      %v2070 = vpop.f32.mrb[0].mxu0
      %v2071 = vadd.f32 0.0, %v2070
      %v2072 = vpop.f32.mrb[0].mxu0
      %v2073 = vpop.f32.mrb[0].mxu0
      %v2074 = vpop.f32.mrb[0].mxu0
      %2075 = vdwg.mxu0
      %v2076 = vmul.f32 %v2063, 0.17677669
      %v2077 = vmul.f32 %v2066, 0.17677669
      %v2078 = vmul.f32 %v2071, 0.17677669
      %v2079 = vsel %vm452, %v2076, -1e+30
      %v2080 = vsel %vm452, %v2077, -1e+30
      %v2081 = vsel %vm452, %v2078, -1e+30
      %v2082 = vsel %vm881, %v2079, -inf
      %2083 = vmax.xlane.f32.xlu0 %v2082
      %v2084 = vpop.xlane.xlu0 %2083
      %v2085 = vsel %vm881, %v2080, -inf
      %2086 = vmax.xlane.f32.xlu0 %v2085
      %v2087 = vpop.xlane.xlu0 %2086
      %v2088 = vsel %vm881, %v2081, -inf
      %2089 = vmax.xlane.f32.xlu0 %v2088
      %v2090 = vpop.xlane.xlu0 %2089
      %v2091 = vsub.f32 %v2079, %v2084
      %v2092 = vsub.f32 %v2080, %v2087
      %v2093 = vsub.f32 %v2081, %v2090
      %v2094 = vmul.f32 %v2091, 1.442695
      %v2095 = vpow.pop %v2094
      %v2096 = vmul.f32 %v2092, 1.442695
      %v2097 = vpow.pop %v2096
      %v2098 = vmul.f32 %v2093, 1.442695
      %v2099 = vpow.pop %v2098
      %v2100 = vsel %vm881, %v2095, 0.0
      %2101 = vadd.xlane.f32.xlu0 %v2100
      %v2102 = vpop.xlane.xlu0 %2101
      %v2103 = vsel %vm881, %v2097, 0.0
      %2104 = vadd.xlane.f32.xlu0 %v2103
      %v2105 = vpop.xlane.xlu0 %2104
      %v2106 = vsel %vm881, %v2099, 0.0
      %2107 = vadd.xlane.f32.xlu0 %v2106
      %v2108 = vpop.xlane.xlu0 %2107
      %v2109 = vrcp.pop %v2102
      %v2110 = vrcp.pop %v2105
      %v2111 = vrcp.pop %v2108
      %v2112 = vmul.f32 %v2095, %v2109
      %v2113 = vmul.f32 %v2097, %v2110
      %v2114 = vmul.f32 %v2099, %v2111
      %v2115 = vpack.c.bf16 %v2113, %v2112
      %v2116 = vpack.c.bf16 %v2114, %v2114
      %v2117 = vpack.c.bf16 %v2002, %v1999
      %v2118 = vpack.c.bf16 %v2007, %v2007
      %v2120 = vsel %vm881, %v2115, 0
      %v2123 = vsel %vm881, %v2116, 0
      %v2126 = vsel %vm925, %v2118, 0
      %2128 = vmatprep.subr.bf16.mxu0 0
      %2129 = vmatpush1.bf16.msra.mxu0 %v2117
      %2130 = vmatprep.subr.bf16.mxu0 0
      %2131 = vmatpush1.bf16.msra.mxu0 %v2126
      %2132 = vmatprep.subr.bf16.mxu0 0
      %2133 = vmatpush1.bf16.msra.mxu0 0
      %2134 = vmatprep.subr.bf16.mxu0 0
      %2135 = vmatpush1.bf16.msra.mxu0 0
      %2136 = vmatprep.subr.bf16.mxu0 0
      %2137 = vmatpush1.bf16.msra.mxu0 0
      %2138 = vmatprep.subr.bf16.mxu0 0
      %2139 = vmatpush1.bf16.msra.mxu0 0
      %2140 = vmatprep.subr.bf16.mxu0 0
      %2141 = vmatpush1.bf16.msra.mxu0 0
      %2142 = vmatprep.subr.bf16.mxu0 0
      %2143 = vmatpush1.bf16.msra.mxu0 0
      %2144 = vmatprep.subr.bf16.mxu0 0
      %2145 = vmatpush1.bf16.msra.mxu0 0
      %2146 = vmatprep.subr.bf16.mxu0 0
      %2147 = vmatpush1.bf16.msra.mxu0 0
      %2148 = vmatprep.subr.bf16.mxu0 0
      %2149 = vmatpush1.bf16.msra.mxu0 0
      %2150 = vmatprep.subr.bf16.mxu0 0
      %2151 = vmatpush1.bf16.msra.mxu0 0
      %2152 = vmatprep.subr.bf16.mxu0 0
      %2153 = vmatpush1.bf16.msra.mxu0 0
      %2154 = vmatprep.subr.bf16.mxu0 0
      %2155 = vmatpush1.bf16.msra.mxu0 0
      %2156 = vmatprep.subr.bf16.mxu0 0
      %2157 = vmatpush1.bf16.msra.mxu0 0
      %2158 = vmatprep.subr.bf16.mxu0 0
      %2159 = vmatpush1.bf16.msra.mxu0 0
      %2160 = vmatprep.mubr.bf16.mxu0 0
      %2161 = vmatmul.mubr.bf16.gmra.mrb[0].mxu0 %v2120
      %v2162 = vpop.f32.mrb[0].mxu0
      %v2163 = vadd.f32 0.0, %v2162
      %v2164 = vpop.f32.mrb[0].mxu0
      %v2165 = vpop.f32.mrb[0].mxu0
      %v2166 = vadd.f32 0.0, %v2165
      %v2167 = vpop.f32.mrb[0].mxu0
      %2168 = vmatprep.mubr.bf16.mxu0 0
      %2169 = vmatmul.mubr.bf16.gmra.mrb[0].mxu0 %v2123
      %v2170 = vpop.f32.mrb[0].mxu0
      %v2171 = vadd.f32 0.0, %v2170
      %v2172 = vpop.f32.mrb[0].mxu0
      %v2173 = vpop.f32.mrb[0].mxu0
      %v2174 = vpop.f32.mrb[0].mxu0
      %2175 = vdwg.mxu0
      %v2176 = vpack.c.bf16 %v2166, %v2163
      %v2177 = vpack.c.bf16 %v2171, %v2171
      %s2178 = scalar_lea.vmem %s9, 32
      %v2179 = vld [vmem:[%s2178] sm:$0xf]
      %v2180 = vld [vmem:[%s2178 + $0x4] sm:$0xf]
      %v2181 = vld [vmem:[%s2178 + $0x8] sm:$0xf]
      %v2182 = vld [vmem:[%s2178 + $0xc] sm:$0xf]
      %v2187 = vunpack.c.l.b16 %v2179
      %v2188 = vunpack.c.l.b16 %v2180
      %v2189 = vunpack.c.l.b16 %v2181
      %v2190 = vunpack.c.l.b16 %v2182
      %v2191 = vpack.c.b16 %v2188, %v2187
      %v2192 = vpack.c.b16 %v2190, %v2189
      %v2196 = vsel %vm814, %v2176, 0
      %v2199 = vsel %vm814, %v2177, 0
      %2201 = vmatprep.subr.bf16.mxu0 0
      %2202 = vmatpush1.bf16.msra.mxu0 %v2191
      %2203 = vmatprep.subr.bf16.mxu0 0
      %2204 = vmatpush1.bf16.msra.mxu0 %v2192
      %2205 = vmatprep.subr.bf16.mxu0 0
      %2206 = vmatpush1.bf16.msra.mxu0 0
      %2207 = vmatprep.subr.bf16.mxu0 0
      %2208 = vmatpush1.bf16.msra.mxu0 0
      %2209 = vmatprep.subr.bf16.mxu0 0
      %2210 = vmatpush1.bf16.msra.mxu0 0
      %2211 = vmatprep.subr.bf16.mxu0 0
      %2212 = vmatpush1.bf16.msra.mxu0 0
      %2213 = vmatprep.subr.bf16.mxu0 0
      %2214 = vmatpush1.bf16.msra.mxu0 0
      %2215 = vmatprep.subr.bf16.mxu0 0
      %2216 = vmatpush1.bf16.msra.mxu0 0
      %2217 = vmatprep.subr.bf16.mxu0 0
      %2218 = vmatpush1.bf16.msra.mxu0 0
      %2219 = vmatprep.subr.bf16.mxu0 0
      %2220 = vmatpush1.bf16.msra.mxu0 0
      %2221 = vmatprep.subr.bf16.mxu0 0
      %2222 = vmatpush1.bf16.msra.mxu0 0
      %2223 = vmatprep.subr.bf16.mxu0 0
      %2224 = vmatpush1.bf16.msra.mxu0 0
      %2225 = vmatprep.subr.bf16.mxu0 0
      %2226 = vmatpush1.bf16.msra.mxu0 0
      %2227 = vmatprep.subr.bf16.mxu0 0
      %2228 = vmatpush1.bf16.msra.mxu0 0
      %2229 = vmatprep.subr.bf16.mxu0 0
      %2230 = vmatpush1.bf16.msra.mxu0 0
      %2231 = vmatprep.subr.bf16.mxu0 0
      %2232 = vmatpush1.bf16.msra.mxu0 0
      %2233 = vmatprep.mubr.bf16.mxu0 0
      %2234 = vmatmul.mubr.bf16.gmra.mrb[0].mxu0 %v2196
      %v2235 = vpop.f32.mrb[0].mxu0
      %v2236 = vadd.f32 0.0, %v2235
      %v2237 = vpop.f32.mrb[0].mxu0
      %v2238 = vpop.f32.mrb[0].mxu0
      %v2239 = vadd.f32 0.0, %v2238
      %v2240 = vpop.f32.mrb[0].mxu0
      %2241 = vmatprep.mubr.bf16.mxu0 0
      %2242 = vmatmul.mubr.bf16.gmra.mrb[0].mxu0 %v2199
      %v2243 = vpop.f32.mrb[0].mxu0
      %v2244 = vadd.f32 0.0, %v2243
      %v2245 = vpop.f32.mrb[0].mxu0
      %v2246 = vpop.f32.mrb[0].mxu0
      %v2247 = vpop.f32.mrb[0].mxu0
      %2248 = vdwg.mxu0
      %v2249 = vadd.f32 %v1636, %v2236
      %v2250 = vadd.f32 %v1639, %v2239
      %v2251 = vadd.f32 %v1644, %v2244
      %s2252 = scalar_lea.vmem %s3, 192
      %v2253 = vld [vmem:[%s2252] sm:$0xf]
      %v2254 = vld [vmem:[%s2252 + $0x4] sm:$0xf]
      %v2255 = vld [vmem:[%s2252 + $0x8] sm:$0xf]
      %v2256 = vld [vmem:[%s2252 + $0xc] sm:$0xf]
      %v2257 = vld [vmem:[%s2252 + $0x10] sm:$0xf]
      %v2258 = vld [vmem:[%s2252 + $0x14] sm:$0xf]
      %v2259 = vld [vmem:[%s2252 + $0x18] sm:$0xf]
      %v2260 = vld [vmem:[%s2252 + $0x1c] sm:$0xf]
      %v2261 = vld [vmem:[%s2252 + $0x20] sm:$0xf]
      %v2262 = vld [vmem:[%s2252 + $0x24] sm:$0xf]
      %v2263 = vld [vmem:[%s2252 + $0x28] sm:$0xf]
      %v2264 = vld [vmem:[%s2252 + $0x2c] sm:$0xf]
      %v2265 = vld [vmem:[%s2252 + $0x30] sm:$0xf]
      %v2266 = vld [vmem:[%s2252 + $0x34] sm:$0xf]
      %v2267 = vld [vmem:[%s2252 + $0x38] sm:$0xf]
      %v2268 = vld [vmem:[%s2252 + $0x3c] sm:$0xf]
      %s2269 = scalar_lea.vmem %s6, 3
      %v2270 = vld [vmem:[%s2269] sm:$0x1]
      %v2272 = vlaneseq
      %v2273 = vshrl.u32 %v2272, 7
      %v2274 = vsub.s32 0, %v2273
      %v2275 = vrot.slane %v2270, %v2274
      %v2293 = vunpack.c.l.b16 %v2253
      %v2294 = vunpack.c.l.b16 %v2254
      %v2295 = vunpack.c.l.b16 %v2255
      %v2296 = vunpack.c.l.b16 %v2256
      %v2297 = vunpack.c.l.b16 %v2257
      %v2298 = vunpack.c.l.b16 %v2258
      %v2299 = vunpack.c.l.b16 %v2259
      %v2300 = vunpack.c.l.b16 %v2260
      %v2301 = vunpack.c.l.b16 %v2261
      %v2302 = vunpack.c.l.b16 %v2262
      %v2303 = vunpack.c.l.b16 %v2263
      %v2304 = vunpack.c.l.b16 %v2264
      %v2305 = vunpack.c.l.b16 %v2265
      %v2306 = vunpack.c.l.b16 %v2266
      %v2307 = vunpack.c.l.b16 %v2267
      %v2308 = vunpack.c.l.b16 %v2268
      %v2309 = vpack.c.b16 %v2294, %v2293
      %v2310 = vpack.c.b16 %v2296, %v2295
      %v2311 = vpack.c.b16 %v2298, %v2297
      %v2312 = vpack.c.b16 %v2300, %v2299
      %v2313 = vpack.c.b16 %v2302, %v2301
      %v2314 = vpack.c.b16 %v2304, %v2303
      %v2315 = vpack.c.b16 %v2306, %v2305
      %v2316 = vpack.c.b16 %v2308, %v2307
      %2325 = vmatprep.subr.bf16.mxu0 0
      %2326 = vmatpush1.bf16.msra.mxu0 %v2309
      %2327 = vmatprep.subr.bf16.mxu0 0
      %2328 = vmatpush1.bf16.msra.mxu0 %v2310
      %2329 = vmatprep.subr.bf16.mxu0 0
      %2330 = vmatpush1.bf16.msra.mxu0 %v2311
      %2331 = vmatprep.subr.bf16.mxu0 0
      %2332 = vmatpush1.bf16.msra.mxu0 %v2312
      %2333 = vmatprep.subr.bf16.mxu0 0
      %2334 = vmatpush1.bf16.msra.mxu0 %v2313
      %2335 = vmatprep.subr.bf16.mxu0 0
      %2336 = vmatpush1.bf16.msra.mxu0 %v2314
      %2337 = vmatprep.subr.bf16.mxu0 0
      %2338 = vmatpush1.bf16.msra.mxu0 %v2315
      %2339 = vmatprep.subr.bf16.mxu0 0
      %2340 = vmatpush1.bf16.msra.mxu0 %v2316
      %2341 = vmatprep.subr.bf16.mxu0 0
      %2342 = vmatpush1.bf16.msra.mxu0 0
      %2343 = vmatprep.subr.bf16.mxu0 0
      %2344 = vmatpush1.bf16.msra.mxu0 0
      %2345 = vmatprep.subr.bf16.mxu0 0
      %2346 = vmatpush1.bf16.msra.mxu0 0
      %2347 = vmatprep.subr.bf16.mxu0 0
      %2348 = vmatpush1.bf16.msra.mxu0 0
      %2349 = vmatprep.subr.bf16.mxu0 0
      %2350 = vmatpush1.bf16.msra.mxu0 0
      %2351 = vmatprep.subr.bf16.mxu0 0
      %2352 = vmatpush1.bf16.msra.mxu0 0
      %2353 = vmatprep.subr.bf16.mxu0 0
      %2354 = vmatpush1.bf16.msra.mxu0 0
      %2355 = vmatprep.subr.bf16.mxu0 0
      %2356 = vmatpush1.bf16.msra.mxu0 0
      %2357 = vmatprep.mubr.bf16.mxu0 0
      %2358 = vmatmul.mubr.bf16.gmra.mrb[0].mxu0 %v448
      %v2359 = vpop.f32.mrb[0].mxu0
      %v2360 = vadd.f32 %v2275, %v2359
      %v2361 = vpop.f32.mrb[0].mxu0
      %v2362 = vpop.f32.mrb[0].mxu0
      %v2363 = vadd.f32 %v2275, %v2362
      %v2364 = vpop.f32.mrb[0].mxu0
      %2365 = vmatprep.mubr.bf16.mxu0 0
      %2366 = vmatmul.mubr.bf16.gmra.mrb[0].mxu0 %v449
      %v2367 = vpop.f32.mrb[0].mxu0
      %v2368 = vadd.f32 %v2275, %v2367
      %v2369 = vpop.f32.mrb[0].mxu0
      %v2370 = vpop.f32.mrb[0].mxu0
      %v2371 = vpop.f32.mrb[0].mxu0
      %2372 = vdwg.mxu0
      %s2373 = scalar_lea.vmem %s4, 192
      %v2374 = vld [vmem:[%s2373] sm:$0xf]
      %v2375 = vld [vmem:[%s2373 + $0x4] sm:$0xf]
      %v2376 = vld [vmem:[%s2373 + $0x8] sm:$0xf]
      %v2377 = vld [vmem:[%s2373 + $0xc] sm:$0xf]
      %v2378 = vld [vmem:[%s2373 + $0x10] sm:$0xf]
      %v2379 = vld [vmem:[%s2373 + $0x14] sm:$0xf]
      %v2380 = vld [vmem:[%s2373 + $0x18] sm:$0xf]
      %v2381 = vld [vmem:[%s2373 + $0x1c] sm:$0xf]
      %v2382 = vld [vmem:[%s2373 + $0x20] sm:$0xf]
      %v2383 = vld [vmem:[%s2373 + $0x24] sm:$0xf]
      %v2384 = vld [vmem:[%s2373 + $0x28] sm:$0xf]
      %v2385 = vld [vmem:[%s2373 + $0x2c] sm:$0xf]
      %v2386 = vld [vmem:[%s2373 + $0x30] sm:$0xf]
      %v2387 = vld [vmem:[%s2373 + $0x34] sm:$0xf]
      %v2388 = vld [vmem:[%s2373 + $0x38] sm:$0xf]
      %v2389 = vld [vmem:[%s2373 + $0x3c] sm:$0xf]
      %s2390 = scalar_lea.vmem %s7, 3
      %v2391 = vld [vmem:[%s2390] sm:$0x1]
      %v2393 = vlaneseq
      %v2394 = vshrl.u32 %v2393, 7
      %v2395 = vsub.s32 0, %v2394
      %v2396 = vrot.slane %v2391, %v2395
      %v2414 = vunpack.c.l.b16 %v2374
      %v2415 = vunpack.c.l.b16 %v2375
      %v2416 = vunpack.c.l.b16 %v2376
      %v2417 = vunpack.c.l.b16 %v2377
      %v2418 = vunpack.c.l.b16 %v2378
      %v2419 = vunpack.c.l.b16 %v2379
      %v2420 = vunpack.c.l.b16 %v2380
      %v2421 = vunpack.c.l.b16 %v2381
      %v2422 = vunpack.c.l.b16 %v2382
      %v2423 = vunpack.c.l.b16 %v2383
      %v2424 = vunpack.c.l.b16 %v2384
      %v2425 = vunpack.c.l.b16 %v2385
      %v2426 = vunpack.c.l.b16 %v2386
      %v2427 = vunpack.c.l.b16 %v2387
      %v2428 = vunpack.c.l.b16 %v2388
      %v2429 = vunpack.c.l.b16 %v2389
      %v2430 = vpack.c.b16 %v2415, %v2414
      %v2431 = vpack.c.b16 %v2417, %v2416
      %v2432 = vpack.c.b16 %v2419, %v2418
      %v2433 = vpack.c.b16 %v2421, %v2420
      %v2434 = vpack.c.b16 %v2423, %v2422
      %v2435 = vpack.c.b16 %v2425, %v2424
      %v2436 = vpack.c.b16 %v2427, %v2426
      %v2437 = vpack.c.b16 %v2429, %v2428
      %2446 = vmatprep.subr.bf16.mxu0 0
      %2447 = vmatpush1.bf16.msra.mxu0 %v2430
      %2448 = vmatprep.subr.bf16.mxu0 0
      %2449 = vmatpush1.bf16.msra.mxu0 %v2431
      %2450 = vmatprep.subr.bf16.mxu0 0
      %2451 = vmatpush1.bf16.msra.mxu0 %v2432
      %2452 = vmatprep.subr.bf16.mxu0 0
      %2453 = vmatpush1.bf16.msra.mxu0 %v2433
      %2454 = vmatprep.subr.bf16.mxu0 0
      %2455 = vmatpush1.bf16.msra.mxu0 %v2434
      %2456 = vmatprep.subr.bf16.mxu0 0
      %2457 = vmatpush1.bf16.msra.mxu0 %v2435
      %2458 = vmatprep.subr.bf16.mxu0 0
      %2459 = vmatpush1.bf16.msra.mxu0 %v2436
      %2460 = vmatprep.subr.bf16.mxu0 0
      %2461 = vmatpush1.bf16.msra.mxu0 %v2437
      %2462 = vmatprep.subr.bf16.mxu0 0
      %2463 = vmatpush1.bf16.msra.mxu0 0
      %2464 = vmatprep.subr.bf16.mxu0 0
      %2465 = vmatpush1.bf16.msra.mxu0 0
      %2466 = vmatprep.subr.bf16.mxu0 0
      %2467 = vmatpush1.bf16.msra.mxu0 0
      %2468 = vmatprep.subr.bf16.mxu0 0
      %2469 = vmatpush1.bf16.msra.mxu0 0
      %2470 = vmatprep.subr.bf16.mxu0 0
      %2471 = vmatpush1.bf16.msra.mxu0 0
      %2472 = vmatprep.subr.bf16.mxu0 0
      %2473 = vmatpush1.bf16.msra.mxu0 0
      %2474 = vmatprep.subr.bf16.mxu0 0
      %2475 = vmatpush1.bf16.msra.mxu0 0
      %2476 = vmatprep.subr.bf16.mxu0 0
      %2477 = vmatpush1.bf16.msra.mxu0 0
      %2478 = vmatprep.mubr.bf16.mxu0 0
      %2479 = vmatmul.mubr.bf16.gmra.mrb[0].mxu0 %v448
      %v2480 = vpop.f32.mrb[0].mxu0
      %v2481 = vadd.f32 %v2396, %v2480
      %v2482 = vpop.f32.mrb[0].mxu0
      %v2483 = vpop.f32.mrb[0].mxu0
      %v2484 = vadd.f32 %v2396, %v2483
      %v2485 = vpop.f32.mrb[0].mxu0
      %2486 = vmatprep.mubr.bf16.mxu0 0
      %2487 = vmatmul.mubr.bf16.gmra.mrb[0].mxu0 %v449
      %v2488 = vpop.f32.mrb[0].mxu0
      %v2489 = vadd.f32 %v2396, %v2488
      %v2490 = vpop.f32.mrb[0].mxu0
      %v2491 = vpop.f32.mrb[0].mxu0
      %v2492 = vpop.f32.mrb[0].mxu0
      %2493 = vdwg.mxu0
      %s2494 = scalar_lea.vmem %s5, 192
      %v2495 = vld [vmem:[%s2494] sm:$0xf]
      %v2496 = vld [vmem:[%s2494 + $0x4] sm:$0xf]
      %v2497 = vld [vmem:[%s2494 + $0x8] sm:$0xf]
      %v2498 = vld [vmem:[%s2494 + $0xc] sm:$0xf]
      %v2499 = vld [vmem:[%s2494 + $0x10] sm:$0xf]
      %v2500 = vld [vmem:[%s2494 + $0x14] sm:$0xf]
      %v2501 = vld [vmem:[%s2494 + $0x18] sm:$0xf]
      %v2502 = vld [vmem:[%s2494 + $0x1c] sm:$0xf]
      %v2503 = vld [vmem:[%s2494 + $0x20] sm:$0xf]
      %v2504 = vld [vmem:[%s2494 + $0x24] sm:$0xf]
      %v2505 = vld [vmem:[%s2494 + $0x28] sm:$0xf]
      %v2506 = vld [vmem:[%s2494 + $0x2c] sm:$0xf]
      %v2507 = vld [vmem:[%s2494 + $0x30] sm:$0xf]
      %v2508 = vld [vmem:[%s2494 + $0x34] sm:$0xf]
      %v2509 = vld [vmem:[%s2494 + $0x38] sm:$0xf]
      %v2510 = vld [vmem:[%s2494 + $0x3c] sm:$0xf]
      %s2511 = scalar_lea.vmem %s8, 3
      %v2512 = vld [vmem:[%s2511] sm:$0x1]
      %v2514 = vlaneseq
      %v2515 = vshrl.u32 %v2514, 7
      %v2516 = vsub.s32 0, %v2515
      %v2517 = vrot.slane %v2512, %v2516
      %v2535 = vunpack.c.l.b16 %v2495
      %v2536 = vunpack.c.l.b16 %v2496
      %v2537 = vunpack.c.l.b16 %v2497
      %v2538 = vunpack.c.l.b16 %v2498
      %v2539 = vunpack.c.l.b16 %v2499
      %v2540 = vunpack.c.l.b16 %v2500
      %v2541 = vunpack.c.l.b16 %v2501
      %v2542 = vunpack.c.l.b16 %v2502
      %v2543 = vunpack.c.l.b16 %v2503
      %v2544 = vunpack.c.l.b16 %v2504
      %v2545 = vunpack.c.l.b16 %v2505
      %v2546 = vunpack.c.l.b16 %v2506
      %v2547 = vunpack.c.l.b16 %v2507
      %v2548 = vunpack.c.l.b16 %v2508
      %v2549 = vunpack.c.l.b16 %v2509
      %v2550 = vunpack.c.l.b16 %v2510
      %v2551 = vpack.c.b16 %v2536, %v2535
      %v2552 = vpack.c.b16 %v2538, %v2537
      %v2553 = vpack.c.b16 %v2540, %v2539
      %v2554 = vpack.c.b16 %v2542, %v2541
      %v2555 = vpack.c.b16 %v2544, %v2543
      %v2556 = vpack.c.b16 %v2546, %v2545
      %v2557 = vpack.c.b16 %v2548, %v2547
      %v2558 = vpack.c.b16 %v2550, %v2549
      %2567 = vmatprep.subr.bf16.mxu0 0
      %2568 = vmatpush1.bf16.msra.mxu0 %v2551
      %2569 = vmatprep.subr.bf16.mxu0 0
      %2570 = vmatpush1.bf16.msra.mxu0 %v2552
      %2571 = vmatprep.subr.bf16.mxu0 0
      %2572 = vmatpush1.bf16.msra.mxu0 %v2553
      %2573 = vmatprep.subr.bf16.mxu0 0
      %2574 = vmatpush1.bf16.msra.mxu0 %v2554
      %2575 = vmatprep.subr.bf16.mxu0 0
      %2576 = vmatpush1.bf16.msra.mxu0 %v2555
      %2577 = vmatprep.subr.bf16.mxu0 0
      %2578 = vmatpush1.bf16.msra.mxu0 %v2556
      %2579 = vmatprep.subr.bf16.mxu0 0
      %2580 = vmatpush1.bf16.msra.mxu0 %v2557
      %2581 = vmatprep.subr.bf16.mxu0 0
      %2582 = vmatpush1.bf16.msra.mxu0 %v2558
      %2583 = vmatprep.subr.bf16.mxu0 0
      %2584 = vmatpush1.bf16.msra.mxu0 0
      %2585 = vmatprep.subr.bf16.mxu0 0
      %2586 = vmatpush1.bf16.msra.mxu0 0
      %2587 = vmatprep.subr.bf16.mxu0 0
      %2588 = vmatpush1.bf16.msra.mxu0 0
      %2589 = vmatprep.subr.bf16.mxu0 0
      %2590 = vmatpush1.bf16.msra.mxu0 0
      %2591 = vmatprep.subr.bf16.mxu0 0
      %2592 = vmatpush1.bf16.msra.mxu0 0
      %2593 = vmatprep.subr.bf16.mxu0 0
      %2594 = vmatpush1.bf16.msra.mxu0 0
      %2595 = vmatprep.subr.bf16.mxu0 0
      %2596 = vmatpush1.bf16.msra.mxu0 0
      %2597 = vmatprep.subr.bf16.mxu0 0
      %2598 = vmatpush1.bf16.msra.mxu0 0
      %2599 = vmatprep.mubr.bf16.mxu0 0
      %2600 = vmatmul.mubr.bf16.gmra.mrb[0].mxu0 %v448
      %v2601 = vpop.f32.mrb[0].mxu0
      %v2602 = vadd.f32 %v2517, %v2601
      %v2603 = vpop.f32.mrb[0].mxu0
      %v2604 = vpop.f32.mrb[0].mxu0
      %v2605 = vadd.f32 %v2517, %v2604
      %v2606 = vpop.f32.mrb[0].mxu0
      %2607 = vmatprep.mubr.bf16.mxu0 0
      %2608 = vmatmul.mubr.bf16.gmra.mrb[0].mxu0 %v449
      %v2609 = vpop.f32.mrb[0].mxu0
      %v2610 = vadd.f32 %v2517, %v2609
      %v2611 = vpop.f32.mrb[0].mxu0
      %v2612 = vpop.f32.mrb[0].mxu0
      %v2613 = vpop.f32.mrb[0].mxu0
      %2614 = vdwg.mxu0
      %v2615 = vpack.c.bf16 %v2363, %v2360
      %v2616 = vpack.c.bf16 %v2368, %v2368
      %v2617 = vpack.c.bf16 %v2484, %v2481
      %v2618 = vpack.c.bf16 %v2489, %v2489
      %v2620 = vsel %vm814, %v2615, 0
      %v2623 = vsel %vm814, %v2616, 0
      %v2626 = vsel %vm814, %v2617, 0
      %v2629 = vsel %vm814, %v2618, 0
      %2631 = vmatprep.subr.bf16.mxu0 0
      %2632 = vmatpush1.bf16.xpose.msra.mxu0 %v2626
      %2633 = vmatprep.subr.bf16.mxu0 0
      %2634 = vmatpush1.bf16.xpose.msra.mxu0 %v2629
      %2635 = vmatprep.subr.bf16.mxu0 0
      %2636 = vmatpush1.bf16.xpose.msra.mxu0 0
      %2637 = vmatprep.subr.bf16.mxu0 0
      %2638 = vmatpush1.bf16.xpose.msra.mxu0 0
      %2639 = vmatprep.subr.bf16.mxu0 0
      %2640 = vmatpush1.bf16.xpose.msra.mxu0 0
      %2641 = vmatprep.subr.bf16.mxu0 0
      %2642 = vmatpush1.bf16.xpose.msra.mxu0 0
      %2643 = vmatprep.subr.bf16.mxu0 0
      %2644 = vmatpush1.bf16.xpose.msra.mxu0 0
      %2645 = vmatprep.subr.bf16.mxu0 0
      %2646 = vmatpush1.bf16.xpose.msra.mxu0 0
      %2647 = vmatprep.subr.bf16.mxu0 0
      %2648 = vmatpush1.bf16.xpose.msra.mxu0 0
      %2649 = vmatprep.subr.bf16.mxu0 0
      %2650 = vmatpush1.bf16.xpose.msra.mxu0 0
      %2651 = vmatprep.subr.bf16.mxu0 0
      %2652 = vmatpush1.bf16.xpose.msra.mxu0 0
      %2653 = vmatprep.subr.bf16.mxu0 0
      %2654 = vmatpush1.bf16.xpose.msra.mxu0 0
      %2655 = vmatprep.subr.bf16.mxu0 0
      %2656 = vmatpush1.bf16.xpose.msra.mxu0 0
      %2657 = vmatprep.subr.bf16.mxu0 0
      %2658 = vmatpush1.bf16.xpose.msra.mxu0 0
      %2659 = vmatprep.subr.bf16.mxu0 0
      %2660 = vmatpush1.bf16.xpose.msra.mxu0 0
      %2661 = vmatprep.subr.bf16.mxu0 0
      %2662 = vmatpush1.bf16.xpose.msra.mxu0 0
      %2663 = vmatprep.mubr.bf16.mxu0 0
      %2664 = vmatmul.mubr.bf16.gmra.mrb[0].mxu0 %v2620
      %v2665 = vpop.f32.mrb[0].mxu0
      %v2666 = vadd.f32 0.0, %v2665
      %v2667 = vpop.f32.mrb[0].mxu0
      %v2668 = vpop.f32.mrb[0].mxu0
      %v2669 = vadd.f32 0.0, %v2668
      %v2670 = vpop.f32.mrb[0].mxu0
      %2671 = vmatprep.mubr.bf16.mxu0 0
      %2672 = vmatmul.mubr.bf16.gmra.mrb[0].mxu0 %v2623
      %v2673 = vpop.f32.mrb[0].mxu0
      %v2674 = vadd.f32 0.0, %v2673
      %v2675 = vpop.f32.mrb[0].mxu0
      %v2676 = vpop.f32.mrb[0].mxu0
      %v2677 = vpop.f32.mrb[0].mxu0
      %2678 = vdwg.mxu0
      %v2679 = vmul.f32 %v2666, 0.17677669
      %v2680 = vmul.f32 %v2669, 0.17677669
      %v2681 = vmul.f32 %v2674, 0.17677669
      %v2682 = vsel %vm452, %v2679, -1e+30
      %v2683 = vsel %vm452, %v2680, -1e+30
      %v2684 = vsel %vm452, %v2681, -1e+30
      %v2685 = vsel %vm881, %v2682, -inf
      %2686 = vmax.xlane.f32.xlu0 %v2685
      %v2687 = vpop.xlane.xlu0 %2686
      %v2688 = vsel %vm881, %v2683, -inf
      %2689 = vmax.xlane.f32.xlu0 %v2688
      %v2690 = vpop.xlane.xlu0 %2689
      %v2691 = vsel %vm881, %v2684, -inf
      %2692 = vmax.xlane.f32.xlu0 %v2691
      %v2693 = vpop.xlane.xlu0 %2692
      %v2694 = vsub.f32 %v2682, %v2687
      %v2695 = vsub.f32 %v2683, %v2690
      %v2696 = vsub.f32 %v2684, %v2693
      %v2697 = vmul.f32 %v2694, 1.442695
      %v2698 = vpow.pop %v2697
      %v2699 = vmul.f32 %v2695, 1.442695
      %v2700 = vpow.pop %v2699
      %v2701 = vmul.f32 %v2696, 1.442695
      %v2702 = vpow.pop %v2701
      %v2703 = vsel %vm881, %v2698, 0.0
      %2704 = vadd.xlane.f32.xlu0 %v2703
      %v2705 = vpop.xlane.xlu0 %2704
      %v2706 = vsel %vm881, %v2700, 0.0
      %2707 = vadd.xlane.f32.xlu0 %v2706
      %v2708 = vpop.xlane.xlu0 %2707
      %v2709 = vsel %vm881, %v2702, 0.0
      %2710 = vadd.xlane.f32.xlu0 %v2709
      %v2711 = vpop.xlane.xlu0 %2710
      %v2712 = vrcp.pop %v2705
      %v2713 = vrcp.pop %v2708
      %v2714 = vrcp.pop %v2711
      %v2715 = vmul.f32 %v2698, %v2712
      %v2716 = vmul.f32 %v2700, %v2713
      %v2717 = vmul.f32 %v2702, %v2714
      %v2718 = vpack.c.bf16 %v2716, %v2715
      %v2719 = vpack.c.bf16 %v2717, %v2717
      %v2720 = vpack.c.bf16 %v2605, %v2602
      %v2721 = vpack.c.bf16 %v2610, %v2610
      %v2723 = vsel %vm881, %v2718, 0
      %v2726 = vsel %vm881, %v2719, 0
      %v2729 = vsel %vm925, %v2721, 0
      %2731 = vmatprep.subr.bf16.mxu0 0
      %2732 = vmatpush1.bf16.msra.mxu0 %v2720
      %2733 = vmatprep.subr.bf16.mxu0 0
      %2734 = vmatpush1.bf16.msra.mxu0 %v2729
      %2735 = vmatprep.subr.bf16.mxu0 0
      %2736 = vmatpush1.bf16.msra.mxu0 0
      %2737 = vmatprep.subr.bf16.mxu0 0
      %2738 = vmatpush1.bf16.msra.mxu0 0
      %2739 = vmatprep.subr.bf16.mxu0 0
      %2740 = vmatpush1.bf16.msra.mxu0 0
      %2741 = vmatprep.subr.bf16.mxu0 0
      %2742 = vmatpush1.bf16.msra.mxu0 0
      %2743 = vmatprep.subr.bf16.mxu0 0
      %2744 = vmatpush1.bf16.msra.mxu0 0
      %2745 = vmatprep.subr.bf16.mxu0 0
      %2746 = vmatpush1.bf16.msra.mxu0 0
      %2747 = vmatprep.subr.bf16.mxu0 0
      %2748 = vmatpush1.bf16.msra.mxu0 0
      %2749 = vmatprep.subr.bf16.mxu0 0
      %2750 = vmatpush1.bf16.msra.mxu0 0
      %2751 = vmatprep.subr.bf16.mxu0 0
      %2752 = vmatpush1.bf16.msra.mxu0 0
      %2753 = vmatprep.subr.bf16.mxu0 0
      %2754 = vmatpush1.bf16.msra.mxu0 0
      %2755 = vmatprep.subr.bf16.mxu0 0
      %2756 = vmatpush1.bf16.msra.mxu0 0
      %2757 = vmatprep.subr.bf16.mxu0 0
      %2758 = vmatpush1.bf16.msra.mxu0 0
      %2759 = vmatprep.subr.bf16.mxu0 0
      %2760 = vmatpush1.bf16.msra.mxu0 0
      %2761 = vmatprep.subr.bf16.mxu0 0
      %2762 = vmatpush1.bf16.msra.mxu0 0
      %2763 = vmatprep.mubr.bf16.mxu0 0
      %2764 = vmatmul.mubr.bf16.gmra.mrb[0].mxu0 %v2723
      %v2765 = vpop.f32.mrb[0].mxu0
      %v2766 = vadd.f32 0.0, %v2765
      %v2767 = vpop.f32.mrb[0].mxu0
      %v2768 = vpop.f32.mrb[0].mxu0
      %v2769 = vadd.f32 0.0, %v2768
      %v2770 = vpop.f32.mrb[0].mxu0
      %2771 = vmatprep.mubr.bf16.mxu0 0
      %2772 = vmatmul.mubr.bf16.gmra.mrb[0].mxu0 %v2726
      %v2773 = vpop.f32.mrb[0].mxu0
      %v2774 = vadd.f32 0.0, %v2773
      %v2775 = vpop.f32.mrb[0].mxu0
      %v2776 = vpop.f32.mrb[0].mxu0
      %v2777 = vpop.f32.mrb[0].mxu0
      %2778 = vdwg.mxu0
      %v2779 = vpack.c.bf16 %v2769, %v2766
      %v2780 = vpack.c.bf16 %v2774, %v2774
      %s2781 = scalar_lea.vmem %s9, 48
      %v2782 = vld [vmem:[%s2781] sm:$0xf]
      %v2783 = vld [vmem:[%s2781 + $0x4] sm:$0xf]
      %v2784 = vld [vmem:[%s2781 + $0x8] sm:$0xf]
      %v2785 = vld [vmem:[%s2781 + $0xc] sm:$0xf]
      %v2790 = vunpack.c.l.b16 %v2782
      %v2791 = vunpack.c.l.b16 %v2783
      %v2792 = vunpack.c.l.b16 %v2784
      %v2793 = vunpack.c.l.b16 %v2785
      %v2794 = vpack.c.b16 %v2791, %v2790
      %v2795 = vpack.c.b16 %v2793, %v2792
      %v2799 = vsel %vm814, %v2779, 0
      %v2802 = vsel %vm814, %v2780, 0
      %2804 = vmatprep.subr.bf16.mxu0 0
      %2805 = vmatpush1.bf16.msra.mxu0 %v2794
      %2806 = vmatprep.subr.bf16.mxu0 0
      %2807 = vmatpush1.bf16.msra.mxu0 %v2795
      %2808 = vmatprep.subr.bf16.mxu0 0
      %2809 = vmatpush1.bf16.msra.mxu0 0
      %2810 = vmatprep.subr.bf16.mxu0 0
      %2811 = vmatpush1.bf16.msra.mxu0 0
      %2812 = vmatprep.subr.bf16.mxu0 0
      %2813 = vmatpush1.bf16.msra.mxu0 0
      %2814 = vmatprep.subr.bf16.mxu0 0
      %2815 = vmatpush1.bf16.msra.mxu0 0
      %2816 = vmatprep.subr.bf16.mxu0 0
      %2817 = vmatpush1.bf16.msra.mxu0 0
      %2818 = vmatprep.subr.bf16.mxu0 0
      %2819 = vmatpush1.bf16.msra.mxu0 0
      %2820 = vmatprep.subr.bf16.mxu0 0
      %2821 = vmatpush1.bf16.msra.mxu0 0
      %2822 = vmatprep.subr.bf16.mxu0 0
      %2823 = vmatpush1.bf16.msra.mxu0 0
      %2824 = vmatprep.subr.bf16.mxu0 0
      %2825 = vmatpush1.bf16.msra.mxu0 0
      %2826 = vmatprep.subr.bf16.mxu0 0
      %2827 = vmatpush1.bf16.msra.mxu0 0
      %2828 = vmatprep.subr.bf16.mxu0 0
      %2829 = vmatpush1.bf16.msra.mxu0 0
      %2830 = vmatprep.subr.bf16.mxu0 0
      %2831 = vmatpush1.bf16.msra.mxu0 0
      %2832 = vmatprep.subr.bf16.mxu0 0
      %2833 = vmatpush1.bf16.msra.mxu0 0
      %2834 = vmatprep.subr.bf16.mxu0 0
      %2835 = vmatpush1.bf16.msra.mxu0 0
      %2836 = vmatprep.mubr.bf16.mxu0 0
      %2837 = vmatmul.mubr.bf16.gmra.mrb[0].mxu0 %v2799
      %v2838 = vpop.f32.mrb[0].mxu0
      %v2839 = vadd.f32 0.0, %v2838
      %v2840 = vpop.f32.mrb[0].mxu0
      %v2841 = vpop.f32.mrb[0].mxu0
      %v2842 = vadd.f32 0.0, %v2841
      %v2843 = vpop.f32.mrb[0].mxu0
      %2844 = vmatprep.mubr.bf16.mxu0 0
      %2845 = vmatmul.mubr.bf16.gmra.mrb[0].mxu0 %v2802
      %v2846 = vpop.f32.mrb[0].mxu0
      %v2847 = vadd.f32 0.0, %v2846
      %v2848 = vpop.f32.mrb[0].mxu0
      %v2849 = vpop.f32.mrb[0].mxu0
      %v2850 = vpop.f32.mrb[0].mxu0
      %2851 = vdwg.mxu0
      %v2852 = vadd.f32 %v2249, %v2839
      %v2853 = vadd.f32 %v2250, %v2842
      %v2854 = vadd.f32 %v2251, %v2847
      %v2855 = vadd.f32 %v391, %v2852
      %v2856 = vadd.f32 %v392, %v2853
      %v2857 = vadd.f32 %v393, %v2854
      %v2858 = vld [vmem:[%s10] sm:$0x1]
      %v2860 = vlaneseq
      %v2861 = vshrl.u32 %v2860, 7
      %v2862 = vsub.s32 0, %v2861
      %v2863 = vrot.slane %v2858, %v2862
      %v2865 = vadd.f32 %v2855, %v2863
      %v2866 = vadd.f32 %v2856, %v2863
      %v2867 = vadd.f32 %v2857, %v2863
      %v2868 = vpack.c.bf16 %v2866, %v2865
      %v2869 = vpack.c.bf16 %v2867, %v2867
      %v2872 = vunpack.c.l.b16 %v2868
      %v2873 = vunpack.c.h.b16 %v2868
      %v2874 = vunpack.c.l.b16 %v2869
      %v2875 = vpack.c.b16 %v2872, %v2872
      %v2876 = vpack.c.b16 %v2873, %v2873
      %v2877 = vpack.c.b16 %v2874, %v2874
      %2881 = vst [vmem:[%s386] sm:$0xf] %v2875
      %2882 = vst [vmem:[%s386 + $0x4] sm:$0xf] %v2876
      %2883 = vst [vmem:[%s386 + $0x8] sm:$0xf] %v2877
      %p2884 = scmp.lt.s32.totalorder %s22, 1
      %s2885 = scalar_select %p2884, %s22, 1
      %s2886 = smul.addr %s2885, 3
      %s2887 = smul.addr %s2886, 4
      %s2888 = scalar_lea.vmem %s11, %s2887
      // Predicated region
      $region65: #{image_encoder_forward.7} parent=63 // pred_check
        %p2889 = pneg %p276
      $region66: #{image_encoder_forward.7} parent=63 // pred_check_branch
        %2891 = sbr.rel (%p2889) target = $region68
      $region67: #{image_encoder_forward.7} parent=63 // pred_region
        _
      $region68: #{image_encoder_forward.7} parent=63 // pred_fallthru
        _
    $region64: #{image_encoder_forward.7} parent=5 // pred_fallthru
      _
    %p2892 = scmp.le.s32.totalorder 2, %s17
    // Predicated region
    $region69: #{image_encoder_forward.7} parent=5 // pred_check
      %p2893 = pneg %p2892
    $region70: #{image_encoder_forward.7} parent=5 // pred_check_branch
      %2895 = sbr.rel (%p2893) target = $region72
    $region71: #{image_encoder_forward.7} parent=5 // pred_region
      %s2896 = ssub.s32 %s17, 2
      // Predicated region
      $region73: #{image_encoder_forward.7} parent=71 // pred_check
        %p2897 = pneg %p282
      $region74: #{image_encoder_forward.7} parent=71 // pred_check_branch
        %2899 = sbr.rel (%p2897) target = $region76
      $region75: #{image_encoder_forward.7} parent=71 // pred_region
        %p2900 = scmp.lt.s32.totalorder %s23, 1
        %s2901 = scalar_select %p2900, %s23, 1
        %s2902 = smul.addr %s2901, 3
        %s2903 = smul.addr %s2902, 4
        %s2904 = scalar_lea.vmem %s11, %s2903
      $region76: #{image_encoder_forward.7} parent=71 // pred_fallthru
        _
    $region72: #{image_encoder_forward.7} parent=5 // pred_fallthru
      _
  $region6: #{image_encoder_forward.7} parent=0 // loop_footer
    %s21 = sadd.s32 1, %s17
  $region7: #{image_encoder_forward.7} parent=0 // loop_footer_branch
    %16 = sbr.rel target = $region3
  $region8: #{image_encoder_forward.7} parent=0 // loop_exit
    _

</llo_original>
